<compile_context>
chip_gen: v7x
topology: tpu7x:2x2x1
jax: 0.10.0
libtpu: 0.0.40
codegen_flags: <defaults>
</compile_context>

<pallas_src>
import math

import numpy as np
import jax
import jax.numpy as jnp
from jax import lax
from jax.experimental import pallas as pl
from jax.experimental.pallas import tpu as pltpu

SEQ, DIM, NH, HD = 10, 32, 4, 8
S_PAD = 16                      # pad seq 10 -> 16 so sublane tiling (8) is aligned
LN_EPS = 1e-5
NEG_BIG = -1e9                  # additive mask bias (finite; avoids inf-inf NaN)


# --------------------------------------------------------------------------- kernel
def multihead_kernel(x_ref, maskb_ref, ln_g_ref, ln_b_ref,
                     wqkv_ref, bqkv_ref, wo_ref, bo_ref, out_ref):
    """x_ref: (3*B*S_PAD, DIM) f32 rows ordered [Q-block; K-block; V-block]."""
    B = maskb_ref.shape[0]
    rows = B * S_PAD

    x = x_ref[...]                                       # (3*rows, D) f32
    g = ln_g_ref[...]                                    # (1, D)
    beta = ln_b_ref[...]

    # ---- single LayerNorm pass over all Q/K/V rows (f32, tall M) ----
    mu = jnp.mean(x, axis=-1, keepdims=True)
    var = jnp.mean((x - mu) ** 2, axis=-1, keepdims=True)
    xn = (x - mu) * lax.rsqrt(var + LN_EPS) * g + beta   # (3*rows, D)

    # ---- fused QKV projection: one batched matmul, bf16 in / f32 accumulate ----
    xn3 = xn.reshape(3, rows, DIM).astype(jnp.bfloat16)  # tile-aligned reshape
    proj = jnp.einsum('brd,bde->bre', xn3, wqkv_ref[...],
                      preferred_element_type=jnp.float32)          # (3, rows, D)

    qp = (proj[0] + bqkv_ref[0]).astype(jnp.bfloat16).reshape(B, S_PAD, DIM)
    kp = (proj[1] + bqkv_ref[1]).astype(jnp.bfloat16).reshape(B, S_PAD, DIM)
    vp = (proj[2] + bqkv_ref[2]).astype(jnp.bfloat16).reshape(B, S_PAD, DIM)

    mask_bias = maskb_ref[...]                           # (B, S_PAD, S_PAD) f32

    # ---- attention: static unroll over 4 heads, each head batched over B ----
    # (1/sqrt(HD) is already folded into Wq/bq in the wrapper.)
    ctx_heads = []
    for h in range(NH):
        sl = slice(h * HD, (h + 1) * HD)
        s = jnp.einsum('bqd,bkd->bqk', qp[:, :, sl], kp[:, :, sl],
                       preferred_element_type=jnp.float32)         # (B, Sp, Sp)
        s = s + mask_bias
        s = s - jnp.max(s, axis=-1, keepdims=True)
        e = jnp.exp(s)
        p = e * pl.reciprocal(jnp.sum(e, axis=-1, keepdims=True), approx=True)
        ctx_heads.append(
            jnp.einsum('bqk,bkd->bqd', p.astype(jnp.bfloat16), vp[:, :, sl],
                       preferred_element_type=jnp.float32))        # (B, Sp, HD)

    ctx = jnp.concatenate(ctx_heads, axis=-1).reshape(rows, DIM)   # (rows, D) f32

    # ---- output projection + residual ----
    out = jnp.dot(ctx.astype(jnp.bfloat16), wo_ref[...],
                  preferred_element_type=jnp.float32) + bo_ref[...]
    # TODO(synk): Dropout(p=0.1) treated as identity (eval-mode semantics).
    out_ref[...] = x[:rows] + out                        # residual = raw (pre-norm) Q rows


# --------------------------------------------------------------------------- wrapper
@jax.jit
def multihead_forward(Q, K, V, mask, params):
    """Q/K/V: (B, 10, 32) f32; mask: (B, 1, 10, 10) bool (True = masked)."""
    ln_g, ln_b, wq, bq, wk, bk, wv, bv, wo, bo = params
    B = Q.shape[0]
    rows = B * S_PAD

    # pad seq to 16 and stack Q|K|V rows (batch-major) -> (3*rows, DIM)
    pad = lambda t: jnp.pad(t, ((0, 0), (0, S_PAD - SEQ), (0, 0)))
    x_flat = jnp.concatenate([pad(Q), pad(K), pad(V)], axis=0).reshape(3 * rows, DIM)

    # additive mask bias; padded key positions are always masked
    maskb = jnp.where(mask[:, 0], NEG_BIG, 0.0).astype(jnp.float32)       # (B,10,10)
    maskb = jnp.pad(maskb, ((0, 0), (0, S_PAD - SEQ), (0, 0)))            # pad queries (0)
    maskb = jnp.pad(maskb, ((0, 0), (0, 0), (0, S_PAD - SEQ)),
                    constant_values=NEG_BIG)                              # pad keys (-1e9)

    # fused QKV weights, 1/sqrt(HD) folded into Wq/bq; bf16 matmul operands
    scale = 1.0 / math.sqrt(HD)
    wqkv = jnp.stack([wq * scale, wk, wv]).astype(jnp.bfloat16)           # (3, D, D)
    bqkv = jnp.stack([bq * scale, bk, bv]).astype(jnp.float32)            # (3, 1, D)
    wo_bf = wo.astype(jnp.bfloat16)

    vmem = pl.BlockSpec(memory_space=pltpu.MemorySpace.VMEM)
    out = pl.pallas_call(
        multihead_kernel,
        out_shape=jax.ShapeDtypeStruct((rows, DIM), jnp.float32),
        in_specs=[vmem] * 8,
        out_specs=vmem,
    )(x_flat, maskb, ln_g, ln_b, wqkv, bqkv, wo_bf, bo)

    return out.reshape(B, S_PAD, DIM)[:, :SEQ, :]


# --------------------------------------------------------------------------- pure-JAX reference
def multihead_ref(Q, K, V, mask, params):
    ln_g, ln_b, wq, bq, wk, bk, wv, bv, wo, bo = params
    B = Q.shape[0]

    def ln(t):
        mu = t.mean(-1, keepdims=True)
        var = ((t - mu) ** 2).mean(-1, keepdims=True)
        return (t - mu) / jnp.sqrt(var + LN_EPS) * ln_g + ln_b

    Qp, Kp, Vp = ln(Q) @ wq + bq, ln(K) @ wk + bk, ln(V) @ wv + bv
    split = lambda t: t.reshape(B, SEQ, NH, HD).transpose(0, 2, 1, 3)
    q, k, v = split(Qp), split(Kp), split(Vp)
    s = jnp.einsum('bhqd,bhkd->bhqk', q, k) / math.sqrt(HD)
    s = jnp.where(mask, NEG_BIG, s)
    p = jax.nn.softmax(s, axis=-1)
    ctx = jnp.einsum('bhqk,bhkd->bhqd', p, v).transpose(0, 2, 1, 3).reshape(B, SEQ, DIM)
    return Q + ctx @ wo + bo


# --------------------------------------------------------------------------- params
def _init_linear(key, din, dout):
    kw, kb = jax.random.split(key)
    lim = 1.0 / math.sqrt(din)
    w = jax.random.uniform(kw, (din, dout), jnp.float32, -lim, lim)
    b = jax.random.uniform(kb, (1, dout), jnp.float32, -lim, lim)
    return w, b


def init_params(key):
    ks = jax.random.split(key, 4)
    wq, bq = _init_linear(ks[0], DIM, DIM)
    wk, bk = _init_linear(ks[1], DIM, DIM)
    wv, bv = _init_linear(ks[2], DIM, DIM)
    wo, bo = _init_linear(ks[3], DIM, DIM)
    ln_g = jnp.ones((1, DIM), jnp.float32)
    ln_b = jnp.zeros((1, DIM), jnp.float32)
    return (ln_g, ln_b, wq, bq, wk, bk, wv, bv, wo, bo)


# --------------------------------------------------------------------------- main
if __name__ == "__main__":
    key = jax.random.PRNGKey(0)
    kq, kk, kv, kp = jax.random.split(key, 4)

    B = 8
    Q = jax.random.normal(kq, (B, SEQ, DIM), jnp.float32)
    K = jax.random.normal(kk, (B, SEQ, DIM), jnp.float32)
    V = jax.random.normal(kv, (B, SEQ, DIM), jnp.float32)

    # padding-style key mask (True = masked); no query row is ever fully masked
    lengths = jnp.asarray([10, 7, 8, 10, 9, 6, 10, 5], jnp.int32)
    key_mask = jnp.arange(SEQ)[None, :] >= lengths[:, None]                # (B, 10)
    mask = jnp.broadcast_to(key_mask[:, None, None, :], (B, 1, SEQ, SEQ))  # (B,1,10,10) bool

    params = init_params(kp)

    out = multihead_forward(Q, K, V, mask, params)
    out = jax.block_until_ready(out)

    assert out.shape == (B, SEQ, DIM), out.shape
    assert bool(jnp.all(jnp.isfinite(out)))

    ref = multihead_ref(Q, K, V, mask, params)
    np.testing.assert_allclose(np.asarray(out), np.asarray(ref), rtol=5e-2, atol=5e-2)

    print("KERNEL_OK")
</pallas_src>

<mosaic_0001>
module attributes {stable_mosaic.version = 11 : i64} {
  func.func @multihead_kernel(%arg0: memref<384x32xf32, #tpu.memory_space<vmem>>, %arg1: memref<8x16x16xf32, #tpu.memory_space<vmem>>, %arg2: memref<1x32xf32, #tpu.memory_space<vmem>>, %arg3: memref<1x32xf32, #tpu.memory_space<vmem>>, %arg4: memref<3x32x32xbf16, #tpu.memory_space<vmem>>, %arg5: memref<3x1x32xf32, #tpu.memory_space<vmem>>, %arg6: memref<32x32xbf16, #tpu.memory_space<vmem>>, %arg7: memref<1x32xf32, #tpu.memory_space<vmem>>, %arg8: memref<128x32xf32, #tpu.memory_space<vmem>>) attributes {dimension_semantics = [], scalar_prefetch = 0 : i64, scratch_operands = 0 : i64, tpu.core_type = #tpu.core_type<tc>} {
    %c0 = arith.constant 0 : index
    %c0_0 = arith.constant 0 : index
    %0 = vector.load %arg0[%c0, %c0_0] : memref<384x32xf32, #tpu.memory_space<vmem>>, vector<384x32xf32>
    %c0_1 = arith.constant 0 : index
    %c0_2 = arith.constant 0 : index
    %1 = vector.load %arg2[%c0_1, %c0_2] : memref<1x32xf32, #tpu.memory_space<vmem>>, vector<1x32xf32>
    %c0_3 = arith.constant 0 : index
    %c0_4 = arith.constant 0 : index
    %2 = vector.load %arg3[%c0_3, %c0_4] : memref<1x32xf32, #tpu.memory_space<vmem>>, vector<1x32xf32>
    %cst = arith.constant dense<0.000000e+00> : vector<384xf32>
    %3 = vector.multi_reduction <add>, %0, %cst [1] : vector<384x32xf32> to vector<384xf32>
    %4 = vector.shape_cast %3 : vector<384xf32> to vector<384x1xf32>
    %cst_5 = arith.constant 3.200000e+01 : f32
    %5 = vector.broadcast %cst_5 : f32 to vector<384x1xf32>
    %6 = arith.divf %4, %5 : vector<384x1xf32>
    %7 = vector.broadcast %6 : vector<384x1xf32> to vector<384x32xf32>
    %8 = arith.subf %0, %7 : vector<384x32xf32>
    %9 = arith.mulf %8, %8 : vector<384x32xf32>
    %cst_6 = arith.constant dense<0.000000e+00> : vector<384xf32>
    %10 = vector.multi_reduction <add>, %9, %cst_6 [1] : vector<384x32xf32> to vector<384xf32>
    %11 = vector.shape_cast %10 : vector<384xf32> to vector<384x1xf32>
    %cst_7 = arith.constant 3.200000e+01 : f32
    %12 = vector.broadcast %cst_7 : f32 to vector<384x1xf32>
    %13 = arith.divf %11, %12 : vector<384x1xf32>
    %14 = vector.broadcast %6 : vector<384x1xf32> to vector<384x32xf32>
    %15 = arith.subf %0, %14 : vector<384x32xf32>
    %cst_8 = arith.constant 9.99999974E-6 : f32
    %16 = vector.broadcast %cst_8 : f32 to vector<384x1xf32>
    %17 = arith.addf %13, %16 : vector<384x1xf32>
    %18 = math.rsqrt %17 : vector<384x1xf32>
    %19 = vector.broadcast %18 : vector<384x1xf32> to vector<384x32xf32>
    %20 = arith.mulf %15, %19 : vector<384x32xf32>
    %21 = vector.broadcast %1 : vector<1x32xf32> to vector<384x32xf32>
    %22 = arith.mulf %20, %21 : vector<384x32xf32>
    %23 = vector.broadcast %2 : vector<1x32xf32> to vector<384x32xf32>
    %24 = arith.addf %22, %23 : vector<384x32xf32>
    %25 = vector.shape_cast %24 : vector<384x32xf32> to vector<3x128x32xf32>
    %26 = arith.truncf %25 : vector<3x128x32xf32> to vector<3x128x32xbf16>
    %c0_9 = arith.constant 0 : index
    %c0_10 = arith.constant 0 : index
    %c0_11 = arith.constant 0 : index
    %27 = vector.load %arg4[%c0_9, %c0_10, %c0_11] : memref<3x32x32xbf16, #tpu.memory_space<vmem>>, vector<3x32x32xbf16>
    "tpu.trace_start"() <{level = 10 : i32, message = "brd,bde->bre"}> : () -> ()
    %cst_12 = arith.constant dense<0.000000e+00> : vector<3x128x32xf32>
    %28 = tpu.matmul %26, %27, %cst_12 {dimension_numbers = #tpu.dot_dimension_numbers<[2], [1], [1], [2], [0, 0, 0, 1, 1, 2], [0], [0]>} : vector<3x128x32xbf16>, vector<3x32x32xbf16>, vector<3x128x32xf32> -> vector<3x128x32xf32>
    "tpu.trace_stop"() : () -> ()
    %29 = vector.extract_strided_slice %28 {offsets = [0, 0, 0], sizes = [1, 128, 32], strides = [1, 1, 1]} : vector<3x128x32xf32> to vector<1x128x32xf32>
    %30 = vector.shape_cast %29 : vector<1x128x32xf32> to vector<128x32xf32>
    %c0_13 = arith.constant 0 : index
    %c0_14 = arith.constant 0 : index
    %c0_15 = arith.constant 0 : index
    %31 = vector.load %arg5[%c0_13, %c0_14, %c0_15] : memref<3x1x32xf32, #tpu.memory_space<vmem>>, vector<1x1x32xf32>
    %32 = vector.shape_cast %31 : vector<1x1x32xf32> to vector<1x32xf32>
    %33 = vector.broadcast %32 : vector<1x32xf32> to vector<128x32xf32>
    %34 = arith.addf %30, %33 : vector<128x32xf32>
    %35 = arith.truncf %34 : vector<128x32xf32> to vector<128x32xbf16>
    %36 = vector.shape_cast %35 : vector<128x32xbf16> to vector<8x16x32xbf16>
    %37 = vector.extract_strided_slice %28 {offsets = [1, 0, 0], sizes = [1, 128, 32], strides = [1, 1, 1]} : vector<3x128x32xf32> to vector<1x128x32xf32>
    %38 = vector.shape_cast %37 : vector<1x128x32xf32> to vector<128x32xf32>
    %c1 = arith.constant 1 : index
    %c0_16 = arith.constant 0 : index
    %c0_17 = arith.constant 0 : index
    %39 = vector.load %arg5[%c1, %c0_16, %c0_17] : memref<3x1x32xf32, #tpu.memory_space<vmem>>, vector<1x1x32xf32>
    %40 = vector.shape_cast %39 : vector<1x1x32xf32> to vector<1x32xf32>
    %41 = vector.broadcast %40 : vector<1x32xf32> to vector<128x32xf32>
    %42 = arith.addf %38, %41 : vector<128x32xf32>
    %43 = arith.truncf %42 : vector<128x32xf32> to vector<128x32xbf16>
    %44 = vector.shape_cast %43 : vector<128x32xbf16> to vector<8x16x32xbf16>
    %45 = vector.extract_strided_slice %28 {offsets = [2, 0, 0], sizes = [1, 128, 32], strides = [1, 1, 1]} : vector<3x128x32xf32> to vector<1x128x32xf32>
    %46 = vector.shape_cast %45 : vector<1x128x32xf32> to vector<128x32xf32>
    %c2 = arith.constant 2 : index
    %c0_18 = arith.constant 0 : index
    %c0_19 = arith.constant 0 : index
    %47 = vector.load %arg5[%c2, %c0_18, %c0_19] : memref<3x1x32xf32, #tpu.memory_space<vmem>>, vector<1x1x32xf32>
    %48 = vector.shape_cast %47 : vector<1x1x32xf32> to vector<1x32xf32>
    %49 = vector.broadcast %48 : vector<1x32xf32> to vector<128x32xf32>
    %50 = arith.addf %46, %49 : vector<128x32xf32>
    %51 = arith.truncf %50 : vector<128x32xf32> to vector<128x32xbf16>
    %52 = vector.shape_cast %51 : vector<128x32xbf16> to vector<8x16x32xbf16>
    %c0_20 = arith.constant 0 : index
    %c0_21 = arith.constant 0 : index
    %c0_22 = arith.constant 0 : index
    %53 = vector.load %arg1[%c0_20, %c0_21, %c0_22] : memref<8x16x16xf32, #tpu.memory_space<vmem>>, vector<8x16x16xf32>
    %54 = vector.extract_strided_slice %36 {offsets = [0, 0, 0], sizes = [8, 16, 8], strides = [1, 1, 1]} : vector<8x16x32xbf16> to vector<8x16x8xbf16>
    %55 = vector.extract_strided_slice %44 {offsets = [0, 0, 0], sizes = [8, 16, 8], strides = [1, 1, 1]} : vector<8x16x32xbf16> to vector<8x16x8xbf16>
    "tpu.trace_start"() <{level = 10 : i32, message = "bqd,bkd->bqk"}> : () -> ()
    %cst_23 = arith.constant dense<0.000000e+00> : vector<8x16x16xf32>
    %56 = tpu.matmul %54, %55, %cst_23 {dimension_numbers = #tpu.dot_dimension_numbers<[2], [2], [1], [1], [0, 0, 0, 1, 1, 1], [0], [0]>} : vector<8x16x8xbf16>, vector<8x16x8xbf16>, vector<8x16x16xf32> -> vector<8x16x16xf32>
    "tpu.trace_stop"() : () -> ()
    %57 = arith.addf %56, %53 : vector<8x16x16xf32>
    %cst_24 = arith.constant dense<0xFF800000> : vector<8x16xf32>
    %58 = vector.multi_reduction <maximumf>, %57, %cst_24 [2] : vector<8x16x16xf32> to vector<8x16xf32>
    %59 = vector.shape_cast %58 : vector<8x16xf32> to vector<8x16x1xf32>
    %60 = vector.broadcast %59 : vector<8x16x1xf32> to vector<8x16x16xf32>
    %61 = arith.subf %57, %60 : vector<8x16x16xf32>
    %62 = math.exp %61 : vector<8x16x16xf32>
    %cst_25 = arith.constant dense<0.000000e+00> : vector<8x16xf32>
    %63 = vector.multi_reduction <add>, %62, %cst_25 [2] : vector<8x16x16xf32> to vector<8x16xf32>
    %64 = vector.shape_cast %63 : vector<8x16xf32> to vector<8x16x1xf32>
    %65 = tpu.reciprocal %64 {approx = true} : vector<8x16x1xf32> -> vector<8x16x1xf32>
    %66 = vector.broadcast %65 : vector<8x16x1xf32> to vector<8x16x16xf32>
    %67 = arith.mulf %62, %66 : vector<8x16x16xf32>
    %68 = arith.truncf %67 : vector<8x16x16xf32> to vector<8x16x16xbf16>
    %69 = vector.extract_strided_slice %52 {offsets = [0, 0, 0], sizes = [8, 16, 8], strides = [1, 1, 1]} : vector<8x16x32xbf16> to vector<8x16x8xbf16>
    "tpu.trace_start"() <{level = 10 : i32, message = "bqk,bkd->bqd"}> : () -> ()
    %cst_26 = arith.constant dense<0.000000e+00> : vector<8x16x8xf32>
    %70 = tpu.matmul %68, %69, %cst_26 {dimension_numbers = #tpu.dot_dimension_numbers<[2], [1], [1], [2], [0, 0, 0, 1, 1, 2], [0], [0]>} : vector<8x16x16xbf16>, vector<8x16x8xbf16>, vector<8x16x8xf32> -> vector<8x16x8xf32>
    "tpu.trace_stop"() : () -> ()
    %71 = vector.extract_strided_slice %36 {offsets = [0, 0, 8], sizes = [8, 16, 8], strides = [1, 1, 1]} : vector<8x16x32xbf16> to vector<8x16x8xbf16>
    %72 = vector.extract_strided_slice %44 {offsets = [0, 0, 8], sizes = [8, 16, 8], strides = [1, 1, 1]} : vector<8x16x32xbf16> to vector<8x16x8xbf16>
    "tpu.trace_start"() <{level = 10 : i32, message = "bqd,bkd->bqk"}> : () -> ()
    %cst_27 = arith.constant dense<0.000000e+00> : vector<8x16x16xf32>
    %73 = tpu.matmul %71, %72, %cst_27 {dimension_numbers = #tpu.dot_dimension_numbers<[2], [2], [1], [1], [0, 0, 0, 1, 1, 1], [0], [0]>} : vector<8x16x8xbf16>, vector<8x16x8xbf16>, vector<8x16x16xf32> -> vector<8x16x16xf32>
    "tpu.trace_stop"() : () -> ()
    %74 = arith.addf %73, %53 : vector<8x16x16xf32>
    %cst_28 = arith.constant dense<0xFF800000> : vector<8x16xf32>
    %75 = vector.multi_reduction <maximumf>, %74, %cst_28 [2] : vector<8x16x16xf32> to vector<8x16xf32>
    %76 = vector.shape_cast %75 : vector<8x16xf32> to vector<8x16x1xf32>
    %77 = vector.broadcast %76 : vector<8x16x1xf32> to vector<8x16x16xf32>
    %78 = arith.subf %74, %77 : vector<8x16x16xf32>
    %79 = math.exp %78 : vector<8x16x16xf32>
    %cst_29 = arith.constant dense<0.000000e+00> : vector<8x16xf32>
    %80 = vector.multi_reduction <add>, %79, %cst_29 [2] : vector<8x16x16xf32> to vector<8x16xf32>
    %81 = vector.shape_cast %80 : vector<8x16xf32> to vector<8x16x1xf32>
    %82 = tpu.reciprocal %81 {approx = true} : vector<8x16x1xf32> -> vector<8x16x1xf32>
    %83 = vector.broadcast %82 : vector<8x16x1xf32> to vector<8x16x16xf32>
    %84 = arith.mulf %79, %83 : vector<8x16x16xf32>
    %85 = arith.truncf %84 : vector<8x16x16xf32> to vector<8x16x16xbf16>
    %86 = vector.extract_strided_slice %52 {offsets = [0, 0, 8], sizes = [8, 16, 8], strides = [1, 1, 1]} : vector<8x16x32xbf16> to vector<8x16x8xbf16>
    "tpu.trace_start"() <{level = 10 : i32, message = "bqk,bkd->bqd"}> : () -> ()
    %cst_30 = arith.constant dense<0.000000e+00> : vector<8x16x8xf32>
    %87 = tpu.matmul %85, %86, %cst_30 {dimension_numbers = #tpu.dot_dimension_numbers<[2], [1], [1], [2], [0, 0, 0, 1, 1, 2], [0], [0]>} : vector<8x16x16xbf16>, vector<8x16x8xbf16>, vector<8x16x8xf32> -> vector<8x16x8xf32>
    "tpu.trace_stop"() : () -> ()
    %88 = vector.extract_strided_slice %36 {offsets = [0, 0, 16], sizes = [8, 16, 8], strides = [1, 1, 1]} : vector<8x16x32xbf16> to vector<8x16x8xbf16>
    %89 = vector.extract_strided_slice %44 {offsets = [0, 0, 16], sizes = [8, 16, 8], strides = [1, 1, 1]} : vector<8x16x32xbf16> to vector<8x16x8xbf16>
    "tpu.trace_start"() <{level = 10 : i32, message = "bqd,bkd->bqk"}> : () -> ()
    %cst_31 = arith.constant dense<0.000000e+00> : vector<8x16x16xf32>
    %90 = tpu.matmul %88, %89, %cst_31 {dimension_numbers = #tpu.dot_dimension_numbers<[2], [2], [1], [1], [0, 0, 0, 1, 1, 1], [0], [0]>} : vector<8x16x8xbf16>, vector<8x16x8xbf16>, vector<8x16x16xf32> -> vector<8x16x16xf32>
    "tpu.trace_stop"() : () -> ()
    %91 = arith.addf %90, %53 : vector<8x16x16xf32>
    %cst_32 = arith.constant dense<0xFF800000> : vector<8x16xf32>
    %92 = vector.multi_reduction <maximumf>, %91, %cst_32 [2] : vector<8x16x16xf32> to vector<8x16xf32>
    %93 = vector.shape_cast %92 : vector<8x16xf32> to vector<8x16x1xf32>
    %94 = vector.broadcast %93 : vector<8x16x1xf32> to vector<8x16x16xf32>
    %95 = arith.subf %91, %94 : vector<8x16x16xf32>
    %96 = math.exp %95 : vector<8x16x16xf32>
    %cst_33 = arith.constant dense<0.000000e+00> : vector<8x16xf32>
    %97 = vector.multi_reduction <add>, %96, %cst_33 [2] : vector<8x16x16xf32> to vector<8x16xf32>
    %98 = vector.shape_cast %97 : vector<8x16xf32> to vector<8x16x1xf32>
    %99 = tpu.reciprocal %98 {approx = true} : vector<8x16x1xf32> -> vector<8x16x1xf32>
    %100 = vector.broadcast %99 : vector<8x16x1xf32> to vector<8x16x16xf32>
    %101 = arith.mulf %96, %100 : vector<8x16x16xf32>
    %102 = arith.truncf %101 : vector<8x16x16xf32> to vector<8x16x16xbf16>
    %103 = vector.extract_strided_slice %52 {offsets = [0, 0, 16], sizes = [8, 16, 8], strides = [1, 1, 1]} : vector<8x16x32xbf16> to vector<8x16x8xbf16>
    "tpu.trace_start"() <{level = 10 : i32, message = "bqk,bkd->bqd"}> : () -> ()
    %cst_34 = arith.constant dense<0.000000e+00> : vector<8x16x8xf32>
    %104 = tpu.matmul %102, %103, %cst_34 {dimension_numbers = #tpu.dot_dimension_numbers<[2], [1], [1], [2], [0, 0, 0, 1, 1, 2], [0], [0]>} : vector<8x16x16xbf16>, vector<8x16x8xbf16>, vector<8x16x8xf32> -> vector<8x16x8xf32>
    "tpu.trace_stop"() : () -> ()
    %105 = vector.extract_strided_slice %36 {offsets = [0, 0, 24], sizes = [8, 16, 8], strides = [1, 1, 1]} : vector<8x16x32xbf16> to vector<8x16x8xbf16>
    %106 = vector.extract_strided_slice %44 {offsets = [0, 0, 24], sizes = [8, 16, 8], strides = [1, 1, 1]} : vector<8x16x32xbf16> to vector<8x16x8xbf16>
    "tpu.trace_start"() <{level = 10 : i32, message = "bqd,bkd->bqk"}> : () -> ()
    %cst_35 = arith.constant dense<0.000000e+00> : vector<8x16x16xf32>
    %107 = tpu.matmul %105, %106, %cst_35 {dimension_numbers = #tpu.dot_dimension_numbers<[2], [2], [1], [1], [0, 0, 0, 1, 1, 1], [0], [0]>} : vector<8x16x8xbf16>, vector<8x16x8xbf16>, vector<8x16x16xf32> -> vector<8x16x16xf32>
    "tpu.trace_stop"() : () -> ()
    %108 = arith.addf %107, %53 : vector<8x16x16xf32>
    %cst_36 = arith.constant dense<0xFF800000> : vector<8x16xf32>
    %109 = vector.multi_reduction <maximumf>, %108, %cst_36 [2] : vector<8x16x16xf32> to vector<8x16xf32>
    %110 = vector.shape_cast %109 : vector<8x16xf32> to vector<8x16x1xf32>
    %111 = vector.broadcast %110 : vector<8x16x1xf32> to vector<8x16x16xf32>
    %112 = arith.subf %108, %111 : vector<8x16x16xf32>
    %113 = math.exp %112 : vector<8x16x16xf32>
    %cst_37 = arith.constant dense<0.000000e+00> : vector<8x16xf32>
    %114 = vector.multi_reduction <add>, %113, %cst_37 [2] : vector<8x16x16xf32> to vector<8x16xf32>
    %115 = vector.shape_cast %114 : vector<8x16xf32> to vector<8x16x1xf32>
    %116 = tpu.reciprocal %115 {approx = true} : vector<8x16x1xf32> -> vector<8x16x1xf32>
    %117 = vector.broadcast %116 : vector<8x16x1xf32> to vector<8x16x16xf32>
    %118 = arith.mulf %113, %117 : vector<8x16x16xf32>
    %119 = arith.truncf %118 : vector<8x16x16xf32> to vector<8x16x16xbf16>
    %120 = vector.extract_strided_slice %52 {offsets = [0, 0, 24], sizes = [8, 16, 8], strides = [1, 1, 1]} : vector<8x16x32xbf16> to vector<8x16x8xbf16>
    "tpu.trace_start"() <{level = 10 : i32, message = "bqk,bkd->bqd"}> : () -> ()
    %cst_38 = arith.constant dense<0.000000e+00> : vector<8x16x8xf32>
    %121 = tpu.matmul %119, %120, %cst_38 {dimension_numbers = #tpu.dot_dimension_numbers<[2], [1], [1], [2], [0, 0, 0, 1, 1, 2], [0], [0]>} : vector<8x16x16xbf16>, vector<8x16x8xbf16>, vector<8x16x8xf32> -> vector<8x16x8xf32>
    "tpu.trace_stop"() : () -> ()
    %122 = tpu.concatenate %70, %87, %104, %121 in 2 : vector<8x16x8xf32>, vector<8x16x8xf32>, vector<8x16x8xf32>, vector<8x16x8xf32> -> vector<8x16x32xf32>
    %123 = vector.shape_cast %122 : vector<8x16x32xf32> to vector<128x32xf32>
    %124 = arith.truncf %123 : vector<128x32xf32> to vector<128x32xbf16>
    %c0_39 = arith.constant 0 : index
    %c0_40 = arith.constant 0 : index
    %125 = vector.load %arg6[%c0_39, %c0_40] : memref<32x32xbf16, #tpu.memory_space<vmem>>, vector<32x32xbf16>
    %cst_41 = arith.constant dense<0.000000e+00> : vector<128x32xf32>
    %126 = tpu.matmul %124, %125, %cst_41 {dimension_numbers = #tpu.dot_dimension_numbers<[1], [0], [0], [1], [0, 0, 1, 1], [], []>} : vector<128x32xbf16>, vector<32x32xbf16>, vector<128x32xf32> -> vector<128x32xf32>
    %c0_42 = arith.constant 0 : index
    %c0_43 = arith.constant 0 : index
    %127 = vector.load %arg7[%c0_42, %c0_43] : memref<1x32xf32, #tpu.memory_space<vmem>>, vector<1x32xf32>
    %128 = vector.broadcast %127 : vector<1x32xf32> to vector<128x32xf32>
    %129 = arith.addf %126, %128 : vector<128x32xf32>
    %130 = vector.extract_strided_slice %0 {offsets = [0, 0], sizes = [128, 32], strides = [1, 1]} : vector<384x32xf32> to vector<128x32xf32>
    %131 = arith.addf %130, %129 : vector<128x32xf32>
    %c0_44 = arith.constant 0 : index
    %c0_45 = arith.constant 0 : index
    %132 = vector.load %arg8[%c0_44, %c0_45] : memref<128x32xf32, #tpu.memory_space<vmem>>, vector<128x32xf32>
    tpu.vector_store %arg8[%c0_44, %c0_45], %131 {strides = array<i32>} : memref<128x32xf32, #tpu.memory_space<vmem>>, vector<128x32xf32>,
    return
  }
}

</mosaic_0001>

<llo_original>
// kernel: multihead_forward.1
$region0: #{multihead_forward.1}
  #allocation0 [shape = 'u32[]', space=smem, size = 0x4, offset = 0x4, fixed_abs, tag = 'smem constant byte address 0x4 - core index']
  #allocation1 [shape = 'u32[144,128]{1,0:T(1,128)}', space=vmem, size = 0x12000, scoped, tag = 'internal scratch']
  %s0 = inlined_call_operand.vmem [shape: f32[384,32], index: 0, kind: input, shape index: {}]
  %s1 = inlined_call_operand.vmem [shape: f32[8,16,16], index: 1, kind: input, shape index: {}]
  %s2 = inlined_call_operand.vmem [shape: f32[1,32], index: 2, kind: input, shape index: {}]
  %s3 = inlined_call_operand.vmem [shape: f32[1,32], index: 3, kind: input, shape index: {}]
  %s4 = inlined_call_operand.vmem [shape: bf16[3,32,32], index: 4, kind: input, shape index: {}]
  %s5 = inlined_call_operand.vmem [shape: f32[3,1,32], index: 5, kind: input, shape index: {}]
  %s6 = inlined_call_operand.vmem [shape: bf16[32,32], index: 6, kind: input, shape index: {}]
  %s7 = inlined_call_operand.vmem [shape: f32[1,32], index: 7, kind: input, shape index: {}]
  %s8 = inlined_call_operand.vmem [shape: f32[128,32], index: 8, kind: output, shape index: {}]
  %s9 = sld [smem:[#allocation0]]
  $region42: #{multihead_forward.1} parent=0
    _
  %s11 = ssub.s32 1, %s9
  %s12 = scalar_select 0, %s11, %s9
  // Predicated region
  $region2: #{multihead_forward.1} parent=0 // pred_check
    _
  $region3: #{multihead_forward.1} parent=0 // pred_check_branch
    %14 = sbr.rel (0) target = $region5
  $region4: #{multihead_forward.1} parent=0 // pred_region
    _
  $region5: #{multihead_forward.1} parent=0 // pred_fallthru
    _
  // Predicated region
  $region6: #{multihead_forward.1} parent=0 // pred_check
    _
  $region7: #{multihead_forward.1} parent=0 // pred_check_branch
    %16 = sbr.rel (0) target = $region9
  $region8: #{multihead_forward.1} parent=0 // pred_region
    _
  $region9: #{multihead_forward.1} parent=0 // pred_fallthru
    _
  // Predicated region
  $region10: #{multihead_forward.1} parent=0 // pred_check
    _
  $region11: #{multihead_forward.1} parent=0 // pred_check_branch
    %18 = sbr.rel (0) target = $region13
  $region12: #{multihead_forward.1} parent=0 // pred_region
    _
  $region13: #{multihead_forward.1} parent=0 // pred_fallthru
    _
  // Predicated region
  $region14: #{multihead_forward.1} parent=0 // pred_check
    _
  $region15: #{multihead_forward.1} parent=0 // pred_check_branch
    %20 = sbr.rel (0) target = $region17
  $region16: #{multihead_forward.1} parent=0 // pred_region
    _
  $region17: #{multihead_forward.1} parent=0 // pred_fallthru
    _
  // Predicated region
  $region18: #{multihead_forward.1} parent=0 // pred_check
    _
  $region19: #{multihead_forward.1} parent=0 // pred_check_branch
    %22 = sbr.rel (0) target = $region21
  $region20: #{multihead_forward.1} parent=0 // pred_region
    _
  $region21: #{multihead_forward.1} parent=0 // pred_fallthru
    _
  // Predicated region
  $region22: #{multihead_forward.1} parent=0 // pred_check
    _
  $region23: #{multihead_forward.1} parent=0 // pred_check_branch
    %24 = sbr.rel (0) target = $region25
  $region24: #{multihead_forward.1} parent=0 // pred_region
    _
  $region25: #{multihead_forward.1} parent=0 // pred_fallthru
    _
  // Predicated region
  $region26: #{multihead_forward.1} parent=0 // pred_check
    _
  $region27: #{multihead_forward.1} parent=0 // pred_check_branch
    %26 = sbr.rel (0) target = $region29
  $region28: #{multihead_forward.1} parent=0 // pred_region
    _
  $region29: #{multihead_forward.1} parent=0 // pred_fallthru
    _
  // Predicated region
  $region30: #{multihead_forward.1} parent=0 // pred_check
    _
  $region31: #{multihead_forward.1} parent=0 // pred_check_branch
    %28 = sbr.rel (0) target = $region33
  $region32: #{multihead_forward.1} parent=0 // pred_region
    _
  $region33: #{multihead_forward.1} parent=0 // pred_fallthru
    _
  %v30 = vld [vmem:[%s0] sm:$0xff]
  %v31 = vld [vmem:[%s0 + $0x8] sm:$0xff]
  %v32 = vld [vmem:[%s0 + $0x10] sm:$0xff]
  %v33 = vld [vmem:[%s0 + $0x18] sm:$0xff]
  %v34 = vld [vmem:[%s0 + $0x20] sm:$0xff]
  %v35 = vld [vmem:[%s0 + $0x28] sm:$0xff]
  %v36 = vld [vmem:[%s0 + $0x30] sm:$0xff]
  %v37 = vld [vmem:[%s0 + $0x38] sm:$0xff]
  %v38 = vld [vmem:[%s0 + $0x40] sm:$0xff]
  %v39 = vld [vmem:[%s0 + $0x48] sm:$0xff]
  %v40 = vld [vmem:[%s0 + $0x50] sm:$0xff]
  %v41 = vld [vmem:[%s0 + $0x58] sm:$0xff]
  %v42 = vld [vmem:[%s0 + $0x60] sm:$0xff]
  %v43 = vld [vmem:[%s0 + $0x68] sm:$0xff]
  %v44 = vld [vmem:[%s0 + $0x70] sm:$0xff]
  %v45 = vld [vmem:[%s0 + $0x78] sm:$0xff]
  %v46 = vld [vmem:[%s0 + $0x80] sm:$0xff]
  %v47 = vld [vmem:[%s0 + $0x88] sm:$0xff]
  %v48 = vld [vmem:[%s0 + $0x90] sm:$0xff]
  %v49 = vld [vmem:[%s0 + $0x98] sm:$0xff]
  %v50 = vld [vmem:[%s0 + $0xa0] sm:$0xff]
  %v51 = vld [vmem:[%s0 + $0xa8] sm:$0xff]
  %v52 = vld [vmem:[%s0 + $0xb0] sm:$0xff]
  %v53 = vld [vmem:[%s0 + $0xb8] sm:$0xff]
  %v54 = vld [vmem:[%s0 + $0xc0] sm:$0xff]
  %v55 = vld [vmem:[%s0 + $0xc8] sm:$0xff]
  %v56 = vld [vmem:[%s0 + $0xd0] sm:$0xff]
  %v57 = vld [vmem:[%s0 + $0xd8] sm:$0xff]
  %v58 = vld [vmem:[%s0 + $0xe0] sm:$0xff]
  %v59 = vld [vmem:[%s0 + $0xe8] sm:$0xff]
  %v60 = vld [vmem:[%s0 + $0xf0] sm:$0xff]
  %v61 = vld [vmem:[%s0 + $0xf8] sm:$0xff]
  %v62 = vld [vmem:[%s0 + $0x100] sm:$0xff]
  %v63 = vld [vmem:[%s0 + $0x108] sm:$0xff]
  %v64 = vld [vmem:[%s0 + $0x110] sm:$0xff]
  %v65 = vld [vmem:[%s0 + $0x118] sm:$0xff]
  %v66 = vld [vmem:[%s0 + $0x120] sm:$0xff]
  %v67 = vld [vmem:[%s0 + $0x128] sm:$0xff]
  %v68 = vld [vmem:[%s0 + $0x130] sm:$0xff]
  %v69 = vld [vmem:[%s0 + $0x138] sm:$0xff]
  %v70 = vld [vmem:[%s0 + $0x140] sm:$0xff]
  %v71 = vld [vmem:[%s0 + $0x148] sm:$0xff]
  %v72 = vld [vmem:[%s0 + $0x150] sm:$0xff]
  %v73 = vld [vmem:[%s0 + $0x158] sm:$0xff]
  %v74 = vld [vmem:[%s0 + $0x160] sm:$0xff]
  %v75 = vld [vmem:[%s0 + $0x168] sm:$0xff]
  %v76 = vld [vmem:[%s0 + $0x170] sm:$0xff]
  %v77 = vld [vmem:[%s0 + $0x178] sm:$0xff]
  %v78 = vld [vmem:[%s2] sm:$0x1]
  %v79 = vld [vmem:[%s3] sm:$0x1]
  %vm80 = vcmask 261120
  %v81 = vsel %vm80, %v30, 0.0
  %82 = vadd.xlane.f32.xlu0 %v81
  %v83 = vpop.xlane.xlu0 %82
  %v84 = vsel %vm80, %v31, 0.0
  %85 = vadd.xlane.f32.xlu0 %v84
  %v86 = vpop.xlane.xlu0 %85
  %v87 = vsel %vm80, %v32, 0.0
  %88 = vadd.xlane.f32.xlu0 %v87
  %v89 = vpop.xlane.xlu0 %88
  %v90 = vsel %vm80, %v33, 0.0
  %91 = vadd.xlane.f32.xlu0 %v90
  %v92 = vpop.xlane.xlu0 %91
  %v93 = vsel %vm80, %v34, 0.0
  %94 = vadd.xlane.f32.xlu0 %v93
  %v95 = vpop.xlane.xlu0 %94
  %v96 = vsel %vm80, %v35, 0.0
  %97 = vadd.xlane.f32.xlu0 %v96
  %v98 = vpop.xlane.xlu0 %97
  %v99 = vsel %vm80, %v36, 0.0
  %100 = vadd.xlane.f32.xlu0 %v99
  %v101 = vpop.xlane.xlu0 %100
  %v102 = vsel %vm80, %v37, 0.0
  %103 = vadd.xlane.f32.xlu0 %v102
  %v104 = vpop.xlane.xlu0 %103
  %v105 = vsel %vm80, %v38, 0.0
  %106 = vadd.xlane.f32.xlu0 %v105
  %v107 = vpop.xlane.xlu0 %106
  %v108 = vsel %vm80, %v39, 0.0
  %109 = vadd.xlane.f32.xlu0 %v108
  %v110 = vpop.xlane.xlu0 %109
  %v111 = vsel %vm80, %v40, 0.0
  %112 = vadd.xlane.f32.xlu0 %v111
  %v113 = vpop.xlane.xlu0 %112
  %v114 = vsel %vm80, %v41, 0.0
  %115 = vadd.xlane.f32.xlu0 %v114
  %v116 = vpop.xlane.xlu0 %115
  %v117 = vsel %vm80, %v42, 0.0
  %118 = vadd.xlane.f32.xlu0 %v117
  %v119 = vpop.xlane.xlu0 %118
  %v120 = vsel %vm80, %v43, 0.0
  %121 = vadd.xlane.f32.xlu0 %v120
  %v122 = vpop.xlane.xlu0 %121
  %v123 = vsel %vm80, %v44, 0.0
  %124 = vadd.xlane.f32.xlu0 %v123
  %v125 = vpop.xlane.xlu0 %124
  %v126 = vsel %vm80, %v45, 0.0
  %127 = vadd.xlane.f32.xlu0 %v126
  %v128 = vpop.xlane.xlu0 %127
  %v129 = vsel %vm80, %v46, 0.0
  %130 = vadd.xlane.f32.xlu0 %v129
  %v131 = vpop.xlane.xlu0 %130
  %v132 = vsel %vm80, %v47, 0.0
  %133 = vadd.xlane.f32.xlu0 %v132
  %v134 = vpop.xlane.xlu0 %133
  %v135 = vsel %vm80, %v48, 0.0
  %136 = vadd.xlane.f32.xlu0 %v135
  %v137 = vpop.xlane.xlu0 %136
  %v138 = vsel %vm80, %v49, 0.0
  %139 = vadd.xlane.f32.xlu0 %v138
  %v140 = vpop.xlane.xlu0 %139
  %v141 = vsel %vm80, %v50, 0.0
  %142 = vadd.xlane.f32.xlu0 %v141
  %v143 = vpop.xlane.xlu0 %142
  %v144 = vsel %vm80, %v51, 0.0
  %145 = vadd.xlane.f32.xlu0 %v144
  %v146 = vpop.xlane.xlu0 %145
  %v147 = vsel %vm80, %v52, 0.0
  %148 = vadd.xlane.f32.xlu0 %v147
  %v149 = vpop.xlane.xlu0 %148
  %v150 = vsel %vm80, %v53, 0.0
  %151 = vadd.xlane.f32.xlu0 %v150
  %v152 = vpop.xlane.xlu0 %151
  %v153 = vsel %vm80, %v54, 0.0
  %154 = vadd.xlane.f32.xlu0 %v153
  %v155 = vpop.xlane.xlu0 %154
  %v156 = vsel %vm80, %v55, 0.0
  %157 = vadd.xlane.f32.xlu0 %v156
  %v158 = vpop.xlane.xlu0 %157
  %v159 = vsel %vm80, %v56, 0.0
  %160 = vadd.xlane.f32.xlu0 %v159
  %v161 = vpop.xlane.xlu0 %160
  %v162 = vsel %vm80, %v57, 0.0
  %163 = vadd.xlane.f32.xlu0 %v162
  %v164 = vpop.xlane.xlu0 %163
  %v165 = vsel %vm80, %v58, 0.0
  %166 = vadd.xlane.f32.xlu0 %v165
  %v167 = vpop.xlane.xlu0 %166
  %v168 = vsel %vm80, %v59, 0.0
  %169 = vadd.xlane.f32.xlu0 %v168
  %v170 = vpop.xlane.xlu0 %169
  %v171 = vsel %vm80, %v60, 0.0
  %172 = vadd.xlane.f32.xlu0 %v171
  %v173 = vpop.xlane.xlu0 %172
  %v174 = vsel %vm80, %v61, 0.0
  %175 = vadd.xlane.f32.xlu0 %v174
  %v176 = vpop.xlane.xlu0 %175
  %v177 = vsel %vm80, %v62, 0.0
  %178 = vadd.xlane.f32.xlu0 %v177
  %v179 = vpop.xlane.xlu0 %178
  %v180 = vsel %vm80, %v63, 0.0
  %181 = vadd.xlane.f32.xlu0 %v180
  %v182 = vpop.xlane.xlu0 %181
  %v183 = vsel %vm80, %v64, 0.0
  %184 = vadd.xlane.f32.xlu0 %v183
  %v185 = vpop.xlane.xlu0 %184
  %v186 = vsel %vm80, %v65, 0.0
  %187 = vadd.xlane.f32.xlu0 %v186
  %v188 = vpop.xlane.xlu0 %187
  %v189 = vsel %vm80, %v66, 0.0
  %190 = vadd.xlane.f32.xlu0 %v189
  %v191 = vpop.xlane.xlu0 %190
  %v192 = vsel %vm80, %v67, 0.0
  %193 = vadd.xlane.f32.xlu0 %v192
  %v194 = vpop.xlane.xlu0 %193
  %v195 = vsel %vm80, %v68, 0.0
  %196 = vadd.xlane.f32.xlu0 %v195
  %v197 = vpop.xlane.xlu0 %196
  %v198 = vsel %vm80, %v69, 0.0
  %199 = vadd.xlane.f32.xlu0 %v198
  %v200 = vpop.xlane.xlu0 %199
  %v201 = vsel %vm80, %v70, 0.0
  %202 = vadd.xlane.f32.xlu0 %v201
  %v203 = vpop.xlane.xlu0 %202
  %v204 = vsel %vm80, %v71, 0.0
  %205 = vadd.xlane.f32.xlu0 %v204
  %v206 = vpop.xlane.xlu0 %205
  %v207 = vsel %vm80, %v72, 0.0
  %208 = vadd.xlane.f32.xlu0 %v207
  %v209 = vpop.xlane.xlu0 %208
  %v210 = vsel %vm80, %v73, 0.0
  %211 = vadd.xlane.f32.xlu0 %v210
  %v212 = vpop.xlane.xlu0 %211
  %v213 = vsel %vm80, %v74, 0.0
  %214 = vadd.xlane.f32.xlu0 %v213
  %v215 = vpop.xlane.xlu0 %214
  %v216 = vsel %vm80, %v75, 0.0
  %217 = vadd.xlane.f32.xlu0 %v216
  %v218 = vpop.xlane.xlu0 %217
  %v219 = vsel %vm80, %v76, 0.0
  %220 = vadd.xlane.f32.xlu0 %v219
  %v221 = vpop.xlane.xlu0 %220
  %v222 = vsel %vm80, %v77, 0.0
  %223 = vadd.xlane.f32.xlu0 %v222
  %v224 = vpop.xlane.xlu0 %223
  %v225 = vrcp.pop 32.0
  %v226 = vmul.f32 %v83, %v225
  %v227 = vmul.f32 %v86, %v225
  %v228 = vmul.f32 %v89, %v225
  %v229 = vmul.f32 %v92, %v225
  %v230 = vmul.f32 %v95, %v225
  %v231 = vmul.f32 %v98, %v225
  %v232 = vmul.f32 %v101, %v225
  %v233 = vmul.f32 %v104, %v225
  %v234 = vmul.f32 %v107, %v225
  %v235 = vmul.f32 %v110, %v225
  %v236 = vmul.f32 %v113, %v225
  %v237 = vmul.f32 %v116, %v225
  %v238 = vmul.f32 %v119, %v225
  %v239 = vmul.f32 %v122, %v225
  %v240 = vmul.f32 %v125, %v225
  %v241 = vmul.f32 %v128, %v225
  %v242 = vmul.f32 %v131, %v225
  %v243 = vmul.f32 %v134, %v225
  %v244 = vmul.f32 %v137, %v225
  %v245 = vmul.f32 %v140, %v225
  %v246 = vmul.f32 %v143, %v225
  %v247 = vmul.f32 %v146, %v225
  %v248 = vmul.f32 %v149, %v225
  %v249 = vmul.f32 %v152, %v225
  %v250 = vmul.f32 %v155, %v225
  %v251 = vmul.f32 %v158, %v225
  %v252 = vmul.f32 %v161, %v225
  %v253 = vmul.f32 %v164, %v225
  %v254 = vmul.f32 %v167, %v225
  %v255 = vmul.f32 %v170, %v225
  %v256 = vmul.f32 %v173, %v225
  %v257 = vmul.f32 %v176, %v225
  %v258 = vmul.f32 %v179, %v225
  %v259 = vmul.f32 %v182, %v225
  %v260 = vmul.f32 %v185, %v225
  %v261 = vmul.f32 %v188, %v225
  %v262 = vmul.f32 %v191, %v225
  %v263 = vmul.f32 %v194, %v225
  %v264 = vmul.f32 %v197, %v225
  %v265 = vmul.f32 %v200, %v225
  %v266 = vmul.f32 %v203, %v225
  %v267 = vmul.f32 %v206, %v225
  %v268 = vmul.f32 %v209, %v225
  %v269 = vmul.f32 %v212, %v225
  %v270 = vmul.f32 %v215, %v225
  %v271 = vmul.f32 %v218, %v225
  %v272 = vmul.f32 %v221, %v225
  %v273 = vmul.f32 %v224, %v225
  %v274 = vsub.f32 %v30, %v226
  %v275 = vsub.f32 %v31, %v227
  %v276 = vsub.f32 %v32, %v228
  %v277 = vsub.f32 %v33, %v229
  %v278 = vsub.f32 %v34, %v230
  %v279 = vsub.f32 %v35, %v231
  %v280 = vsub.f32 %v36, %v232
  %v281 = vsub.f32 %v37, %v233
  %v282 = vsub.f32 %v38, %v234
  %v283 = vsub.f32 %v39, %v235
  %v284 = vsub.f32 %v40, %v236
  %v285 = vsub.f32 %v41, %v237
  %v286 = vsub.f32 %v42, %v238
  %v287 = vsub.f32 %v43, %v239
  %v288 = vsub.f32 %v44, %v240
  %v289 = vsub.f32 %v45, %v241
  %v290 = vsub.f32 %v46, %v242
  %v291 = vsub.f32 %v47, %v243
  %v292 = vsub.f32 %v48, %v244
  %v293 = vsub.f32 %v49, %v245
  %v294 = vsub.f32 %v50, %v246
  %v295 = vsub.f32 %v51, %v247
  %v296 = vsub.f32 %v52, %v248
  %v297 = vsub.f32 %v53, %v249
  %v298 = vsub.f32 %v54, %v250
  %v299 = vsub.f32 %v55, %v251
  %v300 = vsub.f32 %v56, %v252
  %v301 = vsub.f32 %v57, %v253
  %v302 = vsub.f32 %v58, %v254
  %v303 = vsub.f32 %v59, %v255
  %v304 = vsub.f32 %v60, %v256
  %v305 = vsub.f32 %v61, %v257
  %v306 = vsub.f32 %v62, %v258
  %v307 = vsub.f32 %v63, %v259
  %v308 = vsub.f32 %v64, %v260
  %v309 = vsub.f32 %v65, %v261
  %v310 = vsub.f32 %v66, %v262
  %v311 = vsub.f32 %v67, %v263
  %v312 = vsub.f32 %v68, %v264
  %v313 = vsub.f32 %v69, %v265
  %v314 = vsub.f32 %v70, %v266
  %v315 = vsub.f32 %v71, %v267
  %v316 = vsub.f32 %v72, %v268
  %v317 = vsub.f32 %v73, %v269
  %v318 = vsub.f32 %v74, %v270
  %v319 = vsub.f32 %v75, %v271
  %v320 = vsub.f32 %v76, %v272
  %v321 = vsub.f32 %v77, %v273
  %v322 = vmul.f32 %v274, %v274
  %v323 = vmul.f32 %v275, %v275
  %v324 = vmul.f32 %v276, %v276
  %v325 = vmul.f32 %v277, %v277
  %v326 = vmul.f32 %v278, %v278
  %v327 = vmul.f32 %v279, %v279
  %v328 = vmul.f32 %v280, %v280
  %v329 = vmul.f32 %v281, %v281
  %v330 = vmul.f32 %v282, %v282
  %v331 = vmul.f32 %v283, %v283
  %v332 = vmul.f32 %v284, %v284
  %v333 = vmul.f32 %v285, %v285
  %v334 = vmul.f32 %v286, %v286
  %v335 = vmul.f32 %v287, %v287
  %v336 = vmul.f32 %v288, %v288
  %v337 = vmul.f32 %v289, %v289
  %v338 = vmul.f32 %v290, %v290
  %v339 = vmul.f32 %v291, %v291
  %v340 = vmul.f32 %v292, %v292
  %v341 = vmul.f32 %v293, %v293
  %v342 = vmul.f32 %v294, %v294
  %v343 = vmul.f32 %v295, %v295
  %v344 = vmul.f32 %v296, %v296
  %v345 = vmul.f32 %v297, %v297
  %v346 = vmul.f32 %v298, %v298
  %v347 = vmul.f32 %v299, %v299
  %v348 = vmul.f32 %v300, %v300
  %v349 = vmul.f32 %v301, %v301
  %v350 = vmul.f32 %v302, %v302
  %v351 = vmul.f32 %v303, %v303
  %v352 = vmul.f32 %v304, %v304
  %v353 = vmul.f32 %v305, %v305
  %v354 = vmul.f32 %v306, %v306
  %v355 = vmul.f32 %v307, %v307
  %v356 = vmul.f32 %v308, %v308
  %v357 = vmul.f32 %v309, %v309
  %v358 = vmul.f32 %v310, %v310
  %v359 = vmul.f32 %v311, %v311
  %v360 = vmul.f32 %v312, %v312
  %v361 = vmul.f32 %v313, %v313
  %v362 = vmul.f32 %v314, %v314
  %v363 = vmul.f32 %v315, %v315
  %v364 = vmul.f32 %v316, %v316
  %v365 = vmul.f32 %v317, %v317
  %v366 = vmul.f32 %v318, %v318
  %v367 = vmul.f32 %v319, %v319
  %v368 = vmul.f32 %v320, %v320
  %v369 = vmul.f32 %v321, %v321
  %v370 = vsel %vm80, %v322, 0.0
  %371 = vadd.xlane.f32.xlu0 %v370
  %v372 = vpop.xlane.xlu0 %371
  %v373 = vsel %vm80, %v323, 0.0
  %374 = vadd.xlane.f32.xlu0 %v373
  %v375 = vpop.xlane.xlu0 %374
  %v376 = vsel %vm80, %v324, 0.0
  %377 = vadd.xlane.f32.xlu0 %v376
  %v378 = vpop.xlane.xlu0 %377
  %v379 = vsel %vm80, %v325, 0.0
  %380 = vadd.xlane.f32.xlu0 %v379
  %v381 = vpop.xlane.xlu0 %380
  %v382 = vsel %vm80, %v326, 0.0
  %383 = vadd.xlane.f32.xlu0 %v382
  %v384 = vpop.xlane.xlu0 %383
  %v385 = vsel %vm80, %v327, 0.0
  %386 = vadd.xlane.f32.xlu0 %v385
  %v387 = vpop.xlane.xlu0 %386
  %v388 = vsel %vm80, %v328, 0.0
  %389 = vadd.xlane.f32.xlu0 %v388
  %v390 = vpop.xlane.xlu0 %389
  %v391 = vsel %vm80, %v329, 0.0
  %392 = vadd.xlane.f32.xlu0 %v391
  %v393 = vpop.xlane.xlu0 %392
  %v394 = vsel %vm80, %v330, 0.0
  %395 = vadd.xlane.f32.xlu0 %v394
  %v396 = vpop.xlane.xlu0 %395
  %v397 = vsel %vm80, %v331, 0.0
  %398 = vadd.xlane.f32.xlu0 %v397
  %v399 = vpop.xlane.xlu0 %398
  %v400 = vsel %vm80, %v332, 0.0
  %401 = vadd.xlane.f32.xlu0 %v400
  %v402 = vpop.xlane.xlu0 %401
  %v403 = vsel %vm80, %v333, 0.0
  %404 = vadd.xlane.f32.xlu0 %v403
  %v405 = vpop.xlane.xlu0 %404
  %v406 = vsel %vm80, %v334, 0.0
  %407 = vadd.xlane.f32.xlu0 %v406
  %v408 = vpop.xlane.xlu0 %407
  %v409 = vsel %vm80, %v335, 0.0
  %410 = vadd.xlane.f32.xlu0 %v409
  %v411 = vpop.xlane.xlu0 %410
  %v412 = vsel %vm80, %v336, 0.0
  %413 = vadd.xlane.f32.xlu0 %v412
  %v414 = vpop.xlane.xlu0 %413
  %v415 = vsel %vm80, %v337, 0.0
  %416 = vadd.xlane.f32.xlu0 %v415
  %v417 = vpop.xlane.xlu0 %416
  %v418 = vsel %vm80, %v338, 0.0
  %419 = vadd.xlane.f32.xlu0 %v418
  %v420 = vpop.xlane.xlu0 %419
  %v421 = vsel %vm80, %v339, 0.0
  %422 = vadd.xlane.f32.xlu0 %v421
  %v423 = vpop.xlane.xlu0 %422
  %v424 = vsel %vm80, %v340, 0.0
  %425 = vadd.xlane.f32.xlu0 %v424
  %v426 = vpop.xlane.xlu0 %425
  %v427 = vsel %vm80, %v341, 0.0
  %428 = vadd.xlane.f32.xlu0 %v427
  %v429 = vpop.xlane.xlu0 %428
  %v430 = vsel %vm80, %v342, 0.0
  %431 = vadd.xlane.f32.xlu0 %v430
  %v432 = vpop.xlane.xlu0 %431
  %v433 = vsel %vm80, %v343, 0.0
  %434 = vadd.xlane.f32.xlu0 %v433
  %v435 = vpop.xlane.xlu0 %434
  %v436 = vsel %vm80, %v344, 0.0
  %437 = vadd.xlane.f32.xlu0 %v436
  %v438 = vpop.xlane.xlu0 %437
  %v439 = vsel %vm80, %v345, 0.0
  %440 = vadd.xlane.f32.xlu0 %v439
  %v441 = vpop.xlane.xlu0 %440
  %v442 = vsel %vm80, %v346, 0.0
  %443 = vadd.xlane.f32.xlu0 %v442
  %v444 = vpop.xlane.xlu0 %443
  %v445 = vsel %vm80, %v347, 0.0
  %446 = vadd.xlane.f32.xlu0 %v445
  %v447 = vpop.xlane.xlu0 %446
  %v448 = vsel %vm80, %v348, 0.0
  %449 = vadd.xlane.f32.xlu0 %v448
  %v450 = vpop.xlane.xlu0 %449
  %v451 = vsel %vm80, %v349, 0.0
  %452 = vadd.xlane.f32.xlu0 %v451
  %v453 = vpop.xlane.xlu0 %452
  %v454 = vsel %vm80, %v350, 0.0
  %455 = vadd.xlane.f32.xlu0 %v454
  %v456 = vpop.xlane.xlu0 %455
  %v457 = vsel %vm80, %v351, 0.0
  %458 = vadd.xlane.f32.xlu0 %v457
  %v459 = vpop.xlane.xlu0 %458
  %v460 = vsel %vm80, %v352, 0.0
  %461 = vadd.xlane.f32.xlu0 %v460
  %v462 = vpop.xlane.xlu0 %461
  %v463 = vsel %vm80, %v353, 0.0
  %464 = vadd.xlane.f32.xlu0 %v463
  %v465 = vpop.xlane.xlu0 %464
  %v466 = vsel %vm80, %v354, 0.0
  %467 = vadd.xlane.f32.xlu0 %v466
  %v468 = vpop.xlane.xlu0 %467
  %v469 = vsel %vm80, %v355, 0.0
  %470 = vadd.xlane.f32.xlu0 %v469
  %v471 = vpop.xlane.xlu0 %470
  %v472 = vsel %vm80, %v356, 0.0
  %473 = vadd.xlane.f32.xlu0 %v472
  %v474 = vpop.xlane.xlu0 %473
  %v475 = vsel %vm80, %v357, 0.0
  %476 = vadd.xlane.f32.xlu0 %v475
  %v477 = vpop.xlane.xlu0 %476
  %v478 = vsel %vm80, %v358, 0.0
  %479 = vadd.xlane.f32.xlu0 %v478
  %v480 = vpop.xlane.xlu0 %479
  %v481 = vsel %vm80, %v359, 0.0
  %482 = vadd.xlane.f32.xlu0 %v481
  %v483 = vpop.xlane.xlu0 %482
  %v484 = vsel %vm80, %v360, 0.0
  %485 = vadd.xlane.f32.xlu0 %v484
  %v486 = vpop.xlane.xlu0 %485
  %v487 = vsel %vm80, %v361, 0.0
  %488 = vadd.xlane.f32.xlu0 %v487
  %v489 = vpop.xlane.xlu0 %488
  %v490 = vsel %vm80, %v362, 0.0
  %491 = vadd.xlane.f32.xlu0 %v490
  %v492 = vpop.xlane.xlu0 %491
  %v493 = vsel %vm80, %v363, 0.0
  %494 = vadd.xlane.f32.xlu0 %v493
  %v495 = vpop.xlane.xlu0 %494
  %v496 = vsel %vm80, %v364, 0.0
  %497 = vadd.xlane.f32.xlu0 %v496
  %v498 = vpop.xlane.xlu0 %497
  %v499 = vsel %vm80, %v365, 0.0
  %500 = vadd.xlane.f32.xlu0 %v499
  %v501 = vpop.xlane.xlu0 %500
  %v502 = vsel %vm80, %v366, 0.0
  %503 = vadd.xlane.f32.xlu0 %v502
  %v504 = vpop.xlane.xlu0 %503
  %v505 = vsel %vm80, %v367, 0.0
  %506 = vadd.xlane.f32.xlu0 %v505
  %v507 = vpop.xlane.xlu0 %506
  %v508 = vsel %vm80, %v368, 0.0
  %509 = vadd.xlane.f32.xlu0 %v508
  %v510 = vpop.xlane.xlu0 %509
  %v511 = vsel %vm80, %v369, 0.0
  %512 = vadd.xlane.f32.xlu0 %v511
  %v513 = vpop.xlane.xlu0 %512
  %v514 = vmul.f32 %v372, %v225
  %v515 = vmul.f32 %v375, %v225
  %v516 = vmul.f32 %v378, %v225
  %v517 = vmul.f32 %v381, %v225
  %v518 = vmul.f32 %v384, %v225
  %v519 = vmul.f32 %v387, %v225
  %v520 = vmul.f32 %v390, %v225
  %v521 = vmul.f32 %v393, %v225
  %v522 = vmul.f32 %v396, %v225
  %v523 = vmul.f32 %v399, %v225
  %v524 = vmul.f32 %v402, %v225
  %v525 = vmul.f32 %v405, %v225
  %v526 = vmul.f32 %v408, %v225
  %v527 = vmul.f32 %v411, %v225
  %v528 = vmul.f32 %v414, %v225
  %v529 = vmul.f32 %v417, %v225
  %v530 = vmul.f32 %v420, %v225
  %v531 = vmul.f32 %v423, %v225
  %v532 = vmul.f32 %v426, %v225
  %v533 = vmul.f32 %v429, %v225
  %v534 = vmul.f32 %v432, %v225
  %v535 = vmul.f32 %v435, %v225
  %v536 = vmul.f32 %v438, %v225
  %v537 = vmul.f32 %v441, %v225
  %v538 = vmul.f32 %v444, %v225
  %v539 = vmul.f32 %v447, %v225
  %v540 = vmul.f32 %v450, %v225
  %v541 = vmul.f32 %v453, %v225
  %v542 = vmul.f32 %v456, %v225
  %v543 = vmul.f32 %v459, %v225
  %v544 = vmul.f32 %v462, %v225
  %v545 = vmul.f32 %v465, %v225
  %v546 = vmul.f32 %v468, %v225
  %v547 = vmul.f32 %v471, %v225
  %v548 = vmul.f32 %v474, %v225
  %v549 = vmul.f32 %v477, %v225
  %v550 = vmul.f32 %v480, %v225
  %v551 = vmul.f32 %v483, %v225
  %v552 = vmul.f32 %v486, %v225
  %v553 = vmul.f32 %v489, %v225
  %v554 = vmul.f32 %v492, %v225
  %v555 = vmul.f32 %v495, %v225
  %v556 = vmul.f32 %v498, %v225
  %v557 = vmul.f32 %v501, %v225
  %v558 = vmul.f32 %v504, %v225
  %v559 = vmul.f32 %v507, %v225
  %v560 = vmul.f32 %v510, %v225
  %v561 = vmul.f32 %v513, %v225
  %v562 = vadd.f32 %v514, 1e-05
  %v563 = vadd.f32 %v515, 1e-05
  %v564 = vadd.f32 %v516, 1e-05
  %v565 = vadd.f32 %v517, 1e-05
  %v566 = vadd.f32 %v518, 1e-05
  %v567 = vadd.f32 %v519, 1e-05
  %v568 = vadd.f32 %v520, 1e-05
  %v569 = vadd.f32 %v521, 1e-05
  %v570 = vadd.f32 %v522, 1e-05
  %v571 = vadd.f32 %v523, 1e-05
  %v572 = vadd.f32 %v524, 1e-05
  %v573 = vadd.f32 %v525, 1e-05
  %v574 = vadd.f32 %v526, 1e-05
  %v575 = vadd.f32 %v527, 1e-05
  %v576 = vadd.f32 %v528, 1e-05
  %v577 = vadd.f32 %v529, 1e-05
  %v578 = vadd.f32 %v530, 1e-05
  %v579 = vadd.f32 %v531, 1e-05
  %v580 = vadd.f32 %v532, 1e-05
  %v581 = vadd.f32 %v533, 1e-05
  %v582 = vadd.f32 %v534, 1e-05
  %v583 = vadd.f32 %v535, 1e-05
  %v584 = vadd.f32 %v536, 1e-05
  %v585 = vadd.f32 %v537, 1e-05
  %v586 = vadd.f32 %v538, 1e-05
  %v587 = vadd.f32 %v539, 1e-05
  %v588 = vadd.f32 %v540, 1e-05
  %v589 = vadd.f32 %v541, 1e-05
  %v590 = vadd.f32 %v542, 1e-05
  %v591 = vadd.f32 %v543, 1e-05
  %v592 = vadd.f32 %v544, 1e-05
  %v593 = vadd.f32 %v545, 1e-05
  %v594 = vadd.f32 %v546, 1e-05
  %v595 = vadd.f32 %v547, 1e-05
  %v596 = vadd.f32 %v548, 1e-05
  %v597 = vadd.f32 %v549, 1e-05
  %v598 = vadd.f32 %v550, 1e-05
  %v599 = vadd.f32 %v551, 1e-05
  %v600 = vadd.f32 %v552, 1e-05
  %v601 = vadd.f32 %v553, 1e-05
  %v602 = vadd.f32 %v554, 1e-05
  %v603 = vadd.f32 %v555, 1e-05
  %v604 = vadd.f32 %v556, 1e-05
  %v605 = vadd.f32 %v557, 1e-05
  %v606 = vadd.f32 %v558, 1e-05
  %v607 = vadd.f32 %v559, 1e-05
  %v608 = vadd.f32 %v560, 1e-05
  %v609 = vadd.f32 %v561, 1e-05
  %v610 = vrsqrt.pop %v562
  %v611 = vrsqrt.pop %v563
  %v612 = vrsqrt.pop %v564
  %v613 = vrsqrt.pop %v565
  %v614 = vrsqrt.pop %v566
  %v615 = vrsqrt.pop %v567
  %v616 = vrsqrt.pop %v568
  %v617 = vrsqrt.pop %v569
  %v618 = vrsqrt.pop %v570
  %v619 = vrsqrt.pop %v571
  %v620 = vrsqrt.pop %v572
  %v621 = vrsqrt.pop %v573
  %v622 = vrsqrt.pop %v574
  %v623 = vrsqrt.pop %v575
  %v624 = vrsqrt.pop %v576
  %v625 = vrsqrt.pop %v577
  %v626 = vrsqrt.pop %v578
  %v627 = vrsqrt.pop %v579
  %v628 = vrsqrt.pop %v580
  %v629 = vrsqrt.pop %v581
  %v630 = vrsqrt.pop %v582
  %v631 = vrsqrt.pop %v583
  %v632 = vrsqrt.pop %v584
  %v633 = vrsqrt.pop %v585
  %v634 = vrsqrt.pop %v586
  %v635 = vrsqrt.pop %v587
  %v636 = vrsqrt.pop %v588
  %v637 = vrsqrt.pop %v589
  %v638 = vrsqrt.pop %v590
  %v639 = vrsqrt.pop %v591
  %v640 = vrsqrt.pop %v592
  %v641 = vrsqrt.pop %v593
  %v642 = vrsqrt.pop %v594
  %v643 = vrsqrt.pop %v595
  %v644 = vrsqrt.pop %v596
  %v645 = vrsqrt.pop %v597
  %v646 = vrsqrt.pop %v598
  %v647 = vrsqrt.pop %v599
  %v648 = vrsqrt.pop %v600
  %v649 = vrsqrt.pop %v601
  %v650 = vrsqrt.pop %v602
  %v651 = vrsqrt.pop %v603
  %v652 = vrsqrt.pop %v604
  %v653 = vrsqrt.pop %v605
  %v654 = vrsqrt.pop %v606
  %v655 = vrsqrt.pop %v607
  %v656 = vrsqrt.pop %v608
  %v657 = vrsqrt.pop %v609
  %v658 = vmul.f32 %v274, %v610
  %v659 = vmul.f32 %v275, %v611
  %v660 = vmul.f32 %v276, %v612
  %v661 = vmul.f32 %v277, %v613
  %v662 = vmul.f32 %v278, %v614
  %v663 = vmul.f32 %v279, %v615
  %v664 = vmul.f32 %v280, %v616
  %v665 = vmul.f32 %v281, %v617
  %v666 = vmul.f32 %v282, %v618
  %v667 = vmul.f32 %v283, %v619
  %v668 = vmul.f32 %v284, %v620
  %v669 = vmul.f32 %v285, %v621
  %v670 = vmul.f32 %v286, %v622
  %v671 = vmul.f32 %v287, %v623
  %v672 = vmul.f32 %v288, %v624
  %v673 = vmul.f32 %v289, %v625
  %v674 = vmul.f32 %v290, %v626
  %v675 = vmul.f32 %v291, %v627
  %v676 = vmul.f32 %v292, %v628
  %v677 = vmul.f32 %v293, %v629
  %v678 = vmul.f32 %v294, %v630
  %v679 = vmul.f32 %v295, %v631
  %v680 = vmul.f32 %v296, %v632
  %v681 = vmul.f32 %v297, %v633
  %v682 = vmul.f32 %v298, %v634
  %v683 = vmul.f32 %v299, %v635
  %v684 = vmul.f32 %v300, %v636
  %v685 = vmul.f32 %v301, %v637
  %v686 = vmul.f32 %v302, %v638
  %v687 = vmul.f32 %v303, %v639
  %v688 = vmul.f32 %v304, %v640
  %v689 = vmul.f32 %v305, %v641
  %v690 = vmul.f32 %v306, %v642
  %v691 = vmul.f32 %v307, %v643
  %v692 = vmul.f32 %v308, %v644
  %v693 = vmul.f32 %v309, %v645
  %v694 = vmul.f32 %v310, %v646
  %v695 = vmul.f32 %v311, %v647
  %v696 = vmul.f32 %v312, %v648
  %v697 = vmul.f32 %v313, %v649
  %v698 = vmul.f32 %v314, %v650
  %v699 = vmul.f32 %v315, %v651
  %v700 = vmul.f32 %v316, %v652
  %v701 = vmul.f32 %v317, %v653
  %v702 = vmul.f32 %v318, %v654
  %v703 = vmul.f32 %v319, %v655
  %v704 = vmul.f32 %v320, %v656
  %v705 = vmul.f32 %v321, %v657
  %v707 = vlaneseq
  %v708 = vshrl.u32 %v707, 7
  %v709 = vsub.s32 0, %v708
  %v710 = vrot.slane %v78, %v709
  %v712 = vmul.f32 %v658, %v710
  %v713 = vmul.f32 %v659, %v710
  %v714 = vmul.f32 %v660, %v710
  %v715 = vmul.f32 %v661, %v710
  %v716 = vmul.f32 %v662, %v710
  %v717 = vmul.f32 %v663, %v710
  %v718 = vmul.f32 %v664, %v710
  %v719 = vmul.f32 %v665, %v710
  %v720 = vmul.f32 %v666, %v710
  %v721 = vmul.f32 %v667, %v710
  %v722 = vmul.f32 %v668, %v710
  %v723 = vmul.f32 %v669, %v710
  %v724 = vmul.f32 %v670, %v710
  %v725 = vmul.f32 %v671, %v710
  %v726 = vmul.f32 %v672, %v710
  %v727 = vmul.f32 %v673, %v710
  %v728 = vmul.f32 %v674, %v710
  %v729 = vmul.f32 %v675, %v710
  %v730 = vmul.f32 %v676, %v710
  %v731 = vmul.f32 %v677, %v710
  %v732 = vmul.f32 %v678, %v710
  %v733 = vmul.f32 %v679, %v710
  %v734 = vmul.f32 %v680, %v710
  %v735 = vmul.f32 %v681, %v710
  %v736 = vmul.f32 %v682, %v710
  %v737 = vmul.f32 %v683, %v710
  %v738 = vmul.f32 %v684, %v710
  %v739 = vmul.f32 %v685, %v710
  %v740 = vmul.f32 %v686, %v710
  %v741 = vmul.f32 %v687, %v710
  %v742 = vmul.f32 %v688, %v710
  %v743 = vmul.f32 %v689, %v710
  %v744 = vmul.f32 %v690, %v710
  %v745 = vmul.f32 %v691, %v710
  %v746 = vmul.f32 %v692, %v710
  %v747 = vmul.f32 %v693, %v710
  %v748 = vmul.f32 %v694, %v710
  %v749 = vmul.f32 %v695, %v710
  %v750 = vmul.f32 %v696, %v710
  %v751 = vmul.f32 %v697, %v710
  %v752 = vmul.f32 %v698, %v710
  %v753 = vmul.f32 %v699, %v710
  %v754 = vmul.f32 %v700, %v710
  %v755 = vmul.f32 %v701, %v710
  %v756 = vmul.f32 %v702, %v710
  %v757 = vmul.f32 %v703, %v710
  %v758 = vmul.f32 %v704, %v710
  %v759 = vmul.f32 %v705, %v710
  %v761 = vlaneseq
  %v762 = vshrl.u32 %v761, 7
  %v763 = vsub.s32 0, %v762
  %v764 = vrot.slane %v79, %v763
  %v766 = vadd.f32 %v712, %v764
  %v767 = vadd.f32 %v713, %v764
  %v768 = vadd.f32 %v714, %v764
  %v769 = vadd.f32 %v715, %v764
  %v770 = vadd.f32 %v716, %v764
  %v771 = vadd.f32 %v717, %v764
  %v772 = vadd.f32 %v718, %v764
  %v773 = vadd.f32 %v719, %v764
  %v774 = vadd.f32 %v720, %v764
  %v775 = vadd.f32 %v721, %v764
  %v776 = vadd.f32 %v722, %v764
  %v777 = vadd.f32 %v723, %v764
  %v778 = vadd.f32 %v724, %v764
  %v779 = vadd.f32 %v725, %v764
  %v780 = vadd.f32 %v726, %v764
  %v781 = vadd.f32 %v727, %v764
  %v782 = vadd.f32 %v728, %v764
  %v783 = vadd.f32 %v729, %v764
  %v784 = vadd.f32 %v730, %v764
  %v785 = vadd.f32 %v731, %v764
  %v786 = vadd.f32 %v732, %v764
  %v787 = vadd.f32 %v733, %v764
  %v788 = vadd.f32 %v734, %v764
  %v789 = vadd.f32 %v735, %v764
  %v790 = vadd.f32 %v736, %v764
  %v791 = vadd.f32 %v737, %v764
  %v792 = vadd.f32 %v738, %v764
  %v793 = vadd.f32 %v739, %v764
  %v794 = vadd.f32 %v740, %v764
  %v795 = vadd.f32 %v741, %v764
  %v796 = vadd.f32 %v742, %v764
  %v797 = vadd.f32 %v743, %v764
  %v798 = vadd.f32 %v744, %v764
  %v799 = vadd.f32 %v745, %v764
  %v800 = vadd.f32 %v746, %v764
  %v801 = vadd.f32 %v747, %v764
  %v802 = vadd.f32 %v748, %v764
  %v803 = vadd.f32 %v749, %v764
  %v804 = vadd.f32 %v750, %v764
  %v805 = vadd.f32 %v751, %v764
  %v806 = vadd.f32 %v752, %v764
  %v807 = vadd.f32 %v753, %v764
  %v808 = vadd.f32 %v754, %v764
  %v809 = vadd.f32 %v755, %v764
  %v810 = vadd.f32 %v756, %v764
  %v811 = vadd.f32 %v757, %v764
  %v812 = vadd.f32 %v758, %v764
  %v813 = vadd.f32 %v759, %v764
  %v814 = vpack.c.bf16 %v767, %v766
  %v815 = vpack.c.bf16 %v769, %v768
  %v816 = vpack.c.bf16 %v771, %v770
  %v817 = vpack.c.bf16 %v773, %v772
  %v818 = vpack.c.bf16 %v775, %v774
  %v819 = vpack.c.bf16 %v777, %v776
  %v820 = vpack.c.bf16 %v779, %v778
  %v821 = vpack.c.bf16 %v781, %v780
  %v822 = vpack.c.bf16 %v783, %v782
  %v823 = vpack.c.bf16 %v785, %v784
  %v824 = vpack.c.bf16 %v787, %v786
  %v825 = vpack.c.bf16 %v789, %v788
  %v826 = vpack.c.bf16 %v791, %v790
  %v827 = vpack.c.bf16 %v793, %v792
  %v828 = vpack.c.bf16 %v795, %v794
  %v829 = vpack.c.bf16 %v797, %v796
  %v830 = vpack.c.bf16 %v799, %v798
  %v831 = vpack.c.bf16 %v801, %v800
  %v832 = vpack.c.bf16 %v803, %v802
  %v833 = vpack.c.bf16 %v805, %v804
  %v834 = vpack.c.bf16 %v807, %v806
  %v835 = vpack.c.bf16 %v809, %v808
  %v836 = vpack.c.bf16 %v811, %v810
  %v837 = vpack.c.bf16 %v813, %v812
  %v838 = vld [vmem:[%s4] sm:$0xf]
  %v839 = vld [vmem:[%s4 + $0x4] sm:$0xf]
  %v840 = vld [vmem:[%s4 + $0x8] sm:$0xf]
  %v841 = vld [vmem:[%s4 + $0xc] sm:$0xf]
  %v842 = vld [vmem:[%s4 + $0x10] sm:$0xf]
  %v843 = vld [vmem:[%s4 + $0x14] sm:$0xf]
  %v844 = vld [vmem:[%s4 + $0x18] sm:$0xf]
  %v845 = vld [vmem:[%s4 + $0x1c] sm:$0xf]
  %v846 = vld [vmem:[%s4 + $0x20] sm:$0xf]
  %v847 = vld [vmem:[%s4 + $0x24] sm:$0xf]
  %v848 = vld [vmem:[%s4 + $0x28] sm:$0xf]
  %v849 = vld [vmem:[%s4 + $0x2c] sm:$0xf]
  %v854 = vunpack.c.l.b16 %v838
  %v855 = vunpack.c.l.b16 %v839
  %v856 = vunpack.c.l.b16 %v840
  %v857 = vunpack.c.l.b16 %v841
  %v858 = vpack.c.b16 %v855, %v854
  %v859 = vpack.c.b16 %v857, %v856
  %v863 = vsel %vm80, %v814, 0
  %v866 = vsel %vm80, %v815, 0
  %v869 = vsel %vm80, %v816, 0
  %v872 = vsel %vm80, %v817, 0
  %v875 = vsel %vm80, %v818, 0
  %v878 = vsel %vm80, %v819, 0
  %v881 = vsel %vm80, %v820, 0
  %v884 = vsel %vm80, %v821, 0
  %886 = vmatprep.subr.bf16.mxu0 0
  %887 = vmatpush1.bf16.msra.mxu0 %v858
  %888 = vmatprep.subr.bf16.mxu0 0
  %889 = vmatpush1.bf16.msra.mxu0 %v859
  %890 = vmatprep.subr.bf16.mxu0 0
  %891 = vmatpush1.bf16.msra.mxu0 0
  %892 = vmatprep.subr.bf16.mxu0 0
  %893 = vmatpush1.bf16.msra.mxu0 0
  %894 = vmatprep.subr.bf16.mxu0 0
  %895 = vmatpush1.bf16.msra.mxu0 0
  %896 = vmatprep.subr.bf16.mxu0 0
  %897 = vmatpush1.bf16.msra.mxu0 0
  %898 = vmatprep.subr.bf16.mxu0 0
  %899 = vmatpush1.bf16.msra.mxu0 0
  %900 = vmatprep.subr.bf16.mxu0 0
  %901 = vmatpush1.bf16.msra.mxu0 0
  %902 = vmatprep.subr.bf16.mxu0 0
  %903 = vmatpush1.bf16.msra.mxu0 0
  %904 = vmatprep.subr.bf16.mxu0 0
  %905 = vmatpush1.bf16.msra.mxu0 0
  %906 = vmatprep.subr.bf16.mxu0 0
  %907 = vmatpush1.bf16.msra.mxu0 0
  %908 = vmatprep.subr.bf16.mxu0 0
  %909 = vmatpush1.bf16.msra.mxu0 0
  %910 = vmatprep.subr.bf16.mxu0 0
  %911 = vmatpush1.bf16.msra.mxu0 0
  %912 = vmatprep.subr.bf16.mxu0 0
  %913 = vmatpush1.bf16.msra.mxu0 0
  %914 = vmatprep.subr.bf16.mxu0 0
  %915 = vmatpush1.bf16.msra.mxu0 0
  %916 = vmatprep.subr.bf16.mxu0 0
  %917 = vmatpush1.bf16.msra.mxu0 0
  %918 = vmatprep.mubr.bf16.mxu0 0
  %919 = vmatmul.mubr.bf16.gmra.mrb[0].mxu0 %v863
  %v920 = vpop.f32.mrb[0].mxu0
  %v921 = vadd.f32 0.0, %v920
  %v922 = vpop.f32.mrb[0].mxu0
  %v923 = vpop.f32.mrb[0].mxu0
  %v924 = vadd.f32 0.0, %v923
  %v925 = vpop.f32.mrb[0].mxu0
  %926 = vmatprep.mubr.bf16.mxu0 0
  %927 = vmatmul.mubr.bf16.gmra.mrb[0].mxu0 %v866
  %v928 = vpop.f32.mrb[0].mxu0
  %v929 = vadd.f32 0.0, %v928
  %v930 = vpop.f32.mrb[0].mxu0
  %v931 = vpop.f32.mrb[0].mxu0
  %v932 = vadd.f32 0.0, %v931
  %v933 = vpop.f32.mrb[0].mxu0
  %934 = vmatprep.mubr.bf16.mxu0 0
  %935 = vmatmul.mubr.bf16.gmra.mrb[0].mxu0 %v869
  %v936 = vpop.f32.mrb[0].mxu0
  %v937 = vadd.f32 0.0, %v936
  %v938 = vpop.f32.mrb[0].mxu0
  %v939 = vpop.f32.mrb[0].mxu0
  %v940 = vadd.f32 0.0, %v939
  %v941 = vpop.f32.mrb[0].mxu0
  %942 = vmatprep.mubr.bf16.mxu0 0
  %943 = vmatmul.mubr.bf16.gmra.mrb[0].mxu0 %v872
  %v944 = vpop.f32.mrb[0].mxu0
  %v945 = vadd.f32 0.0, %v944
  %v946 = vpop.f32.mrb[0].mxu0
  %v947 = vpop.f32.mrb[0].mxu0
  %v948 = vadd.f32 0.0, %v947
  %v949 = vpop.f32.mrb[0].mxu0
  %950 = vmatprep.mubr.bf16.mxu0 0
  %951 = vmatmul.mubr.bf16.gmra.mrb[0].mxu0 %v875
  %v952 = vpop.f32.mrb[0].mxu0
  %v953 = vadd.f32 0.0, %v952
  %v954 = vpop.f32.mrb[0].mxu0
  %v955 = vpop.f32.mrb[0].mxu0
  %v956 = vadd.f32 0.0, %v955
  %v957 = vpop.f32.mrb[0].mxu0
  %958 = vmatprep.mubr.bf16.mxu0 0
  %959 = vmatmul.mubr.bf16.gmra.mrb[0].mxu0 %v878
  %v960 = vpop.f32.mrb[0].mxu0
  %v961 = vadd.f32 0.0, %v960
  %v962 = vpop.f32.mrb[0].mxu0
  %v963 = vpop.f32.mrb[0].mxu0
  %v964 = vadd.f32 0.0, %v963
  %v965 = vpop.f32.mrb[0].mxu0
  %966 = vmatprep.mubr.bf16.mxu0 0
  %967 = vmatmul.mubr.bf16.gmra.mrb[0].mxu0 %v881
  %v968 = vpop.f32.mrb[0].mxu0
  %v969 = vadd.f32 0.0, %v968
  %v970 = vpop.f32.mrb[0].mxu0
  %v971 = vpop.f32.mrb[0].mxu0
  %v972 = vadd.f32 0.0, %v971
  %v973 = vpop.f32.mrb[0].mxu0
  %974 = vmatprep.mubr.bf16.mxu0 0
  %975 = vmatmul.mubr.bf16.gmra.mrb[0].mxu0 %v884
  %v976 = vpop.f32.mrb[0].mxu0
  %v977 = vadd.f32 0.0, %v976
  %v978 = vpop.f32.mrb[0].mxu0
  %v979 = vpop.f32.mrb[0].mxu0
  %v980 = vadd.f32 0.0, %v979
  %v981 = vpop.f32.mrb[0].mxu0
  %982 = vdwg.mxu0
  %v987 = vunpack.c.l.b16 %v842
  %v988 = vunpack.c.l.b16 %v843
  %v989 = vunpack.c.l.b16 %v844
  %v990 = vunpack.c.l.b16 %v845
  %v991 = vpack.c.b16 %v988, %v987
  %v992 = vpack.c.b16 %v990, %v989
  %v996 = vsel %vm80, %v822, 0
  %v999 = vsel %vm80, %v823, 0
  %v1002 = vsel %vm80, %v824, 0
  %v1005 = vsel %vm80, %v825, 0
  %v1008 = vsel %vm80, %v826, 0
  %v1011 = vsel %vm80, %v827, 0
  %v1014 = vsel %vm80, %v828, 0
  %v1017 = vsel %vm80, %v829, 0
  %1019 = vmatprep.subr.bf16.mxu0 0
  %1020 = vmatpush1.bf16.msra.mxu0 %v991
  %1021 = vmatprep.subr.bf16.mxu0 0
  %1022 = vmatpush1.bf16.msra.mxu0 %v992
  %1023 = vmatprep.subr.bf16.mxu0 0
  %1024 = vmatpush1.bf16.msra.mxu0 0
  %1025 = vmatprep.subr.bf16.mxu0 0
  %1026 = vmatpush1.bf16.msra.mxu0 0
  %1027 = vmatprep.subr.bf16.mxu0 0
  %1028 = vmatpush1.bf16.msra.mxu0 0
  %1029 = vmatprep.subr.bf16.mxu0 0
  %1030 = vmatpush1.bf16.msra.mxu0 0
  %1031 = vmatprep.subr.bf16.mxu0 0
  %1032 = vmatpush1.bf16.msra.mxu0 0
  %1033 = vmatprep.subr.bf16.mxu0 0
  %1034 = vmatpush1.bf16.msra.mxu0 0
  %1035 = vmatprep.subr.bf16.mxu0 0
  %1036 = vmatpush1.bf16.msra.mxu0 0
  %1037 = vmatprep.subr.bf16.mxu0 0
  %1038 = vmatpush1.bf16.msra.mxu0 0
  %1039 = vmatprep.subr.bf16.mxu0 0
  %1040 = vmatpush1.bf16.msra.mxu0 0
  %1041 = vmatprep.subr.bf16.mxu0 0
  %1042 = vmatpush1.bf16.msra.mxu0 0
  %1043 = vmatprep.subr.bf16.mxu0 0
  %1044 = vmatpush1.bf16.msra.mxu0 0
  %1045 = vmatprep.subr.bf16.mxu0 0
  %1046 = vmatpush1.bf16.msra.mxu0 0
  %1047 = vmatprep.subr.bf16.mxu0 0
  %1048 = vmatpush1.bf16.msra.mxu0 0
  %1049 = vmatprep.subr.bf16.mxu0 0
  %1050 = vmatpush1.bf16.msra.mxu0 0
  %1051 = vmatprep.mubr.bf16.mxu0 0
  %1052 = vmatmul.mubr.bf16.gmra.mrb[0].mxu0 %v996
  %v1053 = vpop.f32.mrb[0].mxu0
  %v1054 = vadd.f32 0.0, %v1053
  %v1055 = vpop.f32.mrb[0].mxu0
  %v1056 = vpop.f32.mrb[0].mxu0
  %v1057 = vadd.f32 0.0, %v1056
  %v1058 = vpop.f32.mrb[0].mxu0
  %1059 = vmatprep.mubr.bf16.mxu0 0
  %1060 = vmatmul.mubr.bf16.gmra.mrb[0].mxu0 %v999
  %v1061 = vpop.f32.mrb[0].mxu0
  %v1062 = vadd.f32 0.0, %v1061
  %v1063 = vpop.f32.mrb[0].mxu0
  %v1064 = vpop.f32.mrb[0].mxu0
  %v1065 = vadd.f32 0.0, %v1064
  %v1066 = vpop.f32.mrb[0].mxu0
  %1067 = vmatprep.mubr.bf16.mxu0 0
  %1068 = vmatmul.mubr.bf16.gmra.mrb[0].mxu0 %v1002
  %v1069 = vpop.f32.mrb[0].mxu0
  %v1070 = vadd.f32 0.0, %v1069
  %v1071 = vpop.f32.mrb[0].mxu0
  %v1072 = vpop.f32.mrb[0].mxu0
  %v1073 = vadd.f32 0.0, %v1072
  %v1074 = vpop.f32.mrb[0].mxu0
  %1075 = vmatprep.mubr.bf16.mxu0 0
  %1076 = vmatmul.mubr.bf16.gmra.mrb[0].mxu0 %v1005
  %v1077 = vpop.f32.mrb[0].mxu0
  %v1078 = vadd.f32 0.0, %v1077
  %v1079 = vpop.f32.mrb[0].mxu0
  %v1080 = vpop.f32.mrb[0].mxu0
  %v1081 = vadd.f32 0.0, %v1080
  %v1082 = vpop.f32.mrb[0].mxu0
  %1083 = vmatprep.mubr.bf16.mxu0 0
  %1084 = vmatmul.mubr.bf16.gmra.mrb[0].mxu0 %v1008
  %v1085 = vpop.f32.mrb[0].mxu0
  %v1086 = vadd.f32 0.0, %v1085
  %v1087 = vpop.f32.mrb[0].mxu0
  %v1088 = vpop.f32.mrb[0].mxu0
  %v1089 = vadd.f32 0.0, %v1088
  %v1090 = vpop.f32.mrb[0].mxu0
  %1091 = vmatprep.mubr.bf16.mxu0 0
  %1092 = vmatmul.mubr.bf16.gmra.mrb[0].mxu0 %v1011
  %v1093 = vpop.f32.mrb[0].mxu0
  %v1094 = vadd.f32 0.0, %v1093
  %v1095 = vpop.f32.mrb[0].mxu0
  %v1096 = vpop.f32.mrb[0].mxu0
  %v1097 = vadd.f32 0.0, %v1096
  %v1098 = vpop.f32.mrb[0].mxu0
  %1099 = vmatprep.mubr.bf16.mxu0 0
  %1100 = vmatmul.mubr.bf16.gmra.mrb[0].mxu0 %v1014
  %v1101 = vpop.f32.mrb[0].mxu0
  %v1102 = vadd.f32 0.0, %v1101
  %v1103 = vpop.f32.mrb[0].mxu0
  %v1104 = vpop.f32.mrb[0].mxu0
  %v1105 = vadd.f32 0.0, %v1104
  %v1106 = vpop.f32.mrb[0].mxu0
  %1107 = vmatprep.mubr.bf16.mxu0 0
  %1108 = vmatmul.mubr.bf16.gmra.mrb[0].mxu0 %v1017
  %v1109 = vpop.f32.mrb[0].mxu0
  %v1110 = vadd.f32 0.0, %v1109
  %v1111 = vpop.f32.mrb[0].mxu0
  %v1112 = vpop.f32.mrb[0].mxu0
  %v1113 = vadd.f32 0.0, %v1112
  %v1114 = vpop.f32.mrb[0].mxu0
  %1115 = vdwg.mxu0
  %v1120 = vunpack.c.l.b16 %v846
  %v1121 = vunpack.c.l.b16 %v847
  %v1122 = vunpack.c.l.b16 %v848
  %v1123 = vunpack.c.l.b16 %v849
  %v1124 = vpack.c.b16 %v1121, %v1120
  %v1125 = vpack.c.b16 %v1123, %v1122
  %v1129 = vsel %vm80, %v830, 0
  %v1132 = vsel %vm80, %v831, 0
  %v1135 = vsel %vm80, %v832, 0
  %v1138 = vsel %vm80, %v833, 0
  %v1141 = vsel %vm80, %v834, 0
  %v1144 = vsel %vm80, %v835, 0
  %v1147 = vsel %vm80, %v836, 0
  %v1150 = vsel %vm80, %v837, 0
  %1152 = vmatprep.subr.bf16.mxu0 0
  %1153 = vmatpush1.bf16.msra.mxu0 %v1124
  %1154 = vmatprep.subr.bf16.mxu0 0
  %1155 = vmatpush1.bf16.msra.mxu0 %v1125
  %1156 = vmatprep.subr.bf16.mxu0 0
  %1157 = vmatpush1.bf16.msra.mxu0 0
  %1158 = vmatprep.subr.bf16.mxu0 0
  %1159 = vmatpush1.bf16.msra.mxu0 0
  %1160 = vmatprep.subr.bf16.mxu0 0
  %1161 = vmatpush1.bf16.msra.mxu0 0
  %1162 = vmatprep.subr.bf16.mxu0 0
  %1163 = vmatpush1.bf16.msra.mxu0 0
  %1164 = vmatprep.subr.bf16.mxu0 0
  %1165 = vmatpush1.bf16.msra.mxu0 0
  %1166 = vmatprep.subr.bf16.mxu0 0
  %1167 = vmatpush1.bf16.msra.mxu0 0
  %1168 = vmatprep.subr.bf16.mxu0 0
  %1169 = vmatpush1.bf16.msra.mxu0 0
  %1170 = vmatprep.subr.bf16.mxu0 0
  %1171 = vmatpush1.bf16.msra.mxu0 0
  %1172 = vmatprep.subr.bf16.mxu0 0
  %1173 = vmatpush1.bf16.msra.mxu0 0
  %1174 = vmatprep.subr.bf16.mxu0 0
  %1175 = vmatpush1.bf16.msra.mxu0 0
  %1176 = vmatprep.subr.bf16.mxu0 0
  %1177 = vmatpush1.bf16.msra.mxu0 0
  %1178 = vmatprep.subr.bf16.mxu0 0
  %1179 = vmatpush1.bf16.msra.mxu0 0
  %1180 = vmatprep.subr.bf16.mxu0 0
  %1181 = vmatpush1.bf16.msra.mxu0 0
  %1182 = vmatprep.subr.bf16.mxu0 0
  %1183 = vmatpush1.bf16.msra.mxu0 0
  %1184 = vmatprep.mubr.bf16.mxu0 0
  %1185 = vmatmul.mubr.bf16.gmra.mrb[0].mxu0 %v1129
  %v1186 = vpop.f32.mrb[0].mxu0
  %v1187 = vadd.f32 0.0, %v1186
  %v1188 = vpop.f32.mrb[0].mxu0
  %v1189 = vpop.f32.mrb[0].mxu0
  %v1190 = vadd.f32 0.0, %v1189
  %v1191 = vpop.f32.mrb[0].mxu0
  %1192 = vmatprep.mubr.bf16.mxu0 0
  %1193 = vmatmul.mubr.bf16.gmra.mrb[0].mxu0 %v1132
  %v1194 = vpop.f32.mrb[0].mxu0
  %v1195 = vadd.f32 0.0, %v1194
  %v1196 = vpop.f32.mrb[0].mxu0
  %v1197 = vpop.f32.mrb[0].mxu0
  %v1198 = vadd.f32 0.0, %v1197
  %v1199 = vpop.f32.mrb[0].mxu0
  %1200 = vmatprep.mubr.bf16.mxu0 0
  %1201 = vmatmul.mubr.bf16.gmra.mrb[0].mxu0 %v1135
  %v1202 = vpop.f32.mrb[0].mxu0
  %v1203 = vadd.f32 0.0, %v1202
  %v1204 = vpop.f32.mrb[0].mxu0
  %v1205 = vpop.f32.mrb[0].mxu0
  %v1206 = vadd.f32 0.0, %v1205
  %v1207 = vpop.f32.mrb[0].mxu0
  %1208 = vmatprep.mubr.bf16.mxu0 0
  %1209 = vmatmul.mubr.bf16.gmra.mrb[0].mxu0 %v1138
  %v1210 = vpop.f32.mrb[0].mxu0
  %v1211 = vadd.f32 0.0, %v1210
  %v1212 = vpop.f32.mrb[0].mxu0
  %v1213 = vpop.f32.mrb[0].mxu0
  %v1214 = vadd.f32 0.0, %v1213
  %v1215 = vpop.f32.mrb[0].mxu0
  %1216 = vmatprep.mubr.bf16.mxu0 0
  %1217 = vmatmul.mubr.bf16.gmra.mrb[0].mxu0 %v1141
  %v1218 = vpop.f32.mrb[0].mxu0
  %v1219 = vadd.f32 0.0, %v1218
  %v1220 = vpop.f32.mrb[0].mxu0
  %v1221 = vpop.f32.mrb[0].mxu0
  %v1222 = vadd.f32 0.0, %v1221
  %v1223 = vpop.f32.mrb[0].mxu0
  %1224 = vmatprep.mubr.bf16.mxu0 0
  %1225 = vmatmul.mubr.bf16.gmra.mrb[0].mxu0 %v1144
  %v1226 = vpop.f32.mrb[0].mxu0
  %v1227 = vadd.f32 0.0, %v1226
  %v1228 = vpop.f32.mrb[0].mxu0
  %v1229 = vpop.f32.mrb[0].mxu0
  %v1230 = vadd.f32 0.0, %v1229
  %v1231 = vpop.f32.mrb[0].mxu0
  %1232 = vmatprep.mubr.bf16.mxu0 0
  %1233 = vmatmul.mubr.bf16.gmra.mrb[0].mxu0 %v1147
  %v1234 = vpop.f32.mrb[0].mxu0
  %v1235 = vadd.f32 0.0, %v1234
  %v1236 = vpop.f32.mrb[0].mxu0
  %v1237 = vpop.f32.mrb[0].mxu0
  %v1238 = vadd.f32 0.0, %v1237
  %v1239 = vpop.f32.mrb[0].mxu0
  %1240 = vmatprep.mubr.bf16.mxu0 0
  %1241 = vmatmul.mubr.bf16.gmra.mrb[0].mxu0 %v1150
  %v1242 = vpop.f32.mrb[0].mxu0
  %v1243 = vadd.f32 0.0, %v1242
  %v1244 = vpop.f32.mrb[0].mxu0
  %v1245 = vpop.f32.mrb[0].mxu0
  %v1246 = vadd.f32 0.0, %v1245
  %v1247 = vpop.f32.mrb[0].mxu0
  %1248 = vdwg.mxu0
  %v1249 = vld [vmem:[%s5] sm:$0x1]
  %v1251 = vlaneseq
  %v1252 = vshrl.u32 %v1251, 7
  %v1253 = vsub.s32 0, %v1252
  %v1254 = vrot.slane %v1249, %v1253
  %v1256 = vadd.f32 %v921, %v1254
  %v1257 = vadd.f32 %v924, %v1254
  %v1258 = vadd.f32 %v929, %v1254
  %v1259 = vadd.f32 %v932, %v1254
  %v1260 = vadd.f32 %v937, %v1254
  %v1261 = vadd.f32 %v940, %v1254
  %v1262 = vadd.f32 %v945, %v1254
  %v1263 = vadd.f32 %v948, %v1254
  %v1264 = vadd.f32 %v953, %v1254
  %v1265 = vadd.f32 %v956, %v1254
  %v1266 = vadd.f32 %v961, %v1254
  %v1267 = vadd.f32 %v964, %v1254
  %v1268 = vadd.f32 %v969, %v1254
  %v1269 = vadd.f32 %v972, %v1254
  %v1270 = vadd.f32 %v977, %v1254
  %v1271 = vadd.f32 %v980, %v1254
  %v1272 = vpack.c.bf16 %v1257, %v1256
  %v1273 = vpack.c.bf16 %v1259, %v1258
  %v1274 = vpack.c.bf16 %v1261, %v1260
  %v1275 = vpack.c.bf16 %v1263, %v1262
  %v1276 = vpack.c.bf16 %v1265, %v1264
  %v1277 = vpack.c.bf16 %v1267, %v1266
  %v1278 = vpack.c.bf16 %v1269, %v1268
  %v1279 = vpack.c.bf16 %v1271, %v1270
  %s1280 = scalar_lea.vmem %s5, 1
  %v1281 = vld [vmem:[%s1280] sm:$0x1]
  %v1283 = vlaneseq
  %v1284 = vshrl.u32 %v1283, 7
  %v1285 = vsub.s32 0, %v1284
  %v1286 = vrot.slane %v1281, %v1285
  %v1288 = vadd.f32 %v1054, %v1286
  %v1289 = vadd.f32 %v1057, %v1286
  %v1290 = vadd.f32 %v1062, %v1286
  %v1291 = vadd.f32 %v1065, %v1286
  %v1292 = vadd.f32 %v1070, %v1286
  %v1293 = vadd.f32 %v1073, %v1286
  %v1294 = vadd.f32 %v1078, %v1286
  %v1295 = vadd.f32 %v1081, %v1286
  %v1296 = vadd.f32 %v1086, %v1286
  %v1297 = vadd.f32 %v1089, %v1286
  %v1298 = vadd.f32 %v1094, %v1286
  %v1299 = vadd.f32 %v1097, %v1286
  %v1300 = vadd.f32 %v1102, %v1286
  %v1301 = vadd.f32 %v1105, %v1286
  %v1302 = vadd.f32 %v1110, %v1286
  %v1303 = vadd.f32 %v1113, %v1286
  %v1304 = vpack.c.bf16 %v1289, %v1288
  %v1305 = vpack.c.bf16 %v1291, %v1290
  %v1306 = vpack.c.bf16 %v1293, %v1292
  %v1307 = vpack.c.bf16 %v1295, %v1294
  %v1308 = vpack.c.bf16 %v1297, %v1296
  %v1309 = vpack.c.bf16 %v1299, %v1298
  %v1310 = vpack.c.bf16 %v1301, %v1300
  %v1311 = vpack.c.bf16 %v1303, %v1302
  %s1312 = scalar_lea.vmem %s5, 2
  %v1313 = vld [vmem:[%s1312] sm:$0x1]
  %v1315 = vlaneseq
  %v1316 = vshrl.u32 %v1315, 7
  %v1317 = vsub.s32 0, %v1316
  %v1318 = vrot.slane %v1313, %v1317
  %v1320 = vadd.f32 %v1187, %v1318
  %v1321 = vadd.f32 %v1190, %v1318
  %v1322 = vadd.f32 %v1195, %v1318
  %v1323 = vadd.f32 %v1198, %v1318
  %v1324 = vadd.f32 %v1203, %v1318
  %v1325 = vadd.f32 %v1206, %v1318
  %v1326 = vadd.f32 %v1211, %v1318
  %v1327 = vadd.f32 %v1214, %v1318
  %v1328 = vadd.f32 %v1219, %v1318
  %v1329 = vadd.f32 %v1222, %v1318
  %v1330 = vadd.f32 %v1227, %v1318
  %v1331 = vadd.f32 %v1230, %v1318
  %v1332 = vadd.f32 %v1235, %v1318
  %v1333 = vadd.f32 %v1238, %v1318
  %v1334 = vadd.f32 %v1243, %v1318
  %v1335 = vadd.f32 %v1246, %v1318
  %v1336 = vpack.c.bf16 %v1321, %v1320
  %v1337 = vpack.c.bf16 %v1323, %v1322
  %v1338 = vpack.c.bf16 %v1325, %v1324
  %v1339 = vpack.c.bf16 %v1327, %v1326
  %v1340 = vpack.c.bf16 %v1329, %v1328
  %v1341 = vpack.c.bf16 %v1331, %v1330
  %v1342 = vpack.c.bf16 %v1333, %v1332
  %v1343 = vpack.c.bf16 %v1335, %v1334
  %v1344 = vld [vmem:[%s1] sm:$0xff]
  %v1345 = vld [vmem:[%s1 + $0x8] sm:$0xff]
  %v1346 = vld [vmem:[%s1 + $0x10] sm:$0xff]
  %v1347 = vld [vmem:[%s1 + $0x18] sm:$0xff]
  %v1348 = vld [vmem:[%s1 + $0x20] sm:$0xff]
  %v1349 = vld [vmem:[%s1 + $0x28] sm:$0xff]
  %v1350 = vld [vmem:[%s1 + $0x30] sm:$0xff]
  %v1351 = vld [vmem:[%s1 + $0x38] sm:$0xff]
  %v1352 = vld [vmem:[%s1 + $0x40] sm:$0xff]
  %v1353 = vld [vmem:[%s1 + $0x48] sm:$0xff]
  %v1354 = vld [vmem:[%s1 + $0x50] sm:$0xff]
  %v1355 = vld [vmem:[%s1 + $0x58] sm:$0xff]
  %v1356 = vld [vmem:[%s1 + $0x60] sm:$0xff]
  %v1357 = vld [vmem:[%s1 + $0x68] sm:$0xff]
  %v1358 = vld [vmem:[%s1 + $0x70] sm:$0xff]
  %v1359 = vld [vmem:[%s1 + $0x78] sm:$0xff]
  %vm1360 = vcmask 64512
  %v1362 = vsel %vm1360, %v1272, 0
  %v1365 = vsel %vm1360, %v1304, 0
  %1367 = vmatprep.subr.bf16.mxu0 0
  %1368 = vmatpush1.bf16.xpose.msra.mxu0 %v1365
  %1369 = vmatprep.subr.bf16.mxu0 0
  %1370 = vmatpush1.bf16.xpose.msra.mxu0 0
  %1371 = vmatprep.subr.bf16.mxu0 0
  %1372 = vmatpush1.bf16.xpose.msra.mxu0 0
  %1373 = vmatprep.subr.bf16.mxu0 0
  %1374 = vmatpush1.bf16.xpose.msra.mxu0 0
  %1375 = vmatprep.subr.bf16.mxu0 0
  %1376 = vmatpush1.bf16.xpose.msra.mxu0 0
  %1377 = vmatprep.subr.bf16.mxu0 0
  %1378 = vmatpush1.bf16.xpose.msra.mxu0 0
  %1379 = vmatprep.subr.bf16.mxu0 0
  %1380 = vmatpush1.bf16.xpose.msra.mxu0 0
  %1381 = vmatprep.subr.bf16.mxu0 0
  %1382 = vmatpush1.bf16.xpose.msra.mxu0 0
  %1383 = vmatprep.subr.bf16.mxu0 0
  %1384 = vmatpush1.bf16.xpose.msra.mxu0 0
  %1385 = vmatprep.subr.bf16.mxu0 0
  %1386 = vmatpush1.bf16.xpose.msra.mxu0 0
  %1387 = vmatprep.subr.bf16.mxu0 0
  %1388 = vmatpush1.bf16.xpose.msra.mxu0 0
  %1389 = vmatprep.subr.bf16.mxu0 0
  %1390 = vmatpush1.bf16.xpose.msra.mxu0 0
  %1391 = vmatprep.subr.bf16.mxu0 0
  %1392 = vmatpush1.bf16.xpose.msra.mxu0 0
  %1393 = vmatprep.subr.bf16.mxu0 0
  %1394 = vmatpush1.bf16.xpose.msra.mxu0 0
  %1395 = vmatprep.subr.bf16.mxu0 0
  %1396 = vmatpush1.bf16.xpose.msra.mxu0 0
  %1397 = vmatprep.subr.bf16.mxu0 0
  %1398 = vmatpush1.bf16.xpose.msra.mxu0 0
  %1399 = vmatprep.mubr.bf16.mxu0 0
  %1400 = vmatmul.mubr.bf16.gmra.mrb[0].mxu0 %v1362
  %v1401 = vpop.f32.mrb[0].mxu0
  %v1402 = vadd.f32 %v1344, %v1401
  %v1403 = vpop.f32.mrb[0].mxu0
  %v1404 = vpop.f32.mrb[0].mxu0
  %v1405 = vadd.f32 %v1345, %v1404
  %v1406 = vpop.f32.mrb[0].mxu0
  %1407 = vdwg.mxu0
  %v1409 = vsel %vm1360, %v1273, 0
  %v1412 = vsel %vm1360, %v1305, 0
  %1414 = vmatprep.subr.bf16.mxu0 0
  %1415 = vmatpush1.bf16.xpose.msra.mxu0 %v1412
  %1416 = vmatprep.subr.bf16.mxu0 0
  %1417 = vmatpush1.bf16.xpose.msra.mxu0 0
  %1418 = vmatprep.subr.bf16.mxu0 0
  %1419 = vmatpush1.bf16.xpose.msra.mxu0 0
  %1420 = vmatprep.subr.bf16.mxu0 0
  %1421 = vmatpush1.bf16.xpose.msra.mxu0 0
  %1422 = vmatprep.subr.bf16.mxu0 0
  %1423 = vmatpush1.bf16.xpose.msra.mxu0 0
  %1424 = vmatprep.subr.bf16.mxu0 0
  %1425 = vmatpush1.bf16.xpose.msra.mxu0 0
  %1426 = vmatprep.subr.bf16.mxu0 0
  %1427 = vmatpush1.bf16.xpose.msra.mxu0 0
  %1428 = vmatprep.subr.bf16.mxu0 0
  %1429 = vmatpush1.bf16.xpose.msra.mxu0 0
  %1430 = vmatprep.subr.bf16.mxu0 0
  %1431 = vmatpush1.bf16.xpose.msra.mxu0 0
  %1432 = vmatprep.subr.bf16.mxu0 0
  %1433 = vmatpush1.bf16.xpose.msra.mxu0 0
  %1434 = vmatprep.subr.bf16.mxu0 0
  %1435 = vmatpush1.bf16.xpose.msra.mxu0 0
  %1436 = vmatprep.subr.bf16.mxu0 0
  %1437 = vmatpush1.bf16.xpose.msra.mxu0 0
  %1438 = vmatprep.subr.bf16.mxu0 0
  %1439 = vmatpush1.bf16.xpose.msra.mxu0 0
  %1440 = vmatprep.subr.bf16.mxu0 0
  %1441 = vmatpush1.bf16.xpose.msra.mxu0 0
  %1442 = vmatprep.subr.bf16.mxu0 0
  %1443 = vmatpush1.bf16.xpose.msra.mxu0 0
  %1444 = vmatprep.subr.bf16.mxu0 0
  %1445 = vmatpush1.bf16.xpose.msra.mxu0 0
  %1446 = vmatprep.mubr.bf16.mxu0 0
  %1447 = vmatmul.mubr.bf16.gmra.mrb[0].mxu0 %v1409
  %v1448 = vpop.f32.mrb[0].mxu0
  %v1449 = vadd.f32 %v1346, %v1448
  %v1450 = vpop.f32.mrb[0].mxu0
  %v1451 = vpop.f32.mrb[0].mxu0
  %v1452 = vadd.f32 %v1347, %v1451
  %v1453 = vpop.f32.mrb[0].mxu0
  %1454 = vdwg.mxu0
  %v1456 = vsel %vm1360, %v1274, 0
  %v1459 = vsel %vm1360, %v1306, 0
  %1461 = vmatprep.subr.bf16.mxu0 0
  %1462 = vmatpush1.bf16.xpose.msra.mxu0 %v1459
  %1463 = vmatprep.subr.bf16.mxu0 0
  %1464 = vmatpush1.bf16.xpose.msra.mxu0 0
  %1465 = vmatprep.subr.bf16.mxu0 0
  %1466 = vmatpush1.bf16.xpose.msra.mxu0 0
  %1467 = vmatprep.subr.bf16.mxu0 0
  %1468 = vmatpush1.bf16.xpose.msra.mxu0 0
  %1469 = vmatprep.subr.bf16.mxu0 0
  %1470 = vmatpush1.bf16.xpose.msra.mxu0 0
  %1471 = vmatprep.subr.bf16.mxu0 0
  %1472 = vmatpush1.bf16.xpose.msra.mxu0 0
  %1473 = vmatprep.subr.bf16.mxu0 0
  %1474 = vmatpush1.bf16.xpose.msra.mxu0 0
  %1475 = vmatprep.subr.bf16.mxu0 0
  %1476 = vmatpush1.bf16.xpose.msra.mxu0 0
  %1477 = vmatprep.subr.bf16.mxu0 0
  %1478 = vmatpush1.bf16.xpose.msra.mxu0 0
  %1479 = vmatprep.subr.bf16.mxu0 0
  %1480 = vmatpush1.bf16.xpose.msra.mxu0 0
  %1481 = vmatprep.subr.bf16.mxu0 0
  %1482 = vmatpush1.bf16.xpose.msra.mxu0 0
  %1483 = vmatprep.subr.bf16.mxu0 0
  %1484 = vmatpush1.bf16.xpose.msra.mxu0 0
  %1485 = vmatprep.subr.bf16.mxu0 0
  %1486 = vmatpush1.bf16.xpose.msra.mxu0 0
  %1487 = vmatprep.subr.bf16.mxu0 0
  %1488 = vmatpush1.bf16.xpose.msra.mxu0 0
  %1489 = vmatprep.subr.bf16.mxu0 0
  %1490 = vmatpush1.bf16.xpose.msra.mxu0 0
  %1491 = vmatprep.subr.bf16.mxu0 0
  %1492 = vmatpush1.bf16.xpose.msra.mxu0 0
  %1493 = vmatprep.mubr.bf16.mxu0 0
  %1494 = vmatmul.mubr.bf16.gmra.mrb[0].mxu0 %v1456
  %v1495 = vpop.f32.mrb[0].mxu0
  %v1496 = vadd.f32 %v1348, %v1495
  %v1497 = vpop.f32.mrb[0].mxu0
  %v1498 = vpop.f32.mrb[0].mxu0
  %v1499 = vadd.f32 %v1349, %v1498
  %v1500 = vpop.f32.mrb[0].mxu0
  %1501 = vdwg.mxu0
  %v1503 = vsel %vm1360, %v1275, 0
  %v1506 = vsel %vm1360, %v1307, 0
  %1508 = vmatprep.subr.bf16.mxu0 0
  %1509 = vmatpush1.bf16.xpose.msra.mxu0 %v1506
  %1510 = vmatprep.subr.bf16.mxu0 0
  %1511 = vmatpush1.bf16.xpose.msra.mxu0 0
  %1512 = vmatprep.subr.bf16.mxu0 0
  %1513 = vmatpush1.bf16.xpose.msra.mxu0 0
  %1514 = vmatprep.subr.bf16.mxu0 0
  %1515 = vmatpush1.bf16.xpose.msra.mxu0 0
  %1516 = vmatprep.subr.bf16.mxu0 0
  %1517 = vmatpush1.bf16.xpose.msra.mxu0 0
  %1518 = vmatprep.subr.bf16.mxu0 0
  %1519 = vmatpush1.bf16.xpose.msra.mxu0 0
  %1520 = vmatprep.subr.bf16.mxu0 0
  %1521 = vmatpush1.bf16.xpose.msra.mxu0 0
  %1522 = vmatprep.subr.bf16.mxu0 0
  %1523 = vmatpush1.bf16.xpose.msra.mxu0 0
  %1524 = vmatprep.subr.bf16.mxu0 0
  %1525 = vmatpush1.bf16.xpose.msra.mxu0 0
  %1526 = vmatprep.subr.bf16.mxu0 0
  %1527 = vmatpush1.bf16.xpose.msra.mxu0 0
  %1528 = vmatprep.subr.bf16.mxu0 0
  %1529 = vmatpush1.bf16.xpose.msra.mxu0 0
  %1530 = vmatprep.subr.bf16.mxu0 0
  %1531 = vmatpush1.bf16.xpose.msra.mxu0 0
  %1532 = vmatprep.subr.bf16.mxu0 0
  %1533 = vmatpush1.bf16.xpose.msra.mxu0 0
  %1534 = vmatprep.subr.bf16.mxu0 0
  %1535 = vmatpush1.bf16.xpose.msra.mxu0 0
  %1536 = vmatprep.subr.bf16.mxu0 0
  %1537 = vmatpush1.bf16.xpose.msra.mxu0 0
  %1538 = vmatprep.subr.bf16.mxu0 0
  %1539 = vmatpush1.bf16.xpose.msra.mxu0 0
  %1540 = vmatprep.mubr.bf16.mxu0 0
  %1541 = vmatmul.mubr.bf16.gmra.mrb[0].mxu0 %v1503
  %v1542 = vpop.f32.mrb[0].mxu0
  %v1543 = vadd.f32 %v1350, %v1542
  %v1544 = vpop.f32.mrb[0].mxu0
  %v1545 = vpop.f32.mrb[0].mxu0
  %v1546 = vadd.f32 %v1351, %v1545
  %v1547 = vpop.f32.mrb[0].mxu0
  %1548 = vdwg.mxu0
  %v1550 = vsel %vm1360, %v1276, 0
  %v1553 = vsel %vm1360, %v1308, 0
  %1555 = vmatprep.subr.bf16.mxu0 0
  %1556 = vmatpush1.bf16.xpose.msra.mxu0 %v1553
  %1557 = vmatprep.subr.bf16.mxu0 0
  %1558 = vmatpush1.bf16.xpose.msra.mxu0 0
  %1559 = vmatprep.subr.bf16.mxu0 0
  %1560 = vmatpush1.bf16.xpose.msra.mxu0 0
  %1561 = vmatprep.subr.bf16.mxu0 0
  %1562 = vmatpush1.bf16.xpose.msra.mxu0 0
  %1563 = vmatprep.subr.bf16.mxu0 0
  %1564 = vmatpush1.bf16.xpose.msra.mxu0 0
  %1565 = vmatprep.subr.bf16.mxu0 0
  %1566 = vmatpush1.bf16.xpose.msra.mxu0 0
  %1567 = vmatprep.subr.bf16.mxu0 0
  %1568 = vmatpush1.bf16.xpose.msra.mxu0 0
  %1569 = vmatprep.subr.bf16.mxu0 0
  %1570 = vmatpush1.bf16.xpose.msra.mxu0 0
  %1571 = vmatprep.subr.bf16.mxu0 0
  %1572 = vmatpush1.bf16.xpose.msra.mxu0 0
  %1573 = vmatprep.subr.bf16.mxu0 0
  %1574 = vmatpush1.bf16.xpose.msra.mxu0 0
  %1575 = vmatprep.subr.bf16.mxu0 0
  %1576 = vmatpush1.bf16.xpose.msra.mxu0 0
  %1577 = vmatprep.subr.bf16.mxu0 0
  %1578 = vmatpush1.bf16.xpose.msra.mxu0 0
  %1579 = vmatprep.subr.bf16.mxu0 0
  %1580 = vmatpush1.bf16.xpose.msra.mxu0 0
  %1581 = vmatprep.subr.bf16.mxu0 0
  %1582 = vmatpush1.bf16.xpose.msra.mxu0 0
  %1583 = vmatprep.subr.bf16.mxu0 0
  %1584 = vmatpush1.bf16.xpose.msra.mxu0 0
  %1585 = vmatprep.subr.bf16.mxu0 0
  %1586 = vmatpush1.bf16.xpose.msra.mxu0 0
  %1587 = vmatprep.mubr.bf16.mxu0 0
  %1588 = vmatmul.mubr.bf16.gmra.mrb[0].mxu0 %v1550
  %v1589 = vpop.f32.mrb[0].mxu0
  %v1590 = vadd.f32 %v1352, %v1589
  %v1591 = vpop.f32.mrb[0].mxu0
  %v1592 = vpop.f32.mrb[0].mxu0
  %v1593 = vadd.f32 %v1353, %v1592
  %v1594 = vpop.f32.mrb[0].mxu0
  %1595 = vdwg.mxu0
  %v1597 = vsel %vm1360, %v1277, 0
  %v1600 = vsel %vm1360, %v1309, 0
  %1602 = vmatprep.subr.bf16.mxu0 0
  %1603 = vmatpush1.bf16.xpose.msra.mxu0 %v1600
  %1604 = vmatprep.subr.bf16.mxu0 0
  %1605 = vmatpush1.bf16.xpose.msra.mxu0 0
  %1606 = vmatprep.subr.bf16.mxu0 0
  %1607 = vmatpush1.bf16.xpose.msra.mxu0 0
  %1608 = vmatprep.subr.bf16.mxu0 0
  %1609 = vmatpush1.bf16.xpose.msra.mxu0 0
  %1610 = vmatprep.subr.bf16.mxu0 0
  %1611 = vmatpush1.bf16.xpose.msra.mxu0 0
  %1612 = vmatprep.subr.bf16.mxu0 0
  %1613 = vmatpush1.bf16.xpose.msra.mxu0 0
  %1614 = vmatprep.subr.bf16.mxu0 0
  %1615 = vmatpush1.bf16.xpose.msra.mxu0 0
  %1616 = vmatprep.subr.bf16.mxu0 0
  %1617 = vmatpush1.bf16.xpose.msra.mxu0 0
  %1618 = vmatprep.subr.bf16.mxu0 0
  %1619 = vmatpush1.bf16.xpose.msra.mxu0 0
  %1620 = vmatprep.subr.bf16.mxu0 0
  %1621 = vmatpush1.bf16.xpose.msra.mxu0 0
  %1622 = vmatprep.subr.bf16.mxu0 0
  %1623 = vmatpush1.bf16.xpose.msra.mxu0 0
  %1624 = vmatprep.subr.bf16.mxu0 0
  %1625 = vmatpush1.bf16.xpose.msra.mxu0 0
  %1626 = vmatprep.subr.bf16.mxu0 0
  %1627 = vmatpush1.bf16.xpose.msra.mxu0 0
  %1628 = vmatprep.subr.bf16.mxu0 0
  %1629 = vmatpush1.bf16.xpose.msra.mxu0 0
  %1630 = vmatprep.subr.bf16.mxu0 0
  %1631 = vmatpush1.bf16.xpose.msra.mxu0 0
  %1632 = vmatprep.subr.bf16.mxu0 0
  %1633 = vmatpush1.bf16.xpose.msra.mxu0 0
  %1634 = vmatprep.mubr.bf16.mxu0 0
  %1635 = vmatmul.mubr.bf16.gmra.mrb[0].mxu0 %v1597
  %v1636 = vpop.f32.mrb[0].mxu0
  %v1637 = vadd.f32 %v1354, %v1636
  %v1638 = vpop.f32.mrb[0].mxu0
  %v1639 = vpop.f32.mrb[0].mxu0
  %v1640 = vadd.f32 %v1355, %v1639
  %v1641 = vpop.f32.mrb[0].mxu0
  %1642 = vdwg.mxu0
  %v1644 = vsel %vm1360, %v1278, 0
  %v1647 = vsel %vm1360, %v1310, 0
  %1649 = vmatprep.subr.bf16.mxu0 0
  %1650 = vmatpush1.bf16.xpose.msra.mxu0 %v1647
  %1651 = vmatprep.subr.bf16.mxu0 0
  %1652 = vmatpush1.bf16.xpose.msra.mxu0 0
  %1653 = vmatprep.subr.bf16.mxu0 0
  %1654 = vmatpush1.bf16.xpose.msra.mxu0 0
  %1655 = vmatprep.subr.bf16.mxu0 0
  %1656 = vmatpush1.bf16.xpose.msra.mxu0 0
  %1657 = vmatprep.subr.bf16.mxu0 0
  %1658 = vmatpush1.bf16.xpose.msra.mxu0 0
  %1659 = vmatprep.subr.bf16.mxu0 0
  %1660 = vmatpush1.bf16.xpose.msra.mxu0 0
  %1661 = vmatprep.subr.bf16.mxu0 0
  %1662 = vmatpush1.bf16.xpose.msra.mxu0 0
  %1663 = vmatprep.subr.bf16.mxu0 0
  %1664 = vmatpush1.bf16.xpose.msra.mxu0 0
  %1665 = vmatprep.subr.bf16.mxu0 0
  %1666 = vmatpush1.bf16.xpose.msra.mxu0 0
  %1667 = vmatprep.subr.bf16.mxu0 0
  %1668 = vmatpush1.bf16.xpose.msra.mxu0 0
  %1669 = vmatprep.subr.bf16.mxu0 0
  %1670 = vmatpush1.bf16.xpose.msra.mxu0 0
  %1671 = vmatprep.subr.bf16.mxu0 0
  %1672 = vmatpush1.bf16.xpose.msra.mxu0 0
  %1673 = vmatprep.subr.bf16.mxu0 0
  %1674 = vmatpush1.bf16.xpose.msra.mxu0 0
  %1675 = vmatprep.subr.bf16.mxu0 0
  %1676 = vmatpush1.bf16.xpose.msra.mxu0 0
  %1677 = vmatprep.subr.bf16.mxu0 0
  %1678 = vmatpush1.bf16.xpose.msra.mxu0 0
  %1679 = vmatprep.subr.bf16.mxu0 0
  %1680 = vmatpush1.bf16.xpose.msra.mxu0 0
  %1681 = vmatprep.mubr.bf16.mxu0 0
  %1682 = vmatmul.mubr.bf16.gmra.mrb[0].mxu0 %v1644
  %v1683 = vpop.f32.mrb[0].mxu0
  %v1684 = vadd.f32 %v1356, %v1683
  %v1685 = vpop.f32.mrb[0].mxu0
  %v1686 = vpop.f32.mrb[0].mxu0
  %v1687 = vadd.f32 %v1357, %v1686
  %v1688 = vpop.f32.mrb[0].mxu0
  %1689 = vdwg.mxu0
  %v1691 = vsel %vm1360, %v1279, 0
  %v1694 = vsel %vm1360, %v1311, 0
  %1696 = vmatprep.subr.bf16.mxu0 0
  %1697 = vmatpush1.bf16.xpose.msra.mxu0 %v1694
  %1698 = vmatprep.subr.bf16.mxu0 0
  %1699 = vmatpush1.bf16.xpose.msra.mxu0 0
  %1700 = vmatprep.subr.bf16.mxu0 0
  %1701 = vmatpush1.bf16.xpose.msra.mxu0 0
  %1702 = vmatprep.subr.bf16.mxu0 0
  %1703 = vmatpush1.bf16.xpose.msra.mxu0 0
  %1704 = vmatprep.subr.bf16.mxu0 0
  %1705 = vmatpush1.bf16.xpose.msra.mxu0 0
  %1706 = vmatprep.subr.bf16.mxu0 0
  %1707 = vmatpush1.bf16.xpose.msra.mxu0 0
  %1708 = vmatprep.subr.bf16.mxu0 0
  %1709 = vmatpush1.bf16.xpose.msra.mxu0 0
  %1710 = vmatprep.subr.bf16.mxu0 0
  %1711 = vmatpush1.bf16.xpose.msra.mxu0 0
  %1712 = vmatprep.subr.bf16.mxu0 0
  %1713 = vmatpush1.bf16.xpose.msra.mxu0 0
  %1714 = vmatprep.subr.bf16.mxu0 0
  %1715 = vmatpush1.bf16.xpose.msra.mxu0 0
  %1716 = vmatprep.subr.bf16.mxu0 0
  %1717 = vmatpush1.bf16.xpose.msra.mxu0 0
  %1718 = vmatprep.subr.bf16.mxu0 0
  %1719 = vmatpush1.bf16.xpose.msra.mxu0 0
  %1720 = vmatprep.subr.bf16.mxu0 0
  %1721 = vmatpush1.bf16.xpose.msra.mxu0 0
  %1722 = vmatprep.subr.bf16.mxu0 0
  %1723 = vmatpush1.bf16.xpose.msra.mxu0 0
  %1724 = vmatprep.subr.bf16.mxu0 0
  %1725 = vmatpush1.bf16.xpose.msra.mxu0 0
  %1726 = vmatprep.subr.bf16.mxu0 0
  %1727 = vmatpush1.bf16.xpose.msra.mxu0 0
  %1728 = vmatprep.mubr.bf16.mxu0 0
  %1729 = vmatmul.mubr.bf16.gmra.mrb[0].mxu0 %v1691
  %v1730 = vpop.f32.mrb[0].mxu0
  %v1731 = vadd.f32 %v1358, %v1730
  %v1732 = vpop.f32.mrb[0].mxu0
  %v1733 = vpop.f32.mrb[0].mxu0
  %v1734 = vadd.f32 %v1359, %v1733
  %v1735 = vpop.f32.mrb[0].mxu0
  %1736 = vdwg.mxu0
  %vm1737 = vcmask 130048
  %v1738 = vsel %vm1737, %v1402, -inf
  %1739 = vmax.xlane.f32.xlu0 %v1738
  %v1740 = vpop.xlane.xlu0 %1739
  %v1741 = vsel %vm1737, %v1405, -inf
  %1742 = vmax.xlane.f32.xlu0 %v1741
  %v1743 = vpop.xlane.xlu0 %1742
  %v1744 = vsel %vm1737, %v1449, -inf
  %1745 = vmax.xlane.f32.xlu0 %v1744
  %v1746 = vpop.xlane.xlu0 %1745
  %v1747 = vsel %vm1737, %v1452, -inf
  %1748 = vmax.xlane.f32.xlu0 %v1747
  %v1749 = vpop.xlane.xlu0 %1748
  %v1750 = vsel %vm1737, %v1496, -inf
  %1751 = vmax.xlane.f32.xlu0 %v1750
  %v1752 = vpop.xlane.xlu0 %1751
  %v1753 = vsel %vm1737, %v1499, -inf
  %1754 = vmax.xlane.f32.xlu0 %v1753
  %v1755 = vpop.xlane.xlu0 %1754
  %v1756 = vsel %vm1737, %v1543, -inf
  %1757 = vmax.xlane.f32.xlu0 %v1756
  %v1758 = vpop.xlane.xlu0 %1757
  %v1759 = vsel %vm1737, %v1546, -inf
  %1760 = vmax.xlane.f32.xlu0 %v1759
  %v1761 = vpop.xlane.xlu0 %1760
  %v1762 = vsel %vm1737, %v1590, -inf
  %1763 = vmax.xlane.f32.xlu0 %v1762
  %v1764 = vpop.xlane.xlu0 %1763
  %v1765 = vsel %vm1737, %v1593, -inf
  %1766 = vmax.xlane.f32.xlu0 %v1765
  %v1767 = vpop.xlane.xlu0 %1766
  %v1768 = vsel %vm1737, %v1637, -inf
  %1769 = vmax.xlane.f32.xlu0 %v1768
  %v1770 = vpop.xlane.xlu0 %1769
  %v1771 = vsel %vm1737, %v1640, -inf
  %1772 = vmax.xlane.f32.xlu0 %v1771
  %v1773 = vpop.xlane.xlu0 %1772
  %v1774 = vsel %vm1737, %v1684, -inf
  %1775 = vmax.xlane.f32.xlu0 %v1774
  %v1776 = vpop.xlane.xlu0 %1775
  %v1777 = vsel %vm1737, %v1687, -inf
  %1778 = vmax.xlane.f32.xlu0 %v1777
  %v1779 = vpop.xlane.xlu0 %1778
  %v1780 = vsel %vm1737, %v1731, -inf
  %1781 = vmax.xlane.f32.xlu0 %v1780
  %v1782 = vpop.xlane.xlu0 %1781
  %v1783 = vsel %vm1737, %v1734, -inf
  %1784 = vmax.xlane.f32.xlu0 %v1783
  %v1785 = vpop.xlane.xlu0 %1784
  %v1786 = vsub.f32 %v1402, %v1740
  %v1787 = vsub.f32 %v1405, %v1743
  %v1788 = vsub.f32 %v1449, %v1746
  %v1789 = vsub.f32 %v1452, %v1749
  %v1790 = vsub.f32 %v1496, %v1752
  %v1791 = vsub.f32 %v1499, %v1755
  %v1792 = vsub.f32 %v1543, %v1758
  %v1793 = vsub.f32 %v1546, %v1761
  %v1794 = vsub.f32 %v1590, %v1764
  %v1795 = vsub.f32 %v1593, %v1767
  %v1796 = vsub.f32 %v1637, %v1770
  %v1797 = vsub.f32 %v1640, %v1773
  %v1798 = vsub.f32 %v1684, %v1776
  %v1799 = vsub.f32 %v1687, %v1779
  %v1800 = vsub.f32 %v1731, %v1782
  %v1801 = vsub.f32 %v1734, %v1785
  %v1802 = vmul.f32 %v1786, 1.442695
  %v1803 = vpow.pop %v1802
  %v1804 = vmul.f32 %v1787, 1.442695
  %v1805 = vpow.pop %v1804
  %v1806 = vmul.f32 %v1788, 1.442695
  %v1807 = vpow.pop %v1806
  %v1808 = vmul.f32 %v1789, 1.442695
  %v1809 = vpow.pop %v1808
  %v1810 = vmul.f32 %v1790, 1.442695
  %v1811 = vpow.pop %v1810
  %v1812 = vmul.f32 %v1791, 1.442695
  %v1813 = vpow.pop %v1812
  %v1814 = vmul.f32 %v1792, 1.442695
  %v1815 = vpow.pop %v1814
  %v1816 = vmul.f32 %v1793, 1.442695
  %v1817 = vpow.pop %v1816
  %v1818 = vmul.f32 %v1794, 1.442695
  %v1819 = vpow.pop %v1818
  %v1820 = vmul.f32 %v1795, 1.442695
  %v1821 = vpow.pop %v1820
  %v1822 = vmul.f32 %v1796, 1.442695
  %v1823 = vpow.pop %v1822
  %v1824 = vmul.f32 %v1797, 1.442695
  %v1825 = vpow.pop %v1824
  %v1826 = vmul.f32 %v1798, 1.442695
  %v1827 = vpow.pop %v1826
  %v1828 = vmul.f32 %v1799, 1.442695
  %v1829 = vpow.pop %v1828
  %v1830 = vmul.f32 %v1800, 1.442695
  %v1831 = vpow.pop %v1830
  %v1832 = vmul.f32 %v1801, 1.442695
  %v1833 = vpow.pop %v1832
  %v1834 = vsel %vm1737, %v1803, 0.0
  %1835 = vadd.xlane.f32.xlu0 %v1834
  %v1836 = vpop.xlane.xlu0 %1835
  %v1837 = vsel %vm1737, %v1805, 0.0
  %1838 = vadd.xlane.f32.xlu0 %v1837
  %v1839 = vpop.xlane.xlu0 %1838
  %v1840 = vsel %vm1737, %v1807, 0.0
  %1841 = vadd.xlane.f32.xlu0 %v1840
  %v1842 = vpop.xlane.xlu0 %1841
  %v1843 = vsel %vm1737, %v1809, 0.0
  %1844 = vadd.xlane.f32.xlu0 %v1843
  %v1845 = vpop.xlane.xlu0 %1844
  %v1846 = vsel %vm1737, %v1811, 0.0
  %1847 = vadd.xlane.f32.xlu0 %v1846
  %v1848 = vpop.xlane.xlu0 %1847
  %v1849 = vsel %vm1737, %v1813, 0.0
  %1850 = vadd.xlane.f32.xlu0 %v1849
  %v1851 = vpop.xlane.xlu0 %1850
  %v1852 = vsel %vm1737, %v1815, 0.0
  %1853 = vadd.xlane.f32.xlu0 %v1852
  %v1854 = vpop.xlane.xlu0 %1853
  %v1855 = vsel %vm1737, %v1817, 0.0
  %1856 = vadd.xlane.f32.xlu0 %v1855
  %v1857 = vpop.xlane.xlu0 %1856
  %v1858 = vsel %vm1737, %v1819, 0.0
  %1859 = vadd.xlane.f32.xlu0 %v1858
  %v1860 = vpop.xlane.xlu0 %1859
  %v1861 = vsel %vm1737, %v1821, 0.0
  %1862 = vadd.xlane.f32.xlu0 %v1861
  %v1863 = vpop.xlane.xlu0 %1862
  %v1864 = vsel %vm1737, %v1823, 0.0
  %1865 = vadd.xlane.f32.xlu0 %v1864
  %v1866 = vpop.xlane.xlu0 %1865
  %v1867 = vsel %vm1737, %v1825, 0.0
  %1868 = vadd.xlane.f32.xlu0 %v1867
  %v1869 = vpop.xlane.xlu0 %1868
  %v1870 = vsel %vm1737, %v1827, 0.0
  %1871 = vadd.xlane.f32.xlu0 %v1870
  %v1872 = vpop.xlane.xlu0 %1871
  %v1873 = vsel %vm1737, %v1829, 0.0
  %1874 = vadd.xlane.f32.xlu0 %v1873
  %v1875 = vpop.xlane.xlu0 %1874
  %v1876 = vsel %vm1737, %v1831, 0.0
  %1877 = vadd.xlane.f32.xlu0 %v1876
  %v1878 = vpop.xlane.xlu0 %1877
  %v1879 = vsel %vm1737, %v1833, 0.0
  %1880 = vadd.xlane.f32.xlu0 %v1879
  %v1881 = vpop.xlane.xlu0 %1880
  %v1882 = vrcp.pop %v1836
  %v1883 = vrcp.pop %v1839
  %v1884 = vrcp.pop %v1842
  %v1885 = vrcp.pop %v1845
  %v1886 = vrcp.pop %v1848
  %v1887 = vrcp.pop %v1851
  %v1888 = vrcp.pop %v1854
  %v1889 = vrcp.pop %v1857
  %v1890 = vrcp.pop %v1860
  %v1891 = vrcp.pop %v1863
  %v1892 = vrcp.pop %v1866
  %v1893 = vrcp.pop %v1869
  %v1894 = vrcp.pop %v1872
  %v1895 = vrcp.pop %v1875
  %v1896 = vrcp.pop %v1878
  %v1897 = vrcp.pop %v1881
  %v1898 = vmul.f32 %v1803, %v1882
  %v1899 = vmul.f32 %v1805, %v1883
  %v1900 = vmul.f32 %v1807, %v1884
  %v1901 = vmul.f32 %v1809, %v1885
  %v1902 = vmul.f32 %v1811, %v1886
  %v1903 = vmul.f32 %v1813, %v1887
  %v1904 = vmul.f32 %v1815, %v1888
  %v1905 = vmul.f32 %v1817, %v1889
  %v1906 = vmul.f32 %v1819, %v1890
  %v1907 = vmul.f32 %v1821, %v1891
  %v1908 = vmul.f32 %v1823, %v1892
  %v1909 = vmul.f32 %v1825, %v1893
  %v1910 = vmul.f32 %v1827, %v1894
  %v1911 = vmul.f32 %v1829, %v1895
  %v1912 = vmul.f32 %v1831, %v1896
  %v1913 = vmul.f32 %v1833, %v1897
  %v1914 = vpack.c.bf16 %v1899, %v1898
  %v1915 = vpack.c.bf16 %v1901, %v1900
  %v1916 = vpack.c.bf16 %v1903, %v1902
  %v1917 = vpack.c.bf16 %v1905, %v1904
  %v1918 = vpack.c.bf16 %v1907, %v1906
  %v1919 = vpack.c.bf16 %v1909, %v1908
  %v1920 = vpack.c.bf16 %v1911, %v1910
  %v1921 = vpack.c.bf16 %v1913, %v1912
  %v1923 = vsel %vm1737, %v1914, 0
  %1925 = vmatprep.subr.bf16.mxu0 0
  %1926 = vmatpush1.bf16.msra.mxu0 %v1336
  %1927 = vmatprep.subr.bf16.mxu0 0
  %1928 = vmatpush1.bf16.msra.mxu0 0
  %1929 = vmatprep.subr.bf16.mxu0 0
  %1930 = vmatpush1.bf16.msra.mxu0 0
  %1931 = vmatprep.subr.bf16.mxu0 0
  %1932 = vmatpush1.bf16.msra.mxu0 0
  %1933 = vmatprep.subr.bf16.mxu0 0
  %1934 = vmatpush1.bf16.msra.mxu0 0
  %1935 = vmatprep.subr.bf16.mxu0 0
  %1936 = vmatpush1.bf16.msra.mxu0 0
  %1937 = vmatprep.subr.bf16.mxu0 0
  %1938 = vmatpush1.bf16.msra.mxu0 0
  %1939 = vmatprep.subr.bf16.mxu0 0
  %1940 = vmatpush1.bf16.msra.mxu0 0
  %1941 = vmatprep.subr.bf16.mxu0 0
  %1942 = vmatpush1.bf16.msra.mxu0 0
  %1943 = vmatprep.subr.bf16.mxu0 0
  %1944 = vmatpush1.bf16.msra.mxu0 0
  %1945 = vmatprep.subr.bf16.mxu0 0
  %1946 = vmatpush1.bf16.msra.mxu0 0
  %1947 = vmatprep.subr.bf16.mxu0 0
  %1948 = vmatpush1.bf16.msra.mxu0 0
  %1949 = vmatprep.subr.bf16.mxu0 0
  %1950 = vmatpush1.bf16.msra.mxu0 0
  %1951 = vmatprep.subr.bf16.mxu0 0
  %1952 = vmatpush1.bf16.msra.mxu0 0
  %1953 = vmatprep.subr.bf16.mxu0 0
  %1954 = vmatpush1.bf16.msra.mxu0 0
  %1955 = vmatprep.subr.bf16.mxu0 0
  %1956 = vmatpush1.bf16.msra.mxu0 0
  %1957 = vmatprep.mubr.bf16.mxu0 0
  %1958 = vmatmul.mubr.bf16.gmra.mrb[0].mxu0 %v1923
  %v1959 = vpop.f32.mrb[0].mxu0
  %v1960 = vadd.f32 0.0, %v1959
  %v1961 = vpop.f32.mrb[0].mxu0
  %v1962 = vpop.f32.mrb[0].mxu0
  %v1963 = vadd.f32 0.0, %v1962
  %v1964 = vpop.f32.mrb[0].mxu0
  %1965 = vdwg.mxu0
  %v1967 = vsel %vm1737, %v1915, 0
  %1969 = vmatprep.subr.bf16.mxu0 0
  %1970 = vmatpush1.bf16.msra.mxu0 %v1337
  %1971 = vmatprep.subr.bf16.mxu0 0
  %1972 = vmatpush1.bf16.msra.mxu0 0
  %1973 = vmatprep.subr.bf16.mxu0 0
  %1974 = vmatpush1.bf16.msra.mxu0 0
  %1975 = vmatprep.subr.bf16.mxu0 0
  %1976 = vmatpush1.bf16.msra.mxu0 0
  %1977 = vmatprep.subr.bf16.mxu0 0
  %1978 = vmatpush1.bf16.msra.mxu0 0
  %1979 = vmatprep.subr.bf16.mxu0 0
  %1980 = vmatpush1.bf16.msra.mxu0 0
  %1981 = vmatprep.subr.bf16.mxu0 0
  %1982 = vmatpush1.bf16.msra.mxu0 0
  %1983 = vmatprep.subr.bf16.mxu0 0
  %1984 = vmatpush1.bf16.msra.mxu0 0
  %1985 = vmatprep.subr.bf16.mxu0 0
  %1986 = vmatpush1.bf16.msra.mxu0 0
  %1987 = vmatprep.subr.bf16.mxu0 0
  %1988 = vmatpush1.bf16.msra.mxu0 0
  %1989 = vmatprep.subr.bf16.mxu0 0
  %1990 = vmatpush1.bf16.msra.mxu0 0
  %1991 = vmatprep.subr.bf16.mxu0 0
  %1992 = vmatpush1.bf16.msra.mxu0 0
  %1993 = vmatprep.subr.bf16.mxu0 0
  %1994 = vmatpush1.bf16.msra.mxu0 0
  %1995 = vmatprep.subr.bf16.mxu0 0
  %1996 = vmatpush1.bf16.msra.mxu0 0
  %1997 = vmatprep.subr.bf16.mxu0 0
  %1998 = vmatpush1.bf16.msra.mxu0 0
  %1999 = vmatprep.subr.bf16.mxu0 0
  %2000 = vmatpush1.bf16.msra.mxu0 0
  %2001 = vmatprep.mubr.bf16.mxu0 0
  %2002 = vmatmul.mubr.bf16.gmra.mrb[0].mxu0 %v1967
  %v2003 = vpop.f32.mrb[0].mxu0
  %v2004 = vadd.f32 0.0, %v2003
  %v2005 = vpop.f32.mrb[0].mxu0
  %v2006 = vpop.f32.mrb[0].mxu0
  %v2007 = vadd.f32 0.0, %v2006
  %v2008 = vpop.f32.mrb[0].mxu0
  %2009 = vdwg.mxu0
  %v2011 = vsel %vm1737, %v1916, 0
  %2013 = vmatprep.subr.bf16.mxu0 0
  %2014 = vmatpush1.bf16.msra.mxu0 %v1338
  %2015 = vmatprep.subr.bf16.mxu0 0
  %2016 = vmatpush1.bf16.msra.mxu0 0
  %2017 = vmatprep.subr.bf16.mxu0 0
  %2018 = vmatpush1.bf16.msra.mxu0 0
  %2019 = vmatprep.subr.bf16.mxu0 0
  %2020 = vmatpush1.bf16.msra.mxu0 0
  %2021 = vmatprep.subr.bf16.mxu0 0
  %2022 = vmatpush1.bf16.msra.mxu0 0
  %2023 = vmatprep.subr.bf16.mxu0 0
  %2024 = vmatpush1.bf16.msra.mxu0 0
  %2025 = vmatprep.subr.bf16.mxu0 0
  %2026 = vmatpush1.bf16.msra.mxu0 0
  %2027 = vmatprep.subr.bf16.mxu0 0
  %2028 = vmatpush1.bf16.msra.mxu0 0
  %2029 = vmatprep.subr.bf16.mxu0 0
  %2030 = vmatpush1.bf16.msra.mxu0 0
  %2031 = vmatprep.subr.bf16.mxu0 0
  %2032 = vmatpush1.bf16.msra.mxu0 0
  %2033 = vmatprep.subr.bf16.mxu0 0
  %2034 = vmatpush1.bf16.msra.mxu0 0
  %2035 = vmatprep.subr.bf16.mxu0 0
  %2036 = vmatpush1.bf16.msra.mxu0 0
  %2037 = vmatprep.subr.bf16.mxu0 0
  %2038 = vmatpush1.bf16.msra.mxu0 0
  %2039 = vmatprep.subr.bf16.mxu0 0
  %2040 = vmatpush1.bf16.msra.mxu0 0
  %2041 = vmatprep.subr.bf16.mxu0 0
  %2042 = vmatpush1.bf16.msra.mxu0 0
  %2043 = vmatprep.subr.bf16.mxu0 0
  %2044 = vmatpush1.bf16.msra.mxu0 0
  %2045 = vmatprep.mubr.bf16.mxu0 0
  %2046 = vmatmul.mubr.bf16.gmra.mrb[0].mxu0 %v2011
  %v2047 = vpop.f32.mrb[0].mxu0
  %v2048 = vadd.f32 0.0, %v2047
  %v2049 = vpop.f32.mrb[0].mxu0
  %v2050 = vpop.f32.mrb[0].mxu0
  %v2051 = vadd.f32 0.0, %v2050
  %v2052 = vpop.f32.mrb[0].mxu0
  %2053 = vdwg.mxu0
  %v2055 = vsel %vm1737, %v1917, 0
  %2057 = vmatprep.subr.bf16.mxu0 0
  %2058 = vmatpush1.bf16.msra.mxu0 %v1339
  %2059 = vmatprep.subr.bf16.mxu0 0
  %2060 = vmatpush1.bf16.msra.mxu0 0
  %2061 = vmatprep.subr.bf16.mxu0 0
  %2062 = vmatpush1.bf16.msra.mxu0 0
  %2063 = vmatprep.subr.bf16.mxu0 0
  %2064 = vmatpush1.bf16.msra.mxu0 0
  %2065 = vmatprep.subr.bf16.mxu0 0
  %2066 = vmatpush1.bf16.msra.mxu0 0
  %2067 = vmatprep.subr.bf16.mxu0 0
  %2068 = vmatpush1.bf16.msra.mxu0 0
  %2069 = vmatprep.subr.bf16.mxu0 0
  %2070 = vmatpush1.bf16.msra.mxu0 0
  %2071 = vmatprep.subr.bf16.mxu0 0
  %2072 = vmatpush1.bf16.msra.mxu0 0
  %2073 = vmatprep.subr.bf16.mxu0 0
  %2074 = vmatpush1.bf16.msra.mxu0 0
  %2075 = vmatprep.subr.bf16.mxu0 0
  %2076 = vmatpush1.bf16.msra.mxu0 0
  %2077 = vmatprep.subr.bf16.mxu0 0
  %2078 = vmatpush1.bf16.msra.mxu0 0
  %2079 = vmatprep.subr.bf16.mxu0 0
  %2080 = vmatpush1.bf16.msra.mxu0 0
  %2081 = vmatprep.subr.bf16.mxu0 0
  %2082 = vmatpush1.bf16.msra.mxu0 0
  %2083 = vmatprep.subr.bf16.mxu0 0
  %2084 = vmatpush1.bf16.msra.mxu0 0
  %2085 = vmatprep.subr.bf16.mxu0 0
  %2086 = vmatpush1.bf16.msra.mxu0 0
  %2087 = vmatprep.subr.bf16.mxu0 0
  %2088 = vmatpush1.bf16.msra.mxu0 0
  %2089 = vmatprep.mubr.bf16.mxu0 0
  %2090 = vmatmul.mubr.bf16.gmra.mrb[0].mxu0 %v2055
  %v2091 = vpop.f32.mrb[0].mxu0
  %v2092 = vadd.f32 0.0, %v2091
  %v2093 = vpop.f32.mrb[0].mxu0
  %v2094 = vpop.f32.mrb[0].mxu0
  %v2095 = vadd.f32 0.0, %v2094
  %v2096 = vpop.f32.mrb[0].mxu0
  %2097 = vdwg.mxu0
  %v2099 = vsel %vm1737, %v1918, 0
  %2101 = vmatprep.subr.bf16.mxu0 0
  %2102 = vmatpush1.bf16.msra.mxu0 %v1340
  %2103 = vmatprep.subr.bf16.mxu0 0
  %2104 = vmatpush1.bf16.msra.mxu0 0
  %2105 = vmatprep.subr.bf16.mxu0 0
  %2106 = vmatpush1.bf16.msra.mxu0 0
  %2107 = vmatprep.subr.bf16.mxu0 0
  %2108 = vmatpush1.bf16.msra.mxu0 0
  %2109 = vmatprep.subr.bf16.mxu0 0
  %2110 = vmatpush1.bf16.msra.mxu0 0
  %2111 = vmatprep.subr.bf16.mxu0 0
  %2112 = vmatpush1.bf16.msra.mxu0 0
  %2113 = vmatprep.subr.bf16.mxu0 0
  %2114 = vmatpush1.bf16.msra.mxu0 0
  %2115 = vmatprep.subr.bf16.mxu0 0
  %2116 = vmatpush1.bf16.msra.mxu0 0
  %2117 = vmatprep.subr.bf16.mxu0 0
  %2118 = vmatpush1.bf16.msra.mxu0 0
  %2119 = vmatprep.subr.bf16.mxu0 0
  %2120 = vmatpush1.bf16.msra.mxu0 0
  %2121 = vmatprep.subr.bf16.mxu0 0
  %2122 = vmatpush1.bf16.msra.mxu0 0
  %2123 = vmatprep.subr.bf16.mxu0 0
  %2124 = vmatpush1.bf16.msra.mxu0 0
  %2125 = vmatprep.subr.bf16.mxu0 0
  %2126 = vmatpush1.bf16.msra.mxu0 0
  %2127 = vmatprep.subr.bf16.mxu0 0
  %2128 = vmatpush1.bf16.msra.mxu0 0
  %2129 = vmatprep.subr.bf16.mxu0 0
  %2130 = vmatpush1.bf16.msra.mxu0 0
  %2131 = vmatprep.subr.bf16.mxu0 0
  %2132 = vmatpush1.bf16.msra.mxu0 0
  %2133 = vmatprep.mubr.bf16.mxu0 0
  %2134 = vmatmul.mubr.bf16.gmra.mrb[0].mxu0 %v2099
  %v2135 = vpop.f32.mrb[0].mxu0
  %v2136 = vadd.f32 0.0, %v2135
  %v2137 = vpop.f32.mrb[0].mxu0
  %v2138 = vpop.f32.mrb[0].mxu0
  %v2139 = vadd.f32 0.0, %v2138
  %v2140 = vpop.f32.mrb[0].mxu0
  %2141 = vdwg.mxu0
  %v2143 = vsel %vm1737, %v1919, 0
  %2145 = vmatprep.subr.bf16.mxu0 0
  %2146 = vmatpush1.bf16.msra.mxu0 %v1341
  %2147 = vmatprep.subr.bf16.mxu0 0
  %2148 = vmatpush1.bf16.msra.mxu0 0
  %2149 = vmatprep.subr.bf16.mxu0 0
  %2150 = vmatpush1.bf16.msra.mxu0 0
  %2151 = vmatprep.subr.bf16.mxu0 0
  %2152 = vmatpush1.bf16.msra.mxu0 0
  %2153 = vmatprep.subr.bf16.mxu0 0
  %2154 = vmatpush1.bf16.msra.mxu0 0
  %2155 = vmatprep.subr.bf16.mxu0 0
  %2156 = vmatpush1.bf16.msra.mxu0 0
  %2157 = vmatprep.subr.bf16.mxu0 0
  %2158 = vmatpush1.bf16.msra.mxu0 0
  %2159 = vmatprep.subr.bf16.mxu0 0
  %2160 = vmatpush1.bf16.msra.mxu0 0
  %2161 = vmatprep.subr.bf16.mxu0 0
  %2162 = vmatpush1.bf16.msra.mxu0 0
  %2163 = vmatprep.subr.bf16.mxu0 0
  %2164 = vmatpush1.bf16.msra.mxu0 0
  %2165 = vmatprep.subr.bf16.mxu0 0
  %2166 = vmatpush1.bf16.msra.mxu0 0
  %2167 = vmatprep.subr.bf16.mxu0 0
  %2168 = vmatpush1.bf16.msra.mxu0 0
  %2169 = vmatprep.subr.bf16.mxu0 0
  %2170 = vmatpush1.bf16.msra.mxu0 0
  %2171 = vmatprep.subr.bf16.mxu0 0
  %2172 = vmatpush1.bf16.msra.mxu0 0
  %2173 = vmatprep.subr.bf16.mxu0 0
  %2174 = vmatpush1.bf16.msra.mxu0 0
  %2175 = vmatprep.subr.bf16.mxu0 0
  %2176 = vmatpush1.bf16.msra.mxu0 0
  %2177 = vmatprep.mubr.bf16.mxu0 0
  %2178 = vmatmul.mubr.bf16.gmra.mrb[0].mxu0 %v2143
  %v2179 = vpop.f32.mrb[0].mxu0
  %v2180 = vadd.f32 0.0, %v2179
  %v2181 = vpop.f32.mrb[0].mxu0
  %v2182 = vpop.f32.mrb[0].mxu0
  %v2183 = vadd.f32 0.0, %v2182
  %v2184 = vpop.f32.mrb[0].mxu0
  %2185 = vdwg.mxu0
  %v2187 = vsel %vm1737, %v1920, 0
  %2189 = vmatprep.subr.bf16.mxu0 0
  %2190 = vmatpush1.bf16.msra.mxu0 %v1342
  %2191 = vmatprep.subr.bf16.mxu0 0
  %2192 = vmatpush1.bf16.msra.mxu0 0
  %2193 = vmatprep.subr.bf16.mxu0 0
  %2194 = vmatpush1.bf16.msra.mxu0 0
  %2195 = vmatprep.subr.bf16.mxu0 0
  %2196 = vmatpush1.bf16.msra.mxu0 0
  %2197 = vmatprep.subr.bf16.mxu0 0
  %2198 = vmatpush1.bf16.msra.mxu0 0
  %2199 = vmatprep.subr.bf16.mxu0 0
  %2200 = vmatpush1.bf16.msra.mxu0 0
  %2201 = vmatprep.subr.bf16.mxu0 0
  %2202 = vmatpush1.bf16.msra.mxu0 0
  %2203 = vmatprep.subr.bf16.mxu0 0
  %2204 = vmatpush1.bf16.msra.mxu0 0
  %2205 = vmatprep.subr.bf16.mxu0 0
  %2206 = vmatpush1.bf16.msra.mxu0 0
  %2207 = vmatprep.subr.bf16.mxu0 0
  %2208 = vmatpush1.bf16.msra.mxu0 0
  %2209 = vmatprep.subr.bf16.mxu0 0
  %2210 = vmatpush1.bf16.msra.mxu0 0
  %2211 = vmatprep.subr.bf16.mxu0 0
  %2212 = vmatpush1.bf16.msra.mxu0 0
  %2213 = vmatprep.subr.bf16.mxu0 0
  %2214 = vmatpush1.bf16.msra.mxu0 0
  %2215 = vmatprep.subr.bf16.mxu0 0
  %2216 = vmatpush1.bf16.msra.mxu0 0
  %2217 = vmatprep.subr.bf16.mxu0 0
  %2218 = vmatpush1.bf16.msra.mxu0 0
  %2219 = vmatprep.subr.bf16.mxu0 0
  %2220 = vmatpush1.bf16.msra.mxu0 0
  %2221 = vmatprep.mubr.bf16.mxu0 0
  %2222 = vmatmul.mubr.bf16.gmra.mrb[0].mxu0 %v2187
  %v2223 = vpop.f32.mrb[0].mxu0
  %v2224 = vadd.f32 0.0, %v2223
  %v2225 = vpop.f32.mrb[0].mxu0
  %v2226 = vpop.f32.mrb[0].mxu0
  %v2227 = vadd.f32 0.0, %v2226
  %v2228 = vpop.f32.mrb[0].mxu0
  %2229 = vdwg.mxu0
  %v2231 = vsel %vm1737, %v1921, 0
  %2233 = vmatprep.subr.bf16.mxu0 0
  %2234 = vmatpush1.bf16.msra.mxu0 %v1343
  %2235 = vmatprep.subr.bf16.mxu0 0
  %2236 = vmatpush1.bf16.msra.mxu0 0
  %2237 = vmatprep.subr.bf16.mxu0 0
  %2238 = vmatpush1.bf16.msra.mxu0 0
  %2239 = vmatprep.subr.bf16.mxu0 0
  %2240 = vmatpush1.bf16.msra.mxu0 0
  %2241 = vmatprep.subr.bf16.mxu0 0
  %2242 = vmatpush1.bf16.msra.mxu0 0
  %2243 = vmatprep.subr.bf16.mxu0 0
  %2244 = vmatpush1.bf16.msra.mxu0 0
  %2245 = vmatprep.subr.bf16.mxu0 0
  %2246 = vmatpush1.bf16.msra.mxu0 0
  %2247 = vmatprep.subr.bf16.mxu0 0
  %2248 = vmatpush1.bf16.msra.mxu0 0
  %2249 = vmatprep.subr.bf16.mxu0 0
  %2250 = vmatpush1.bf16.msra.mxu0 0
  %2251 = vmatprep.subr.bf16.mxu0 0
  %2252 = vmatpush1.bf16.msra.mxu0 0
  %2253 = vmatprep.subr.bf16.mxu0 0
  %2254 = vmatpush1.bf16.msra.mxu0 0
  %2255 = vmatprep.subr.bf16.mxu0 0
  %2256 = vmatpush1.bf16.msra.mxu0 0
  %2257 = vmatprep.subr.bf16.mxu0 0
  %2258 = vmatpush1.bf16.msra.mxu0 0
  %2259 = vmatprep.subr.bf16.mxu0 0
  %2260 = vmatpush1.bf16.msra.mxu0 0
  %2261 = vmatprep.subr.bf16.mxu0 0
  %2262 = vmatpush1.bf16.msra.mxu0 0
  %2263 = vmatprep.subr.bf16.mxu0 0
  %2264 = vmatpush1.bf16.msra.mxu0 0
  %2265 = vmatprep.mubr.bf16.mxu0 0
  %2266 = vmatmul.mubr.bf16.gmra.mrb[0].mxu0 %v2231
  %v2267 = vpop.f32.mrb[0].mxu0
  %v2268 = vadd.f32 0.0, %v2267
  %v2269 = vpop.f32.mrb[0].mxu0
  %v2270 = vpop.f32.mrb[0].mxu0
  %v2271 = vadd.f32 0.0, %v2270
  %v2272 = vpop.f32.mrb[0].mxu0
  %2273 = vdwg.mxu0
  %2275 = vrot.lane.b32.xlu0 %v1272, 120
  %v2276 = vpop.permute.xlu0 %2275
  %2278 = vrot.lane.b32.xlu0 %v1304, 120
  %v2279 = vpop.permute.xlu0 %2278
  %v2281 = vsel %vm1360, %v2276, 0
  %v2284 = vsel %vm1360, %v2279, 0
  %2286 = vmatprep.subr.bf16.mxu0 0
  %2287 = vmatpush1.bf16.xpose.msra.mxu0 %v2284
  %2288 = vmatprep.subr.bf16.mxu0 0
  %2289 = vmatpush1.bf16.xpose.msra.mxu0 0
  %2290 = vmatprep.subr.bf16.mxu0 0
  %2291 = vmatpush1.bf16.xpose.msra.mxu0 0
  %2292 = vmatprep.subr.bf16.mxu0 0
  %2293 = vmatpush1.bf16.xpose.msra.mxu0 0
  %2294 = vmatprep.subr.bf16.mxu0 0
  %2295 = vmatpush1.bf16.xpose.msra.mxu0 0
  %2296 = vmatprep.subr.bf16.mxu0 0
  %2297 = vmatpush1.bf16.xpose.msra.mxu0 0
  %2298 = vmatprep.subr.bf16.mxu0 0
  %2299 = vmatpush1.bf16.xpose.msra.mxu0 0
  %2300 = vmatprep.subr.bf16.mxu0 0
  %2301 = vmatpush1.bf16.xpose.msra.mxu0 0
  %2302 = vmatprep.subr.bf16.mxu0 0
  %2303 = vmatpush1.bf16.xpose.msra.mxu0 0
  %2304 = vmatprep.subr.bf16.mxu0 0
  %2305 = vmatpush1.bf16.xpose.msra.mxu0 0
  %2306 = vmatprep.subr.bf16.mxu0 0
  %2307 = vmatpush1.bf16.xpose.msra.mxu0 0
  %2308 = vmatprep.subr.bf16.mxu0 0
  %2309 = vmatpush1.bf16.xpose.msra.mxu0 0
  %2310 = vmatprep.subr.bf16.mxu0 0
  %2311 = vmatpush1.bf16.xpose.msra.mxu0 0
  %2312 = vmatprep.subr.bf16.mxu0 0
  %2313 = vmatpush1.bf16.xpose.msra.mxu0 0
  %2314 = vmatprep.subr.bf16.mxu0 0
  %2315 = vmatpush1.bf16.xpose.msra.mxu0 0
  %2316 = vmatprep.subr.bf16.mxu0 0
  %2317 = vmatpush1.bf16.xpose.msra.mxu0 0
  %2318 = vmatprep.mubr.bf16.mxu0 0
  %2319 = vmatmul.mubr.bf16.gmra.mrb[0].mxu0 %v2281
  %v2320 = vpop.f32.mrb[0].mxu0
  %v2321 = vadd.f32 %v1344, %v2320
  %v2322 = vpop.f32.mrb[0].mxu0
  %v2323 = vpop.f32.mrb[0].mxu0
  %v2324 = vadd.f32 %v1345, %v2323
  %v2325 = vpop.f32.mrb[0].mxu0
  %2326 = vdwg.mxu0
  %2328 = vrot.lane.b32.xlu0 %v1273, 120
  %v2329 = vpop.permute.xlu0 %2328
  %2331 = vrot.lane.b32.xlu0 %v1305, 120
  %v2332 = vpop.permute.xlu0 %2331
  %v2334 = vsel %vm1360, %v2329, 0
  %v2337 = vsel %vm1360, %v2332, 0
  %2339 = vmatprep.subr.bf16.mxu0 0
  %2340 = vmatpush1.bf16.xpose.msra.mxu0 %v2337
  %2341 = vmatprep.subr.bf16.mxu0 0
  %2342 = vmatpush1.bf16.xpose.msra.mxu0 0
  %2343 = vmatprep.subr.bf16.mxu0 0
  %2344 = vmatpush1.bf16.xpose.msra.mxu0 0
  %2345 = vmatprep.subr.bf16.mxu0 0
  %2346 = vmatpush1.bf16.xpose.msra.mxu0 0
  %2347 = vmatprep.subr.bf16.mxu0 0
  %2348 = vmatpush1.bf16.xpose.msra.mxu0 0
  %2349 = vmatprep.subr.bf16.mxu0 0
  %2350 = vmatpush1.bf16.xpose.msra.mxu0 0
  %2351 = vmatprep.subr.bf16.mxu0 0
  %2352 = vmatpush1.bf16.xpose.msra.mxu0 0
  %2353 = vmatprep.subr.bf16.mxu0 0
  %2354 = vmatpush1.bf16.xpose.msra.mxu0 0
  %2355 = vmatprep.subr.bf16.mxu0 0
  %2356 = vmatpush1.bf16.xpose.msra.mxu0 0
  %2357 = vmatprep.subr.bf16.mxu0 0
  %2358 = vmatpush1.bf16.xpose.msra.mxu0 0
  %2359 = vmatprep.subr.bf16.mxu0 0
  %2360 = vmatpush1.bf16.xpose.msra.mxu0 0
  %2361 = vmatprep.subr.bf16.mxu0 0
  %2362 = vmatpush1.bf16.xpose.msra.mxu0 0
  %2363 = vmatprep.subr.bf16.mxu0 0
  %2364 = vmatpush1.bf16.xpose.msra.mxu0 0
  %2365 = vmatprep.subr.bf16.mxu0 0
  %2366 = vmatpush1.bf16.xpose.msra.mxu0 0
  %2367 = vmatprep.subr.bf16.mxu0 0
  %2368 = vmatpush1.bf16.xpose.msra.mxu0 0
  %2369 = vmatprep.subr.bf16.mxu0 0
  %2370 = vmatpush1.bf16.xpose.msra.mxu0 0
  %2371 = vmatprep.mubr.bf16.mxu0 0
  %2372 = vmatmul.mubr.bf16.gmra.mrb[0].mxu0 %v2334
  %v2373 = vpop.f32.mrb[0].mxu0
  %v2374 = vadd.f32 %v1346, %v2373
  %v2375 = vpop.f32.mrb[0].mxu0
  %v2376 = vpop.f32.mrb[0].mxu0
  %v2377 = vadd.f32 %v1347, %v2376
  %v2378 = vpop.f32.mrb[0].mxu0
  %2379 = vdwg.mxu0
  %2381 = vrot.lane.b32.xlu0 %v1274, 120
  %v2382 = vpop.permute.xlu0 %2381
  %2384 = vrot.lane.b32.xlu0 %v1306, 120
  %v2385 = vpop.permute.xlu0 %2384
  %v2387 = vsel %vm1360, %v2382, 0
  %v2390 = vsel %vm1360, %v2385, 0
  %2392 = vmatprep.subr.bf16.mxu0 0
  %2393 = vmatpush1.bf16.xpose.msra.mxu0 %v2390
  %2394 = vmatprep.subr.bf16.mxu0 0
  %2395 = vmatpush1.bf16.xpose.msra.mxu0 0
  %2396 = vmatprep.subr.bf16.mxu0 0
  %2397 = vmatpush1.bf16.xpose.msra.mxu0 0
  %2398 = vmatprep.subr.bf16.mxu0 0
  %2399 = vmatpush1.bf16.xpose.msra.mxu0 0
  %2400 = vmatprep.subr.bf16.mxu0 0
  %2401 = vmatpush1.bf16.xpose.msra.mxu0 0
  %2402 = vmatprep.subr.bf16.mxu0 0
  %2403 = vmatpush1.bf16.xpose.msra.mxu0 0
  %2404 = vmatprep.subr.bf16.mxu0 0
  %2405 = vmatpush1.bf16.xpose.msra.mxu0 0
  %2406 = vmatprep.subr.bf16.mxu0 0
  %2407 = vmatpush1.bf16.xpose.msra.mxu0 0
  %2408 = vmatprep.subr.bf16.mxu0 0
  %2409 = vmatpush1.bf16.xpose.msra.mxu0 0
  %2410 = vmatprep.subr.bf16.mxu0 0
  %2411 = vmatpush1.bf16.xpose.msra.mxu0 0
  %2412 = vmatprep.subr.bf16.mxu0 0
  %2413 = vmatpush1.bf16.xpose.msra.mxu0 0
  %2414 = vmatprep.subr.bf16.mxu0 0
  %2415 = vmatpush1.bf16.xpose.msra.mxu0 0
  %2416 = vmatprep.subr.bf16.mxu0 0
  %2417 = vmatpush1.bf16.xpose.msra.mxu0 0
  %2418 = vmatprep.subr.bf16.mxu0 0
  %2419 = vmatpush1.bf16.xpose.msra.mxu0 0
  %2420 = vmatprep.subr.bf16.mxu0 0
  %2421 = vmatpush1.bf16.xpose.msra.mxu0 0
  %2422 = vmatprep.subr.bf16.mxu0 0
  %2423 = vmatpush1.bf16.xpose.msra.mxu0 0
  %2424 = vmatprep.mubr.bf16.mxu0 0
  %2425 = vmatmul.mubr.bf16.gmra.mrb[0].mxu0 %v2387
  %v2426 = vpop.f32.mrb[0].mxu0
  %v2427 = vadd.f32 %v1348, %v2426
  %v2428 = vpop.f32.mrb[0].mxu0
  %v2429 = vpop.f32.mrb[0].mxu0
  %v2430 = vadd.f32 %v1349, %v2429
  %v2431 = vpop.f32.mrb[0].mxu0
  %2432 = vdwg.mxu0
  %2434 = vrot.lane.b32.xlu0 %v1275, 120
  %v2435 = vpop.permute.xlu0 %2434
  %2437 = vrot.lane.b32.xlu0 %v1307, 120
  %v2438 = vpop.permute.xlu0 %2437
  %v2440 = vsel %vm1360, %v2435, 0
  %v2443 = vsel %vm1360, %v2438, 0
  %2445 = vmatprep.subr.bf16.mxu0 0
  %2446 = vmatpush1.bf16.xpose.msra.mxu0 %v2443
  %2447 = vmatprep.subr.bf16.mxu0 0
  %2448 = vmatpush1.bf16.xpose.msra.mxu0 0
  %2449 = vmatprep.subr.bf16.mxu0 0
  %2450 = vmatpush1.bf16.xpose.msra.mxu0 0
  %2451 = vmatprep.subr.bf16.mxu0 0
  %2452 = vmatpush1.bf16.xpose.msra.mxu0 0
  %2453 = vmatprep.subr.bf16.mxu0 0
  %2454 = vmatpush1.bf16.xpose.msra.mxu0 0
  %2455 = vmatprep.subr.bf16.mxu0 0
  %2456 = vmatpush1.bf16.xpose.msra.mxu0 0
  %2457 = vmatprep.subr.bf16.mxu0 0
  %2458 = vmatpush1.bf16.xpose.msra.mxu0 0
  %2459 = vmatprep.subr.bf16.mxu0 0
  %2460 = vmatpush1.bf16.xpose.msra.mxu0 0
  %2461 = vmatprep.subr.bf16.mxu0 0
  %2462 = vmatpush1.bf16.xpose.msra.mxu0 0
  %2463 = vmatprep.subr.bf16.mxu0 0
  %2464 = vmatpush1.bf16.xpose.msra.mxu0 0
  %2465 = vmatprep.subr.bf16.mxu0 0
  %2466 = vmatpush1.bf16.xpose.msra.mxu0 0
  %2467 = vmatprep.subr.bf16.mxu0 0
  %2468 = vmatpush1.bf16.xpose.msra.mxu0 0
  %2469 = vmatprep.subr.bf16.mxu0 0
  %2470 = vmatpush1.bf16.xpose.msra.mxu0 0
  %2471 = vmatprep.subr.bf16.mxu0 0
  %2472 = vmatpush1.bf16.xpose.msra.mxu0 0
  %2473 = vmatprep.subr.bf16.mxu0 0
  %2474 = vmatpush1.bf16.xpose.msra.mxu0 0
  %2475 = vmatprep.subr.bf16.mxu0 0
  %2476 = vmatpush1.bf16.xpose.msra.mxu0 0
  %2477 = vmatprep.mubr.bf16.mxu0 0
  %2478 = vmatmul.mubr.bf16.gmra.mrb[0].mxu0 %v2440
  %v2479 = vpop.f32.mrb[0].mxu0
  %v2480 = vadd.f32 %v1350, %v2479
  %v2481 = vpop.f32.mrb[0].mxu0
  %v2482 = vpop.f32.mrb[0].mxu0
  %v2483 = vadd.f32 %v1351, %v2482
  %v2484 = vpop.f32.mrb[0].mxu0
  %2485 = vdwg.mxu0
  %2487 = vrot.lane.b32.xlu0 %v1276, 120
  %v2488 = vpop.permute.xlu0 %2487
  %2490 = vrot.lane.b32.xlu0 %v1308, 120
  %v2491 = vpop.permute.xlu0 %2490
  %v2493 = vsel %vm1360, %v2488, 0
  %v2496 = vsel %vm1360, %v2491, 0
  %2498 = vmatprep.subr.bf16.mxu0 0
  %2499 = vmatpush1.bf16.xpose.msra.mxu0 %v2496
  %2500 = vmatprep.subr.bf16.mxu0 0
  %2501 = vmatpush1.bf16.xpose.msra.mxu0 0
  %2502 = vmatprep.subr.bf16.mxu0 0
  %2503 = vmatpush1.bf16.xpose.msra.mxu0 0
  %2504 = vmatprep.subr.bf16.mxu0 0
  %2505 = vmatpush1.bf16.xpose.msra.mxu0 0
  %2506 = vmatprep.subr.bf16.mxu0 0
  %2507 = vmatpush1.bf16.xpose.msra.mxu0 0
  %2508 = vmatprep.subr.bf16.mxu0 0
  %2509 = vmatpush1.bf16.xpose.msra.mxu0 0
  %2510 = vmatprep.subr.bf16.mxu0 0
  %2511 = vmatpush1.bf16.xpose.msra.mxu0 0
  %2512 = vmatprep.subr.bf16.mxu0 0
  %2513 = vmatpush1.bf16.xpose.msra.mxu0 0
  %2514 = vmatprep.subr.bf16.mxu0 0
  %2515 = vmatpush1.bf16.xpose.msra.mxu0 0
  %2516 = vmatprep.subr.bf16.mxu0 0
  %2517 = vmatpush1.bf16.xpose.msra.mxu0 0
  %2518 = vmatprep.subr.bf16.mxu0 0
  %2519 = vmatpush1.bf16.xpose.msra.mxu0 0
  %2520 = vmatprep.subr.bf16.mxu0 0
  %2521 = vmatpush1.bf16.xpose.msra.mxu0 0
  %2522 = vmatprep.subr.bf16.mxu0 0
  %2523 = vmatpush1.bf16.xpose.msra.mxu0 0
  %2524 = vmatprep.subr.bf16.mxu0 0
  %2525 = vmatpush1.bf16.xpose.msra.mxu0 0
  %2526 = vmatprep.subr.bf16.mxu0 0
  %2527 = vmatpush1.bf16.xpose.msra.mxu0 0
  %2528 = vmatprep.subr.bf16.mxu0 0
  %2529 = vmatpush1.bf16.xpose.msra.mxu0 0
  %2530 = vmatprep.mubr.bf16.mxu0 0
  %2531 = vmatmul.mubr.bf16.gmra.mrb[0].mxu0 %v2493
  %v2532 = vpop.f32.mrb[0].mxu0
  %v2533 = vadd.f32 %v1352, %v2532
  %v2534 = vpop.f32.mrb[0].mxu0
  %v2535 = vpop.f32.mrb[0].mxu0
  %v2536 = vadd.f32 %v1353, %v2535
  %v2537 = vpop.f32.mrb[0].mxu0
  %2538 = vdwg.mxu0
  %2540 = vrot.lane.b32.xlu0 %v1277, 120
  %v2541 = vpop.permute.xlu0 %2540
  %2543 = vrot.lane.b32.xlu0 %v1309, 120
  %v2544 = vpop.permute.xlu0 %2543
  %v2546 = vsel %vm1360, %v2541, 0
  %v2549 = vsel %vm1360, %v2544, 0
  %2551 = vmatprep.subr.bf16.mxu0 0
  %2552 = vmatpush1.bf16.xpose.msra.mxu0 %v2549
  %2553 = vmatprep.subr.bf16.mxu0 0
  %2554 = vmatpush1.bf16.xpose.msra.mxu0 0
  %2555 = vmatprep.subr.bf16.mxu0 0
  %2556 = vmatpush1.bf16.xpose.msra.mxu0 0
  %2557 = vmatprep.subr.bf16.mxu0 0
  %2558 = vmatpush1.bf16.xpose.msra.mxu0 0
  %2559 = vmatprep.subr.bf16.mxu0 0
  %2560 = vmatpush1.bf16.xpose.msra.mxu0 0
  %2561 = vmatprep.subr.bf16.mxu0 0
  %2562 = vmatpush1.bf16.xpose.msra.mxu0 0
  %2563 = vmatprep.subr.bf16.mxu0 0
  %2564 = vmatpush1.bf16.xpose.msra.mxu0 0
  %2565 = vmatprep.subr.bf16.mxu0 0
  %2566 = vmatpush1.bf16.xpose.msra.mxu0 0
  %2567 = vmatprep.subr.bf16.mxu0 0
  %2568 = vmatpush1.bf16.xpose.msra.mxu0 0
  %2569 = vmatprep.subr.bf16.mxu0 0
  %2570 = vmatpush1.bf16.xpose.msra.mxu0 0
  %2571 = vmatprep.subr.bf16.mxu0 0
  %2572 = vmatpush1.bf16.xpose.msra.mxu0 0
  %2573 = vmatprep.subr.bf16.mxu0 0
  %2574 = vmatpush1.bf16.xpose.msra.mxu0 0
  %2575 = vmatprep.subr.bf16.mxu0 0
  %2576 = vmatpush1.bf16.xpose.msra.mxu0 0
  %2577 = vmatprep.subr.bf16.mxu0 0
  %2578 = vmatpush1.bf16.xpose.msra.mxu0 0
  %2579 = vmatprep.subr.bf16.mxu0 0
  %2580 = vmatpush1.bf16.xpose.msra.mxu0 0
  %2581 = vmatprep.subr.bf16.mxu0 0
  %2582 = vmatpush1.bf16.xpose.msra.mxu0 0
  %2583 = vmatprep.mubr.bf16.mxu0 0
  %2584 = vmatmul.mubr.bf16.gmra.mrb[0].mxu0 %v2546
  %v2585 = vpop.f32.mrb[0].mxu0
  %v2586 = vadd.f32 %v1354, %v2585
  %v2587 = vpop.f32.mrb[0].mxu0
  %v2588 = vpop.f32.mrb[0].mxu0
  %v2589 = vadd.f32 %v1355, %v2588
  %v2590 = vpop.f32.mrb[0].mxu0
  %2591 = vdwg.mxu0
  %2593 = vrot.lane.b32.xlu0 %v1278, 120
  %v2594 = vpop.permute.xlu0 %2593
  %2596 = vrot.lane.b32.xlu0 %v1310, 120
  %v2597 = vpop.permute.xlu0 %2596
  %v2599 = vsel %vm1360, %v2594, 0
  %v2602 = vsel %vm1360, %v2597, 0
  %2604 = vmatprep.subr.bf16.mxu0 0
  %2605 = vmatpush1.bf16.xpose.msra.mxu0 %v2602
  %2606 = vmatprep.subr.bf16.mxu0 0
  %2607 = vmatpush1.bf16.xpose.msra.mxu0 0
  %2608 = vmatprep.subr.bf16.mxu0 0
  %2609 = vmatpush1.bf16.xpose.msra.mxu0 0
  %2610 = vmatprep.subr.bf16.mxu0 0
  %2611 = vmatpush1.bf16.xpose.msra.mxu0 0
  %2612 = vmatprep.subr.bf16.mxu0 0
  %2613 = vmatpush1.bf16.xpose.msra.mxu0 0
  %2614 = vmatprep.subr.bf16.mxu0 0
  %2615 = vmatpush1.bf16.xpose.msra.mxu0 0
  %2616 = vmatprep.subr.bf16.mxu0 0
  %2617 = vmatpush1.bf16.xpose.msra.mxu0 0
  %2618 = vmatprep.subr.bf16.mxu0 0
  %2619 = vmatpush1.bf16.xpose.msra.mxu0 0
  %2620 = vmatprep.subr.bf16.mxu0 0
  %2621 = vmatpush1.bf16.xpose.msra.mxu0 0
  %2622 = vmatprep.subr.bf16.mxu0 0
  %2623 = vmatpush1.bf16.xpose.msra.mxu0 0
  %2624 = vmatprep.subr.bf16.mxu0 0
  %2625 = vmatpush1.bf16.xpose.msra.mxu0 0
  %2626 = vmatprep.subr.bf16.mxu0 0
  %2627 = vmatpush1.bf16.xpose.msra.mxu0 0
  %2628 = vmatprep.subr.bf16.mxu0 0
  %2629 = vmatpush1.bf16.xpose.msra.mxu0 0
  %2630 = vmatprep.subr.bf16.mxu0 0
  %2631 = vmatpush1.bf16.xpose.msra.mxu0 0
  %2632 = vmatprep.subr.bf16.mxu0 0
  %2633 = vmatpush1.bf16.xpose.msra.mxu0 0
  %2634 = vmatprep.subr.bf16.mxu0 0
  %2635 = vmatpush1.bf16.xpose.msra.mxu0 0
  %2636 = vmatprep.mubr.bf16.mxu0 0
  %2637 = vmatmul.mubr.bf16.gmra.mrb[0].mxu0 %v2599
  %v2638 = vpop.f32.mrb[0].mxu0
  %v2639 = vadd.f32 %v1356, %v2638
  %v2640 = vpop.f32.mrb[0].mxu0
  %v2641 = vpop.f32.mrb[0].mxu0
  %v2642 = vadd.f32 %v1357, %v2641
  %v2643 = vpop.f32.mrb[0].mxu0
  %2644 = vdwg.mxu0
  %2646 = vrot.lane.b32.xlu0 %v1279, 120
  %v2647 = vpop.permute.xlu0 %2646
  %2649 = vrot.lane.b32.xlu0 %v1311, 120
  %v2650 = vpop.permute.xlu0 %2649
  %v2652 = vsel %vm1360, %v2647, 0
  %v2655 = vsel %vm1360, %v2650, 0
  %2657 = vmatprep.subr.bf16.mxu0 0
  %2658 = vmatpush1.bf16.xpose.msra.mxu0 %v2655
  %2659 = vmatprep.subr.bf16.mxu0 0
  %2660 = vmatpush1.bf16.xpose.msra.mxu0 0
  %2661 = vmatprep.subr.bf16.mxu0 0
  %2662 = vmatpush1.bf16.xpose.msra.mxu0 0
  %2663 = vmatprep.subr.bf16.mxu0 0
  %2664 = vmatpush1.bf16.xpose.msra.mxu0 0
  %2665 = vmatprep.subr.bf16.mxu0 0
  %2666 = vmatpush1.bf16.xpose.msra.mxu0 0
  %2667 = vmatprep.subr.bf16.mxu0 0
  %2668 = vmatpush1.bf16.xpose.msra.mxu0 0
  %2669 = vmatprep.subr.bf16.mxu0 0
  %2670 = vmatpush1.bf16.xpose.msra.mxu0 0
  %2671 = vmatprep.subr.bf16.mxu0 0
  %2672 = vmatpush1.bf16.xpose.msra.mxu0 0
  %2673 = vmatprep.subr.bf16.mxu0 0
  %2674 = vmatpush1.bf16.xpose.msra.mxu0 0
  %2675 = vmatprep.subr.bf16.mxu0 0
  %2676 = vmatpush1.bf16.xpose.msra.mxu0 0
  %2677 = vmatprep.subr.bf16.mxu0 0
  %2678 = vmatpush1.bf16.xpose.msra.mxu0 0
  %2679 = vmatprep.subr.bf16.mxu0 0
  %2680 = vmatpush1.bf16.xpose.msra.mxu0 0
  %2681 = vmatprep.subr.bf16.mxu0 0
  %2682 = vmatpush1.bf16.xpose.msra.mxu0 0
  %2683 = vmatprep.subr.bf16.mxu0 0
  %2684 = vmatpush1.bf16.xpose.msra.mxu0 0
  %2685 = vmatprep.subr.bf16.mxu0 0
  %2686 = vmatpush1.bf16.xpose.msra.mxu0 0
  %2687 = vmatprep.subr.bf16.mxu0 0
  %2688 = vmatpush1.bf16.xpose.msra.mxu0 0
  %2689 = vmatprep.mubr.bf16.mxu0 0
  %2690 = vmatmul.mubr.bf16.gmra.mrb[0].mxu0 %v2652
  %v2691 = vpop.f32.mrb[0].mxu0
  %v2692 = vadd.f32 %v1358, %v2691
  %v2693 = vpop.f32.mrb[0].mxu0
  %v2694 = vpop.f32.mrb[0].mxu0
  %v2695 = vadd.f32 %v1359, %v2694
  %v2696 = vpop.f32.mrb[0].mxu0
  %2697 = vdwg.mxu0
  %v2698 = vsel %vm1737, %v2321, -inf
  %2699 = vmax.xlane.f32.xlu0 %v2698
  %v2700 = vpop.xlane.xlu0 %2699
  %v2701 = vsel %vm1737, %v2324, -inf
  %2702 = vmax.xlane.f32.xlu0 %v2701
  %v2703 = vpop.xlane.xlu0 %2702
  %v2704 = vsel %vm1737, %v2374, -inf
  %2705 = vmax.xlane.f32.xlu0 %v2704
  %v2706 = vpop.xlane.xlu0 %2705
  %v2707 = vsel %vm1737, %v2377, -inf
  %2708 = vmax.xlane.f32.xlu0 %v2707
  %v2709 = vpop.xlane.xlu0 %2708
  %v2710 = vsel %vm1737, %v2427, -inf
  %2711 = vmax.xlane.f32.xlu0 %v2710
  %v2712 = vpop.xlane.xlu0 %2711
  %v2713 = vsel %vm1737, %v2430, -inf
  %2714 = vmax.xlane.f32.xlu0 %v2713
  %v2715 = vpop.xlane.xlu0 %2714
  %v2716 = vsel %vm1737, %v2480, -inf
  %2717 = vmax.xlane.f32.xlu0 %v2716
  %v2718 = vpop.xlane.xlu0 %2717
  %v2719 = vsel %vm1737, %v2483, -inf
  %2720 = vmax.xlane.f32.xlu0 %v2719
  %v2721 = vpop.xlane.xlu0 %2720
  %v2722 = vsel %vm1737, %v2533, -inf
  %2723 = vmax.xlane.f32.xlu0 %v2722
  %v2724 = vpop.xlane.xlu0 %2723
  %v2725 = vsel %vm1737, %v2536, -inf
  %2726 = vmax.xlane.f32.xlu0 %v2725
  %v2727 = vpop.xlane.xlu0 %2726
  %v2728 = vsel %vm1737, %v2586, -inf
  %2729 = vmax.xlane.f32.xlu0 %v2728
  %v2730 = vpop.xlane.xlu0 %2729
  %v2731 = vsel %vm1737, %v2589, -inf
  %2732 = vmax.xlane.f32.xlu0 %v2731
  %v2733 = vpop.xlane.xlu0 %2732
  %v2734 = vsel %vm1737, %v2639, -inf
  %2735 = vmax.xlane.f32.xlu0 %v2734
  %v2736 = vpop.xlane.xlu0 %2735
  %v2737 = vsel %vm1737, %v2642, -inf
  %2738 = vmax.xlane.f32.xlu0 %v2737
  %v2739 = vpop.xlane.xlu0 %2738
  %v2740 = vsel %vm1737, %v2692, -inf
  %2741 = vmax.xlane.f32.xlu0 %v2740
  %v2742 = vpop.xlane.xlu0 %2741
  %v2743 = vsel %vm1737, %v2695, -inf
  %2744 = vmax.xlane.f32.xlu0 %v2743
  %v2745 = vpop.xlane.xlu0 %2744
  %v2746 = vsub.f32 %v2321, %v2700
  %v2747 = vsub.f32 %v2324, %v2703
  %v2748 = vsub.f32 %v2374, %v2706
  %v2749 = vsub.f32 %v2377, %v2709
  %v2750 = vsub.f32 %v2427, %v2712
  %v2751 = vsub.f32 %v2430, %v2715
  %v2752 = vsub.f32 %v2480, %v2718
  %v2753 = vsub.f32 %v2483, %v2721
  %v2754 = vsub.f32 %v2533, %v2724
  %v2755 = vsub.f32 %v2536, %v2727
  %v2756 = vsub.f32 %v2586, %v2730
  %v2757 = vsub.f32 %v2589, %v2733
  %v2758 = vsub.f32 %v2639, %v2736
  %v2759 = vsub.f32 %v2642, %v2739
  %v2760 = vsub.f32 %v2692, %v2742
  %v2761 = vsub.f32 %v2695, %v2745
  %v2762 = vmul.f32 %v2746, 1.442695
  %v2763 = vpow.pop %v2762
  %v2764 = vmul.f32 %v2747, 1.442695
  %v2765 = vpow.pop %v2764
  %v2766 = vmul.f32 %v2748, 1.442695
  %v2767 = vpow.pop %v2766
  %v2768 = vmul.f32 %v2749, 1.442695
  %v2769 = vpow.pop %v2768
  %v2770 = vmul.f32 %v2750, 1.442695
  %v2771 = vpow.pop %v2770
  %v2772 = vmul.f32 %v2751, 1.442695
  %v2773 = vpow.pop %v2772
  %v2774 = vmul.f32 %v2752, 1.442695
  %v2775 = vpow.pop %v2774
  %v2776 = vmul.f32 %v2753, 1.442695
  %v2777 = vpow.pop %v2776
  %v2778 = vmul.f32 %v2754, 1.442695
  %v2779 = vpow.pop %v2778
  %v2780 = vmul.f32 %v2755, 1.442695
  %v2781 = vpow.pop %v2780
  %v2782 = vmul.f32 %v2756, 1.442695
  %v2783 = vpow.pop %v2782
  %v2784 = vmul.f32 %v2757, 1.442695
  %v2785 = vpow.pop %v2784
  %v2786 = vmul.f32 %v2758, 1.442695
  %v2787 = vpow.pop %v2786
  %v2788 = vmul.f32 %v2759, 1.442695
  %v2789 = vpow.pop %v2788
  %v2790 = vmul.f32 %v2760, 1.442695
  %v2791 = vpow.pop %v2790
  %v2792 = vmul.f32 %v2761, 1.442695
  %v2793 = vpow.pop %v2792
  %v2794 = vsel %vm1737, %v2763, 0.0
  %2795 = vadd.xlane.f32.xlu0 %v2794
  %v2796 = vpop.xlane.xlu0 %2795
  %v2797 = vsel %vm1737, %v2765, 0.0
  %2798 = vadd.xlane.f32.xlu0 %v2797
  %v2799 = vpop.xlane.xlu0 %2798
  %v2800 = vsel %vm1737, %v2767, 0.0
  %2801 = vadd.xlane.f32.xlu0 %v2800
  %v2802 = vpop.xlane.xlu0 %2801
  %v2803 = vsel %vm1737, %v2769, 0.0
  %2804 = vadd.xlane.f32.xlu0 %v2803
  %v2805 = vpop.xlane.xlu0 %2804
  %v2806 = vsel %vm1737, %v2771, 0.0
  %2807 = vadd.xlane.f32.xlu0 %v2806
  %v2808 = vpop.xlane.xlu0 %2807
  %v2809 = vsel %vm1737, %v2773, 0.0
  %2810 = vadd.xlane.f32.xlu0 %v2809
  %v2811 = vpop.xlane.xlu0 %2810
  %v2812 = vsel %vm1737, %v2775, 0.0
  %2813 = vadd.xlane.f32.xlu0 %v2812
  %v2814 = vpop.xlane.xlu0 %2813
  %v2815 = vsel %vm1737, %v2777, 0.0
  %2816 = vadd.xlane.f32.xlu0 %v2815
  %v2817 = vpop.xlane.xlu0 %2816
  %v2818 = vsel %vm1737, %v2779, 0.0
  %2819 = vadd.xlane.f32.xlu0 %v2818
  %v2820 = vpop.xlane.xlu0 %2819
  %v2821 = vsel %vm1737, %v2781, 0.0
  %2822 = vadd.xlane.f32.xlu0 %v2821
  %v2823 = vpop.xlane.xlu0 %2822
  %v2824 = vsel %vm1737, %v2783, 0.0
  %2825 = vadd.xlane.f32.xlu0 %v2824
  %v2826 = vpop.xlane.xlu0 %2825
  %v2827 = vsel %vm1737, %v2785, 0.0
  %2828 = vadd.xlane.f32.xlu0 %v2827
  %v2829 = vpop.xlane.xlu0 %2828
  %v2830 = vsel %vm1737, %v2787, 0.0
  %2831 = vadd.xlane.f32.xlu0 %v2830
  %v2832 = vpop.xlane.xlu0 %2831
  %v2833 = vsel %vm1737, %v2789, 0.0
  %2834 = vadd.xlane.f32.xlu0 %v2833
  %v2835 = vpop.xlane.xlu0 %2834
  %v2836 = vsel %vm1737, %v2791, 0.0
  %2837 = vadd.xlane.f32.xlu0 %v2836
  %v2838 = vpop.xlane.xlu0 %2837
  %v2839 = vsel %vm1737, %v2793, 0.0
  %2840 = vadd.xlane.f32.xlu0 %v2839
  %v2841 = vpop.xlane.xlu0 %2840
  %v2842 = vrcp.pop %v2796
  %v2843 = vrcp.pop %v2799
  %v2844 = vrcp.pop %v2802
  %v2845 = vrcp.pop %v2805
  %v2846 = vrcp.pop %v2808
  %v2847 = vrcp.pop %v2811
  %v2848 = vrcp.pop %v2814
  %v2849 = vrcp.pop %v2817
  %v2850 = vrcp.pop %v2820
  %v2851 = vrcp.pop %v2823
  %v2852 = vrcp.pop %v2826
  %v2853 = vrcp.pop %v2829
  %v2854 = vrcp.pop %v2832
  %v2855 = vrcp.pop %v2835
  %v2856 = vrcp.pop %v2838
  %v2857 = vrcp.pop %v2841
  %v2858 = vmul.f32 %v2763, %v2842
  %v2859 = vmul.f32 %v2765, %v2843
  %v2860 = vmul.f32 %v2767, %v2844
  %v2861 = vmul.f32 %v2769, %v2845
  %v2862 = vmul.f32 %v2771, %v2846
  %v2863 = vmul.f32 %v2773, %v2847
  %v2864 = vmul.f32 %v2775, %v2848
  %v2865 = vmul.f32 %v2777, %v2849
  %v2866 = vmul.f32 %v2779, %v2850
  %v2867 = vmul.f32 %v2781, %v2851
  %v2868 = vmul.f32 %v2783, %v2852
  %v2869 = vmul.f32 %v2785, %v2853
  %v2870 = vmul.f32 %v2787, %v2854
  %v2871 = vmul.f32 %v2789, %v2855
  %v2872 = vmul.f32 %v2791, %v2856
  %v2873 = vmul.f32 %v2793, %v2857
  %v2874 = vpack.c.bf16 %v2859, %v2858
  %v2875 = vpack.c.bf16 %v2861, %v2860
  %v2876 = vpack.c.bf16 %v2863, %v2862
  %v2877 = vpack.c.bf16 %v2865, %v2864
  %v2878 = vpack.c.bf16 %v2867, %v2866
  %v2879 = vpack.c.bf16 %v2869, %v2868
  %v2880 = vpack.c.bf16 %v2871, %v2870
  %v2881 = vpack.c.bf16 %v2873, %v2872
  %2883 = vrot.lane.b32.xlu0 %v1336, 120
  %v2884 = vpop.permute.xlu0 %2883
  %v2887 = vsel %vm1737, %v2874, 0
  %2889 = vmatprep.subr.bf16.mxu0 0
  %2890 = vmatpush1.bf16.msra.mxu0 %v2884
  %2891 = vmatprep.subr.bf16.mxu0 0
  %2892 = vmatpush1.bf16.msra.mxu0 0
  %2893 = vmatprep.subr.bf16.mxu0 0
  %2894 = vmatpush1.bf16.msra.mxu0 0
  %2895 = vmatprep.subr.bf16.mxu0 0
  %2896 = vmatpush1.bf16.msra.mxu0 0
  %2897 = vmatprep.subr.bf16.mxu0 0
  %2898 = vmatpush1.bf16.msra.mxu0 0
  %2899 = vmatprep.subr.bf16.mxu0 0
  %2900 = vmatpush1.bf16.msra.mxu0 0
  %2901 = vmatprep.subr.bf16.mxu0 0
  %2902 = vmatpush1.bf16.msra.mxu0 0
  %2903 = vmatprep.subr.bf16.mxu0 0
  %2904 = vmatpush1.bf16.msra.mxu0 0
  %2905 = vmatprep.subr.bf16.mxu0 0
  %2906 = vmatpush1.bf16.msra.mxu0 0
  %2907 = vmatprep.subr.bf16.mxu0 0
  %2908 = vmatpush1.bf16.msra.mxu0 0
  %2909 = vmatprep.subr.bf16.mxu0 0
  %2910 = vmatpush1.bf16.msra.mxu0 0
  %2911 = vmatprep.subr.bf16.mxu0 0
  %2912 = vmatpush1.bf16.msra.mxu0 0
  %2913 = vmatprep.subr.bf16.mxu0 0
  %2914 = vmatpush1.bf16.msra.mxu0 0
  %2915 = vmatprep.subr.bf16.mxu0 0
  %2916 = vmatpush1.bf16.msra.mxu0 0
  %2917 = vmatprep.subr.bf16.mxu0 0
  %2918 = vmatpush1.bf16.msra.mxu0 0
  %2919 = vmatprep.subr.bf16.mxu0 0
  %2920 = vmatpush1.bf16.msra.mxu0 0
  %2921 = vmatprep.mubr.bf16.mxu0 0
  %2922 = vmatmul.mubr.bf16.gmra.mrb[0].mxu0 %v2887
  %v2923 = vpop.f32.mrb[0].mxu0
  %v2924 = vadd.f32 0.0, %v2923
  %v2925 = vpop.f32.mrb[0].mxu0
  %v2926 = vpop.f32.mrb[0].mxu0
  %v2927 = vadd.f32 0.0, %v2926
  %v2928 = vpop.f32.mrb[0].mxu0
  %2929 = vdwg.mxu0
  %2931 = vrot.lane.b32.xlu0 %v1337, 120
  %v2932 = vpop.permute.xlu0 %2931
  %v2935 = vsel %vm1737, %v2875, 0
  %2937 = vmatprep.subr.bf16.mxu0 0
  %2938 = vmatpush1.bf16.msra.mxu0 %v2932
  %2939 = vmatprep.subr.bf16.mxu0 0
  %2940 = vmatpush1.bf16.msra.mxu0 0
  %2941 = vmatprep.subr.bf16.mxu0 0
  %2942 = vmatpush1.bf16.msra.mxu0 0
  %2943 = vmatprep.subr.bf16.mxu0 0
  %2944 = vmatpush1.bf16.msra.mxu0 0
  %2945 = vmatprep.subr.bf16.mxu0 0
  %2946 = vmatpush1.bf16.msra.mxu0 0
  %2947 = vmatprep.subr.bf16.mxu0 0
  %2948 = vmatpush1.bf16.msra.mxu0 0
  %2949 = vmatprep.subr.bf16.mxu0 0
  %2950 = vmatpush1.bf16.msra.mxu0 0
  %2951 = vmatprep.subr.bf16.mxu0 0
  %2952 = vmatpush1.bf16.msra.mxu0 0
  %2953 = vmatprep.subr.bf16.mxu0 0
  %2954 = vmatpush1.bf16.msra.mxu0 0
  %2955 = vmatprep.subr.bf16.mxu0 0
  %2956 = vmatpush1.bf16.msra.mxu0 0
  %2957 = vmatprep.subr.bf16.mxu0 0
  %2958 = vmatpush1.bf16.msra.mxu0 0
  %2959 = vmatprep.subr.bf16.mxu0 0
  %2960 = vmatpush1.bf16.msra.mxu0 0
  %2961 = vmatprep.subr.bf16.mxu0 0
  %2962 = vmatpush1.bf16.msra.mxu0 0
  %2963 = vmatprep.subr.bf16.mxu0 0
  %2964 = vmatpush1.bf16.msra.mxu0 0
  %2965 = vmatprep.subr.bf16.mxu0 0
  %2966 = vmatpush1.bf16.msra.mxu0 0
  %2967 = vmatprep.subr.bf16.mxu0 0
  %2968 = vmatpush1.bf16.msra.mxu0 0
  %2969 = vmatprep.mubr.bf16.mxu0 0
  %2970 = vmatmul.mubr.bf16.gmra.mrb[0].mxu0 %v2935
  %v2971 = vpop.f32.mrb[0].mxu0
  %v2972 = vadd.f32 0.0, %v2971
  %v2973 = vpop.f32.mrb[0].mxu0
  %v2974 = vpop.f32.mrb[0].mxu0
  %v2975 = vadd.f32 0.0, %v2974
  %v2976 = vpop.f32.mrb[0].mxu0
  %2977 = vdwg.mxu0
  %2979 = vrot.lane.b32.xlu0 %v1338, 120
  %v2980 = vpop.permute.xlu0 %2979
  %v2983 = vsel %vm1737, %v2876, 0
  %2985 = vmatprep.subr.bf16.mxu0 0
  %2986 = vmatpush1.bf16.msra.mxu0 %v2980
  %2987 = vmatprep.subr.bf16.mxu0 0
  %2988 = vmatpush1.bf16.msra.mxu0 0
  %2989 = vmatprep.subr.bf16.mxu0 0
  %2990 = vmatpush1.bf16.msra.mxu0 0
  %2991 = vmatprep.subr.bf16.mxu0 0
  %2992 = vmatpush1.bf16.msra.mxu0 0
  %2993 = vmatprep.subr.bf16.mxu0 0
  %2994 = vmatpush1.bf16.msra.mxu0 0
  %2995 = vmatprep.subr.bf16.mxu0 0
  %2996 = vmatpush1.bf16.msra.mxu0 0
  %2997 = vmatprep.subr.bf16.mxu0 0
  %2998 = vmatpush1.bf16.msra.mxu0 0
  %2999 = vmatprep.subr.bf16.mxu0 0
  %3000 = vmatpush1.bf16.msra.mxu0 0
  %3001 = vmatprep.subr.bf16.mxu0 0
  %3002 = vmatpush1.bf16.msra.mxu0 0
  %3003 = vmatprep.subr.bf16.mxu0 0
  %3004 = vmatpush1.bf16.msra.mxu0 0
  %3005 = vmatprep.subr.bf16.mxu0 0
  %3006 = vmatpush1.bf16.msra.mxu0 0
  %3007 = vmatprep.subr.bf16.mxu0 0
  %3008 = vmatpush1.bf16.msra.mxu0 0
  %3009 = vmatprep.subr.bf16.mxu0 0
  %3010 = vmatpush1.bf16.msra.mxu0 0
  %3011 = vmatprep.subr.bf16.mxu0 0
  %3012 = vmatpush1.bf16.msra.mxu0 0
  %3013 = vmatprep.subr.bf16.mxu0 0
  %3014 = vmatpush1.bf16.msra.mxu0 0
  %3015 = vmatprep.subr.bf16.mxu0 0
  %3016 = vmatpush1.bf16.msra.mxu0 0
  %3017 = vmatprep.mubr.bf16.mxu0 0
  %3018 = vmatmul.mubr.bf16.gmra.mrb[0].mxu0 %v2983
  %v3019 = vpop.f32.mrb[0].mxu0
  %v3020 = vadd.f32 0.0, %v3019
  %v3021 = vpop.f32.mrb[0].mxu0
  %v3022 = vpop.f32.mrb[0].mxu0
  %v3023 = vadd.f32 0.0, %v3022
  %v3024 = vpop.f32.mrb[0].mxu0
  %3025 = vdwg.mxu0
  %3027 = vrot.lane.b32.xlu0 %v1339, 120
  %v3028 = vpop.permute.xlu0 %3027
  %v3031 = vsel %vm1737, %v2877, 0
  %3033 = vmatprep.subr.bf16.mxu0 0
  %3034 = vmatpush1.bf16.msra.mxu0 %v3028
  %3035 = vmatprep.subr.bf16.mxu0 0
  %3036 = vmatpush1.bf16.msra.mxu0 0
  %3037 = vmatprep.subr.bf16.mxu0 0
  %3038 = vmatpush1.bf16.msra.mxu0 0
  %3039 = vmatprep.subr.bf16.mxu0 0
  %3040 = vmatpush1.bf16.msra.mxu0 0
  %3041 = vmatprep.subr.bf16.mxu0 0
  %3042 = vmatpush1.bf16.msra.mxu0 0
  %3043 = vmatprep.subr.bf16.mxu0 0
  %3044 = vmatpush1.bf16.msra.mxu0 0
  %3045 = vmatprep.subr.bf16.mxu0 0
  %3046 = vmatpush1.bf16.msra.mxu0 0
  %3047 = vmatprep.subr.bf16.mxu0 0
  %3048 = vmatpush1.bf16.msra.mxu0 0
  %3049 = vmatprep.subr.bf16.mxu0 0
  %3050 = vmatpush1.bf16.msra.mxu0 0
  %3051 = vmatprep.subr.bf16.mxu0 0
  %3052 = vmatpush1.bf16.msra.mxu0 0
  %3053 = vmatprep.subr.bf16.mxu0 0
  %3054 = vmatpush1.bf16.msra.mxu0 0
  %3055 = vmatprep.subr.bf16.mxu0 0
  %3056 = vmatpush1.bf16.msra.mxu0 0
  %3057 = vmatprep.subr.bf16.mxu0 0
  %3058 = vmatpush1.bf16.msra.mxu0 0
  %3059 = vmatprep.subr.bf16.mxu0 0
  %3060 = vmatpush1.bf16.msra.mxu0 0
  %3061 = vmatprep.subr.bf16.mxu0 0
  %3062 = vmatpush1.bf16.msra.mxu0 0
  %3063 = vmatprep.subr.bf16.mxu0 0
  %3064 = vmatpush1.bf16.msra.mxu0 0
  %3065 = vmatprep.mubr.bf16.mxu0 0
  %3066 = vmatmul.mubr.bf16.gmra.mrb[0].mxu0 %v3031
  %v3067 = vpop.f32.mrb[0].mxu0
  %v3068 = vadd.f32 0.0, %v3067
  %v3069 = vpop.f32.mrb[0].mxu0
  %v3070 = vpop.f32.mrb[0].mxu0
  %v3071 = vadd.f32 0.0, %v3070
  %v3072 = vpop.f32.mrb[0].mxu0
  %3073 = vdwg.mxu0
  %3075 = vrot.lane.b32.xlu0 %v1340, 120
  %v3076 = vpop.permute.xlu0 %3075
  %v3079 = vsel %vm1737, %v2878, 0
  %3081 = vmatprep.subr.bf16.mxu0 0
  %3082 = vmatpush1.bf16.msra.mxu0 %v3076
  %3083 = vmatprep.subr.bf16.mxu0 0
  %3084 = vmatpush1.bf16.msra.mxu0 0
  %3085 = vmatprep.subr.bf16.mxu0 0
  %3086 = vmatpush1.bf16.msra.mxu0 0
  %3087 = vmatprep.subr.bf16.mxu0 0
  %3088 = vmatpush1.bf16.msra.mxu0 0
  %3089 = vmatprep.subr.bf16.mxu0 0
  %3090 = vmatpush1.bf16.msra.mxu0 0
  %3091 = vmatprep.subr.bf16.mxu0 0
  %3092 = vmatpush1.bf16.msra.mxu0 0
  %3093 = vmatprep.subr.bf16.mxu0 0
  %3094 = vmatpush1.bf16.msra.mxu0 0
  %3095 = vmatprep.subr.bf16.mxu0 0
  %3096 = vmatpush1.bf16.msra.mxu0 0
  %3097 = vmatprep.subr.bf16.mxu0 0
  %3098 = vmatpush1.bf16.msra.mxu0 0
  %3099 = vmatprep.subr.bf16.mxu0 0
  %3100 = vmatpush1.bf16.msra.mxu0 0
  %3101 = vmatprep.subr.bf16.mxu0 0
  %3102 = vmatpush1.bf16.msra.mxu0 0
  %3103 = vmatprep.subr.bf16.mxu0 0
  %3104 = vmatpush1.bf16.msra.mxu0 0
  %3105 = vmatprep.subr.bf16.mxu0 0
  %3106 = vmatpush1.bf16.msra.mxu0 0
  %3107 = vmatprep.subr.bf16.mxu0 0
  %3108 = vmatpush1.bf16.msra.mxu0 0
  %3109 = vmatprep.subr.bf16.mxu0 0
  %3110 = vmatpush1.bf16.msra.mxu0 0
  %3111 = vmatprep.subr.bf16.mxu0 0
  %3112 = vmatpush1.bf16.msra.mxu0 0
  %3113 = vmatprep.mubr.bf16.mxu0 0
  %3114 = vmatmul.mubr.bf16.gmra.mrb[0].mxu0 %v3079
  %v3115 = vpop.f32.mrb[0].mxu0
  %v3116 = vadd.f32 0.0, %v3115
  %v3117 = vpop.f32.mrb[0].mxu0
  %v3118 = vpop.f32.mrb[0].mxu0
  %v3119 = vadd.f32 0.0, %v3118
  %v3120 = vpop.f32.mrb[0].mxu0
  %3121 = vdwg.mxu0
  %3123 = vrot.lane.b32.xlu0 %v1341, 120
  %v3124 = vpop.permute.xlu0 %3123
  %v3127 = vsel %vm1737, %v2879, 0
  %3129 = vmatprep.subr.bf16.mxu0 0
  %3130 = vmatpush1.bf16.msra.mxu0 %v3124
  %3131 = vmatprep.subr.bf16.mxu0 0
  %3132 = vmatpush1.bf16.msra.mxu0 0
  %3133 = vmatprep.subr.bf16.mxu0 0
  %3134 = vmatpush1.bf16.msra.mxu0 0
  %3135 = vmatprep.subr.bf16.mxu0 0
  %3136 = vmatpush1.bf16.msra.mxu0 0
  %3137 = vmatprep.subr.bf16.mxu0 0
  %3138 = vmatpush1.bf16.msra.mxu0 0
  %3139 = vmatprep.subr.bf16.mxu0 0
  %3140 = vmatpush1.bf16.msra.mxu0 0
  %3141 = vmatprep.subr.bf16.mxu0 0
  %3142 = vmatpush1.bf16.msra.mxu0 0
  %3143 = vmatprep.subr.bf16.mxu0 0
  %3144 = vmatpush1.bf16.msra.mxu0 0
  %3145 = vmatprep.subr.bf16.mxu0 0
  %3146 = vmatpush1.bf16.msra.mxu0 0
  %3147 = vmatprep.subr.bf16.mxu0 0
  %3148 = vmatpush1.bf16.msra.mxu0 0
  %3149 = vmatprep.subr.bf16.mxu0 0
  %3150 = vmatpush1.bf16.msra.mxu0 0
  %3151 = vmatprep.subr.bf16.mxu0 0
  %3152 = vmatpush1.bf16.msra.mxu0 0
  %3153 = vmatprep.subr.bf16.mxu0 0
  %3154 = vmatpush1.bf16.msra.mxu0 0
  %3155 = vmatprep.subr.bf16.mxu0 0
  %3156 = vmatpush1.bf16.msra.mxu0 0
  %3157 = vmatprep.subr.bf16.mxu0 0
  %3158 = vmatpush1.bf16.msra.mxu0 0
  %3159 = vmatprep.subr.bf16.mxu0 0
  %3160 = vmatpush1.bf16.msra.mxu0 0
  %3161 = vmatprep.mubr.bf16.mxu0 0
  %3162 = vmatmul.mubr.bf16.gmra.mrb[0].mxu0 %v3127
  %v3163 = vpop.f32.mrb[0].mxu0
  %v3164 = vadd.f32 0.0, %v3163
  %v3165 = vpop.f32.mrb[0].mxu0
  %v3166 = vpop.f32.mrb[0].mxu0
  %v3167 = vadd.f32 0.0, %v3166
  %v3168 = vpop.f32.mrb[0].mxu0
  %3169 = vdwg.mxu0
  %3171 = vrot.lane.b32.xlu0 %v1342, 120
  %v3172 = vpop.permute.xlu0 %3171
  %v3175 = vsel %vm1737, %v2880, 0
  %3177 = vmatprep.subr.bf16.mxu0 0
  %3178 = vmatpush1.bf16.msra.mxu0 %v3172
  %3179 = vmatprep.subr.bf16.mxu0 0
  %3180 = vmatpush1.bf16.msra.mxu0 0
  %3181 = vmatprep.subr.bf16.mxu0 0
  %3182 = vmatpush1.bf16.msra.mxu0 0
  %3183 = vmatprep.subr.bf16.mxu0 0
  %3184 = vmatpush1.bf16.msra.mxu0 0
  %3185 = vmatprep.subr.bf16.mxu0 0
  %3186 = vmatpush1.bf16.msra.mxu0 0
  %3187 = vmatprep.subr.bf16.mxu0 0
  %3188 = vmatpush1.bf16.msra.mxu0 0
  %3189 = vmatprep.subr.bf16.mxu0 0
  %3190 = vmatpush1.bf16.msra.mxu0 0
  %3191 = vmatprep.subr.bf16.mxu0 0
  %3192 = vmatpush1.bf16.msra.mxu0 0
  %3193 = vmatprep.subr.bf16.mxu0 0
  %3194 = vmatpush1.bf16.msra.mxu0 0
  %3195 = vmatprep.subr.bf16.mxu0 0
  %3196 = vmatpush1.bf16.msra.mxu0 0
  %3197 = vmatprep.subr.bf16.mxu0 0
  %3198 = vmatpush1.bf16.msra.mxu0 0
  %3199 = vmatprep.subr.bf16.mxu0 0
  %3200 = vmatpush1.bf16.msra.mxu0 0
  %3201 = vmatprep.subr.bf16.mxu0 0
  %3202 = vmatpush1.bf16.msra.mxu0 0
  %3203 = vmatprep.subr.bf16.mxu0 0
  %3204 = vmatpush1.bf16.msra.mxu0 0
  %3205 = vmatprep.subr.bf16.mxu0 0
  %3206 = vmatpush1.bf16.msra.mxu0 0
  %3207 = vmatprep.subr.bf16.mxu0 0
  %3208 = vmatpush1.bf16.msra.mxu0 0
  %3209 = vmatprep.mubr.bf16.mxu0 0
  %3210 = vmatmul.mubr.bf16.gmra.mrb[0].mxu0 %v3175
  %v3211 = vpop.f32.mrb[0].mxu0
  %v3212 = vadd.f32 0.0, %v3211
  %v3213 = vpop.f32.mrb[0].mxu0
  %v3214 = vpop.f32.mrb[0].mxu0
  %v3215 = vadd.f32 0.0, %v3214
  %v3216 = vpop.f32.mrb[0].mxu0
  %3217 = vdwg.mxu0
  %3219 = vrot.lane.b32.xlu0 %v1343, 120
  %v3220 = vpop.permute.xlu0 %3219
  %v3223 = vsel %vm1737, %v2881, 0
  %3225 = vmatprep.subr.bf16.mxu0 0
  %3226 = vmatpush1.bf16.msra.mxu0 %v3220
  %3227 = vmatprep.subr.bf16.mxu0 0
  %3228 = vmatpush1.bf16.msra.mxu0 0
  %3229 = vmatprep.subr.bf16.mxu0 0
  %3230 = vmatpush1.bf16.msra.mxu0 0
  %3231 = vmatprep.subr.bf16.mxu0 0
  %3232 = vmatpush1.bf16.msra.mxu0 0
  %3233 = vmatprep.subr.bf16.mxu0 0
  %3234 = vmatpush1.bf16.msra.mxu0 0
  %3235 = vmatprep.subr.bf16.mxu0 0
  %3236 = vmatpush1.bf16.msra.mxu0 0
  %3237 = vmatprep.subr.bf16.mxu0 0
  %3238 = vmatpush1.bf16.msra.mxu0 0
  %3239 = vmatprep.subr.bf16.mxu0 0
  %3240 = vmatpush1.bf16.msra.mxu0 0
  %3241 = vmatprep.subr.bf16.mxu0 0
  %3242 = vmatpush1.bf16.msra.mxu0 0
  %3243 = vmatprep.subr.bf16.mxu0 0
  %3244 = vmatpush1.bf16.msra.mxu0 0
  %3245 = vmatprep.subr.bf16.mxu0 0
  %3246 = vmatpush1.bf16.msra.mxu0 0
  %3247 = vmatprep.subr.bf16.mxu0 0
  %3248 = vmatpush1.bf16.msra.mxu0 0
  %3249 = vmatprep.subr.bf16.mxu0 0
  %3250 = vmatpush1.bf16.msra.mxu0 0
  %3251 = vmatprep.subr.bf16.mxu0 0
  %3252 = vmatpush1.bf16.msra.mxu0 0
  %3253 = vmatprep.subr.bf16.mxu0 0
  %3254 = vmatpush1.bf16.msra.mxu0 0
  %3255 = vmatprep.subr.bf16.mxu0 0
  %3256 = vmatpush1.bf16.msra.mxu0 0
  %3257 = vmatprep.mubr.bf16.mxu0 0
  %3258 = vmatmul.mubr.bf16.gmra.mrb[0].mxu0 %v3223
  %v3259 = vpop.f32.mrb[0].mxu0
  %v3260 = vadd.f32 0.0, %v3259
  %v3261 = vpop.f32.mrb[0].mxu0
  %v3262 = vpop.f32.mrb[0].mxu0
  %v3263 = vadd.f32 0.0, %v3262
  %v3264 = vpop.f32.mrb[0].mxu0
  %3265 = vdwg.mxu0
  %3266 = vrot.lane.b32.xlu0 %v1272, 112
  %v3267 = vpop.permute.xlu0 %3266
  %3268 = vrot.lane.b32.xlu0 %v1304, 112
  %v3269 = vpop.permute.xlu0 %3268
  %v3271 = vsel %vm1360, %v3267, 0
  %v3274 = vsel %vm1360, %v3269, 0
  %3276 = vmatprep.subr.bf16.mxu0 0
  %3277 = vmatpush1.bf16.xpose.msra.mxu0 %v3274
  %3278 = vmatprep.subr.bf16.mxu0 0
  %3279 = vmatpush1.bf16.xpose.msra.mxu0 0
  %3280 = vmatprep.subr.bf16.mxu0 0
  %3281 = vmatpush1.bf16.xpose.msra.mxu0 0
  %3282 = vmatprep.subr.bf16.mxu0 0
  %3283 = vmatpush1.bf16.xpose.msra.mxu0 0
  %3284 = vmatprep.subr.bf16.mxu0 0
  %3285 = vmatpush1.bf16.xpose.msra.mxu0 0
  %3286 = vmatprep.subr.bf16.mxu0 0
  %3287 = vmatpush1.bf16.xpose.msra.mxu0 0
  %3288 = vmatprep.subr.bf16.mxu0 0
  %3289 = vmatpush1.bf16.xpose.msra.mxu0 0
  %3290 = vmatprep.subr.bf16.mxu0 0
  %3291 = vmatpush1.bf16.xpose.msra.mxu0 0
  %3292 = vmatprep.subr.bf16.mxu0 0
  %3293 = vmatpush1.bf16.xpose.msra.mxu0 0
  %3294 = vmatprep.subr.bf16.mxu0 0
  %3295 = vmatpush1.bf16.xpose.msra.mxu0 0
  %3296 = vmatprep.subr.bf16.mxu0 0
  %3297 = vmatpush1.bf16.xpose.msra.mxu0 0
  %3298 = vmatprep.subr.bf16.mxu0 0
  %3299 = vmatpush1.bf16.xpose.msra.mxu0 0
  %3300 = vmatprep.subr.bf16.mxu0 0
  %3301 = vmatpush1.bf16.xpose.msra.mxu0 0
  %3302 = vmatprep.subr.bf16.mxu0 0
  %3303 = vmatpush1.bf16.xpose.msra.mxu0 0
  %3304 = vmatprep.subr.bf16.mxu0 0
  %3305 = vmatpush1.bf16.xpose.msra.mxu0 0
  %3306 = vmatprep.subr.bf16.mxu0 0
  %3307 = vmatpush1.bf16.xpose.msra.mxu0 0
  %3308 = vmatprep.mubr.bf16.mxu0 0
  %3309 = vmatmul.mubr.bf16.gmra.mrb[0].mxu0 %v3271
  %v3310 = vpop.f32.mrb[0].mxu0
  %v3311 = vadd.f32 %v1344, %v3310
  %v3312 = vpop.f32.mrb[0].mxu0
  %v3313 = vpop.f32.mrb[0].mxu0
  %v3314 = vadd.f32 %v1345, %v3313
  %v3315 = vpop.f32.mrb[0].mxu0
  %3316 = vdwg.mxu0
  %3317 = vrot.lane.b32.xlu0 %v1273, 112
  %v3318 = vpop.permute.xlu0 %3317
  %3319 = vrot.lane.b32.xlu0 %v1305, 112
  %v3320 = vpop.permute.xlu0 %3319
  %v3322 = vsel %vm1360, %v3318, 0
  %v3325 = vsel %vm1360, %v3320, 0
  %3327 = vmatprep.subr.bf16.mxu0 0
  %3328 = vmatpush1.bf16.xpose.msra.mxu0 %v3325
  %3329 = vmatprep.subr.bf16.mxu0 0
  %3330 = vmatpush1.bf16.xpose.msra.mxu0 0
  %3331 = vmatprep.subr.bf16.mxu0 0
  %3332 = vmatpush1.bf16.xpose.msra.mxu0 0
  %3333 = vmatprep.subr.bf16.mxu0 0
  %3334 = vmatpush1.bf16.xpose.msra.mxu0 0
  %3335 = vmatprep.subr.bf16.mxu0 0
  %3336 = vmatpush1.bf16.xpose.msra.mxu0 0
  %3337 = vmatprep.subr.bf16.mxu0 0
  %3338 = vmatpush1.bf16.xpose.msra.mxu0 0
  %3339 = vmatprep.subr.bf16.mxu0 0
  %3340 = vmatpush1.bf16.xpose.msra.mxu0 0
  %3341 = vmatprep.subr.bf16.mxu0 0
  %3342 = vmatpush1.bf16.xpose.msra.mxu0 0
  %3343 = vmatprep.subr.bf16.mxu0 0
  %3344 = vmatpush1.bf16.xpose.msra.mxu0 0
  %3345 = vmatprep.subr.bf16.mxu0 0
  %3346 = vmatpush1.bf16.xpose.msra.mxu0 0
  %3347 = vmatprep.subr.bf16.mxu0 0
  %3348 = vmatpush1.bf16.xpose.msra.mxu0 0
  %3349 = vmatprep.subr.bf16.mxu0 0
  %3350 = vmatpush1.bf16.xpose.msra.mxu0 0
  %3351 = vmatprep.subr.bf16.mxu0 0
  %3352 = vmatpush1.bf16.xpose.msra.mxu0 0
  %3353 = vmatprep.subr.bf16.mxu0 0
  %3354 = vmatpush1.bf16.xpose.msra.mxu0 0
  %3355 = vmatprep.subr.bf16.mxu0 0
  %3356 = vmatpush1.bf16.xpose.msra.mxu0 0
  %3357 = vmatprep.subr.bf16.mxu0 0
  %3358 = vmatpush1.bf16.xpose.msra.mxu0 0
  %3359 = vmatprep.mubr.bf16.mxu0 0
  %3360 = vmatmul.mubr.bf16.gmra.mrb[0].mxu0 %v3322
  %v3361 = vpop.f32.mrb[0].mxu0
  %v3362 = vadd.f32 %v1346, %v3361
  %v3363 = vpop.f32.mrb[0].mxu0
  %v3364 = vpop.f32.mrb[0].mxu0
  %v3365 = vadd.f32 %v1347, %v3364
  %v3366 = vpop.f32.mrb[0].mxu0
  %3367 = vdwg.mxu0
  %3368 = vrot.lane.b32.xlu0 %v1274, 112
  %v3369 = vpop.permute.xlu0 %3368
  %3370 = vrot.lane.b32.xlu0 %v1306, 112
  %v3371 = vpop.permute.xlu0 %3370
  %v3373 = vsel %vm1360, %v3369, 0
  %v3376 = vsel %vm1360, %v3371, 0
  %3378 = vmatprep.subr.bf16.mxu0 0
  %3379 = vmatpush1.bf16.xpose.msra.mxu0 %v3376
  %3380 = vmatprep.subr.bf16.mxu0 0
  %3381 = vmatpush1.bf16.xpose.msra.mxu0 0
  %3382 = vmatprep.subr.bf16.mxu0 0
  %3383 = vmatpush1.bf16.xpose.msra.mxu0 0
  %3384 = vmatprep.subr.bf16.mxu0 0
  %3385 = vmatpush1.bf16.xpose.msra.mxu0 0
  %3386 = vmatprep.subr.bf16.mxu0 0
  %3387 = vmatpush1.bf16.xpose.msra.mxu0 0
  %3388 = vmatprep.subr.bf16.mxu0 0
  %3389 = vmatpush1.bf16.xpose.msra.mxu0 0
  %3390 = vmatprep.subr.bf16.mxu0 0
  %3391 = vmatpush1.bf16.xpose.msra.mxu0 0
  %3392 = vmatprep.subr.bf16.mxu0 0
  %3393 = vmatpush1.bf16.xpose.msra.mxu0 0
  %3394 = vmatprep.subr.bf16.mxu0 0
  %3395 = vmatpush1.bf16.xpose.msra.mxu0 0
  %3396 = vmatprep.subr.bf16.mxu0 0
  %3397 = vmatpush1.bf16.xpose.msra.mxu0 0
  %3398 = vmatprep.subr.bf16.mxu0 0
  %3399 = vmatpush1.bf16.xpose.msra.mxu0 0
  %3400 = vmatprep.subr.bf16.mxu0 0
  %3401 = vmatpush1.bf16.xpose.msra.mxu0 0
  %3402 = vmatprep.subr.bf16.mxu0 0
  %3403 = vmatpush1.bf16.xpose.msra.mxu0 0
  %3404 = vmatprep.subr.bf16.mxu0 0
  %3405 = vmatpush1.bf16.xpose.msra.mxu0 0
  %3406 = vmatprep.subr.bf16.mxu0 0
  %3407 = vmatpush1.bf16.xpose.msra.mxu0 0
  %3408 = vmatprep.subr.bf16.mxu0 0
  %3409 = vmatpush1.bf16.xpose.msra.mxu0 0
  %3410 = vmatprep.mubr.bf16.mxu0 0
  %3411 = vmatmul.mubr.bf16.gmra.mrb[0].mxu0 %v3373
  %v3412 = vpop.f32.mrb[0].mxu0
  %v3413 = vadd.f32 %v1348, %v3412
  %v3414 = vpop.f32.mrb[0].mxu0
  %v3415 = vpop.f32.mrb[0].mxu0
  %v3416 = vadd.f32 %v1349, %v3415
  %v3417 = vpop.f32.mrb[0].mxu0
  %3418 = vdwg.mxu0
  %3419 = vrot.lane.b32.xlu0 %v1275, 112
  %v3420 = vpop.permute.xlu0 %3419
  %3421 = vrot.lane.b32.xlu0 %v1307, 112
  %v3422 = vpop.permute.xlu0 %3421
  %v3424 = vsel %vm1360, %v3420, 0
  %v3427 = vsel %vm1360, %v3422, 0
  %3429 = vmatprep.subr.bf16.mxu0 0
  %3430 = vmatpush1.bf16.xpose.msra.mxu0 %v3427
  %3431 = vmatprep.subr.bf16.mxu0 0
  %3432 = vmatpush1.bf16.xpose.msra.mxu0 0
  %3433 = vmatprep.subr.bf16.mxu0 0
  %3434 = vmatpush1.bf16.xpose.msra.mxu0 0
  %3435 = vmatprep.subr.bf16.mxu0 0
  %3436 = vmatpush1.bf16.xpose.msra.mxu0 0
  %3437 = vmatprep.subr.bf16.mxu0 0
  %3438 = vmatpush1.bf16.xpose.msra.mxu0 0
  %3439 = vmatprep.subr.bf16.mxu0 0
  %3440 = vmatpush1.bf16.xpose.msra.mxu0 0
  %3441 = vmatprep.subr.bf16.mxu0 0
  %3442 = vmatpush1.bf16.xpose.msra.mxu0 0
  %3443 = vmatprep.subr.bf16.mxu0 0
  %3444 = vmatpush1.bf16.xpose.msra.mxu0 0
  %3445 = vmatprep.subr.bf16.mxu0 0
  %3446 = vmatpush1.bf16.xpose.msra.mxu0 0
  %3447 = vmatprep.subr.bf16.mxu0 0
  %3448 = vmatpush1.bf16.xpose.msra.mxu0 0
  %3449 = vmatprep.subr.bf16.mxu0 0
  %3450 = vmatpush1.bf16.xpose.msra.mxu0 0
  %3451 = vmatprep.subr.bf16.mxu0 0
  %3452 = vmatpush1.bf16.xpose.msra.mxu0 0
  %3453 = vmatprep.subr.bf16.mxu0 0
  %3454 = vmatpush1.bf16.xpose.msra.mxu0 0
  %3455 = vmatprep.subr.bf16.mxu0 0
  %3456 = vmatpush1.bf16.xpose.msra.mxu0 0
  %3457 = vmatprep.subr.bf16.mxu0 0
  %3458 = vmatpush1.bf16.xpose.msra.mxu0 0
  %3459 = vmatprep.subr.bf16.mxu0 0
  %3460 = vmatpush1.bf16.xpose.msra.mxu0 0
  %3461 = vmatprep.mubr.bf16.mxu0 0
  %3462 = vmatmul.mubr.bf16.gmra.mrb[0].mxu0 %v3424
  %v3463 = vpop.f32.mrb[0].mxu0
  %v3464 = vadd.f32 %v1350, %v3463
  %v3465 = vpop.f32.mrb[0].mxu0
  %v3466 = vpop.f32.mrb[0].mxu0
  %v3467 = vadd.f32 %v1351, %v3466
  %v3468 = vpop.f32.mrb[0].mxu0
  %3469 = vdwg.mxu0
  %3470 = vrot.lane.b32.xlu0 %v1276, 112
  %v3471 = vpop.permute.xlu0 %3470
  %3472 = vrot.lane.b32.xlu0 %v1308, 112
  %v3473 = vpop.permute.xlu0 %3472
  %v3475 = vsel %vm1360, %v3471, 0
  %v3478 = vsel %vm1360, %v3473, 0
  %3480 = vmatprep.subr.bf16.mxu0 0
  %3481 = vmatpush1.bf16.xpose.msra.mxu0 %v3478
  %3482 = vmatprep.subr.bf16.mxu0 0
  %3483 = vmatpush1.bf16.xpose.msra.mxu0 0
  %3484 = vmatprep.subr.bf16.mxu0 0
  %3485 = vmatpush1.bf16.xpose.msra.mxu0 0
  %3486 = vmatprep.subr.bf16.mxu0 0
  %3487 = vmatpush1.bf16.xpose.msra.mxu0 0
  %3488 = vmatprep.subr.bf16.mxu0 0
  %3489 = vmatpush1.bf16.xpose.msra.mxu0 0
  %3490 = vmatprep.subr.bf16.mxu0 0
  %3491 = vmatpush1.bf16.xpose.msra.mxu0 0
  %3492 = vmatprep.subr.bf16.mxu0 0
  %3493 = vmatpush1.bf16.xpose.msra.mxu0 0
  %3494 = vmatprep.subr.bf16.mxu0 0
  %3495 = vmatpush1.bf16.xpose.msra.mxu0 0
  %3496 = vmatprep.subr.bf16.mxu0 0
  %3497 = vmatpush1.bf16.xpose.msra.mxu0 0
  %3498 = vmatprep.subr.bf16.mxu0 0
  %3499 = vmatpush1.bf16.xpose.msra.mxu0 0
  %3500 = vmatprep.subr.bf16.mxu0 0
  %3501 = vmatpush1.bf16.xpose.msra.mxu0 0
  %3502 = vmatprep.subr.bf16.mxu0 0
  %3503 = vmatpush1.bf16.xpose.msra.mxu0 0
  %3504 = vmatprep.subr.bf16.mxu0 0
  %3505 = vmatpush1.bf16.xpose.msra.mxu0 0
  %3506 = vmatprep.subr.bf16.mxu0 0
  %3507 = vmatpush1.bf16.xpose.msra.mxu0 0
  %3508 = vmatprep.subr.bf16.mxu0 0
  %3509 = vmatpush1.bf16.xpose.msra.mxu0 0
  %3510 = vmatprep.subr.bf16.mxu0 0
  %3511 = vmatpush1.bf16.xpose.msra.mxu0 0
  %3512 = vmatprep.mubr.bf16.mxu0 0
  %3513 = vmatmul.mubr.bf16.gmra.mrb[0].mxu0 %v3475
  %v3514 = vpop.f32.mrb[0].mxu0
  %v3515 = vadd.f32 %v1352, %v3514
  %v3516 = vpop.f32.mrb[0].mxu0
  %v3517 = vpop.f32.mrb[0].mxu0
  %v3518 = vadd.f32 %v1353, %v3517
  %v3519 = vpop.f32.mrb[0].mxu0
  %3520 = vdwg.mxu0
  %3521 = vrot.lane.b32.xlu0 %v1277, 112
  %v3522 = vpop.permute.xlu0 %3521
  %3523 = vrot.lane.b32.xlu0 %v1309, 112
  %v3524 = vpop.permute.xlu0 %3523
  %v3526 = vsel %vm1360, %v3522, 0
  %v3529 = vsel %vm1360, %v3524, 0
  %3531 = vmatprep.subr.bf16.mxu0 0
  %3532 = vmatpush1.bf16.xpose.msra.mxu0 %v3529
  %3533 = vmatprep.subr.bf16.mxu0 0
  %3534 = vmatpush1.bf16.xpose.msra.mxu0 0
  %3535 = vmatprep.subr.bf16.mxu0 0
  %3536 = vmatpush1.bf16.xpose.msra.mxu0 0
  %3537 = vmatprep.subr.bf16.mxu0 0
  %3538 = vmatpush1.bf16.xpose.msra.mxu0 0
  %3539 = vmatprep.subr.bf16.mxu0 0
  %3540 = vmatpush1.bf16.xpose.msra.mxu0 0
  %3541 = vmatprep.subr.bf16.mxu0 0
  %3542 = vmatpush1.bf16.xpose.msra.mxu0 0
  %3543 = vmatprep.subr.bf16.mxu0 0
  %3544 = vmatpush1.bf16.xpose.msra.mxu0 0
  %3545 = vmatprep.subr.bf16.mxu0 0
  %3546 = vmatpush1.bf16.xpose.msra.mxu0 0
  %3547 = vmatprep.subr.bf16.mxu0 0
  %3548 = vmatpush1.bf16.xpose.msra.mxu0 0
  %3549 = vmatprep.subr.bf16.mxu0 0
  %3550 = vmatpush1.bf16.xpose.msra.mxu0 0
  %3551 = vmatprep.subr.bf16.mxu0 0
  %3552 = vmatpush1.bf16.xpose.msra.mxu0 0
  %3553 = vmatprep.subr.bf16.mxu0 0
  %3554 = vmatpush1.bf16.xpose.msra.mxu0 0
  %3555 = vmatprep.subr.bf16.mxu0 0
  %3556 = vmatpush1.bf16.xpose.msra.mxu0 0
  %3557 = vmatprep.subr.bf16.mxu0 0
  %3558 = vmatpush1.bf16.xpose.msra.mxu0 0
  %3559 = vmatprep.subr.bf16.mxu0 0
  %3560 = vmatpush1.bf16.xpose.msra.mxu0 0
  %3561 = vmatprep.subr.bf16.mxu0 0
  %3562 = vmatpush1.bf16.xpose.msra.mxu0 0
  %3563 = vmatprep.mubr.bf16.mxu0 0
  %3564 = vmatmul.mubr.bf16.gmra.mrb[0].mxu0 %v3526
  %v3565 = vpop.f32.mrb[0].mxu0
  %v3566 = vadd.f32 %v1354, %v3565
  %v3567 = vpop.f32.mrb[0].mxu0
  %v3568 = vpop.f32.mrb[0].mxu0
  %v3569 = vadd.f32 %v1355, %v3568
  %v3570 = vpop.f32.mrb[0].mxu0
  %3571 = vdwg.mxu0
  %3572 = vrot.lane.b32.xlu0 %v1278, 112
  %v3573 = vpop.permute.xlu0 %3572
  %3574 = vrot.lane.b32.xlu0 %v1310, 112
  %v3575 = vpop.permute.xlu0 %3574
  %v3577 = vsel %vm1360, %v3573, 0
  %v3580 = vsel %vm1360, %v3575, 0
  %3582 = vmatprep.subr.bf16.mxu0 0
  %3583 = vmatpush1.bf16.xpose.msra.mxu0 %v3580
  %3584 = vmatprep.subr.bf16.mxu0 0
  %3585 = vmatpush1.bf16.xpose.msra.mxu0 0
  %3586 = vmatprep.subr.bf16.mxu0 0
  %3587 = vmatpush1.bf16.xpose.msra.mxu0 0
  %3588 = vmatprep.subr.bf16.mxu0 0
  %3589 = vmatpush1.bf16.xpose.msra.mxu0 0
  %3590 = vmatprep.subr.bf16.mxu0 0
  %3591 = vmatpush1.bf16.xpose.msra.mxu0 0
  %3592 = vmatprep.subr.bf16.mxu0 0
  %3593 = vmatpush1.bf16.xpose.msra.mxu0 0
  %3594 = vmatprep.subr.bf16.mxu0 0
  %3595 = vmatpush1.bf16.xpose.msra.mxu0 0
  %3596 = vmatprep.subr.bf16.mxu0 0
  %3597 = vmatpush1.bf16.xpose.msra.mxu0 0
  %3598 = vmatprep.subr.bf16.mxu0 0
  %3599 = vmatpush1.bf16.xpose.msra.mxu0 0
  %3600 = vmatprep.subr.bf16.mxu0 0
  %3601 = vmatpush1.bf16.xpose.msra.mxu0 0
  %3602 = vmatprep.subr.bf16.mxu0 0
  %3603 = vmatpush1.bf16.xpose.msra.mxu0 0
  %3604 = vmatprep.subr.bf16.mxu0 0
  %3605 = vmatpush1.bf16.xpose.msra.mxu0 0
  %3606 = vmatprep.subr.bf16.mxu0 0
  %3607 = vmatpush1.bf16.xpose.msra.mxu0 0
  %3608 = vmatprep.subr.bf16.mxu0 0
  %3609 = vmatpush1.bf16.xpose.msra.mxu0 0
  %3610 = vmatprep.subr.bf16.mxu0 0
  %3611 = vmatpush1.bf16.xpose.msra.mxu0 0
  %3612 = vmatprep.subr.bf16.mxu0 0
  %3613 = vmatpush1.bf16.xpose.msra.mxu0 0
  %3614 = vmatprep.mubr.bf16.mxu0 0
  %3615 = vmatmul.mubr.bf16.gmra.mrb[0].mxu0 %v3577
  %v3616 = vpop.f32.mrb[0].mxu0
  %v3617 = vadd.f32 %v1356, %v3616
  %v3618 = vpop.f32.mrb[0].mxu0
  %v3619 = vpop.f32.mrb[0].mxu0
  %v3620 = vadd.f32 %v1357, %v3619
  %v3621 = vpop.f32.mrb[0].mxu0
  %3622 = vdwg.mxu0
  %3623 = vrot.lane.b32.xlu0 %v1279, 112
  %v3624 = vpop.permute.xlu0 %3623
  %3625 = vrot.lane.b32.xlu0 %v1311, 112
  %v3626 = vpop.permute.xlu0 %3625
  %v3628 = vsel %vm1360, %v3624, 0
  %v3631 = vsel %vm1360, %v3626, 0
  %3633 = vmatprep.subr.bf16.mxu0 0
  %3634 = vmatpush1.bf16.xpose.msra.mxu0 %v3631
  %3635 = vmatprep.subr.bf16.mxu0 0
  %3636 = vmatpush1.bf16.xpose.msra.mxu0 0
  %3637 = vmatprep.subr.bf16.mxu0 0
  %3638 = vmatpush1.bf16.xpose.msra.mxu0 0
  %3639 = vmatprep.subr.bf16.mxu0 0
  %3640 = vmatpush1.bf16.xpose.msra.mxu0 0
  %3641 = vmatprep.subr.bf16.mxu0 0
  %3642 = vmatpush1.bf16.xpose.msra.mxu0 0
  %3643 = vmatprep.subr.bf16.mxu0 0
  %3644 = vmatpush1.bf16.xpose.msra.mxu0 0
  %3645 = vmatprep.subr.bf16.mxu0 0
  %3646 = vmatpush1.bf16.xpose.msra.mxu0 0
  %3647 = vmatprep.subr.bf16.mxu0 0
  %3648 = vmatpush1.bf16.xpose.msra.mxu0 0
  %3649 = vmatprep.subr.bf16.mxu0 0
  %3650 = vmatpush1.bf16.xpose.msra.mxu0 0
  %3651 = vmatprep.subr.bf16.mxu0 0
  %3652 = vmatpush1.bf16.xpose.msra.mxu0 0
  %3653 = vmatprep.subr.bf16.mxu0 0
  %3654 = vmatpush1.bf16.xpose.msra.mxu0 0
  %3655 = vmatprep.subr.bf16.mxu0 0
  %3656 = vmatpush1.bf16.xpose.msra.mxu0 0
  %3657 = vmatprep.subr.bf16.mxu0 0
  %3658 = vmatpush1.bf16.xpose.msra.mxu0 0
  %3659 = vmatprep.subr.bf16.mxu0 0
  %3660 = vmatpush1.bf16.xpose.msra.mxu0 0
  %3661 = vmatprep.subr.bf16.mxu0 0
  %3662 = vmatpush1.bf16.xpose.msra.mxu0 0
  %3663 = vmatprep.subr.bf16.mxu0 0
  %3664 = vmatpush1.bf16.xpose.msra.mxu0 0
  %3665 = vmatprep.mubr.bf16.mxu0 0
  %3666 = vmatmul.mubr.bf16.gmra.mrb[0].mxu0 %v3628
  %v3667 = vpop.f32.mrb[0].mxu0
  %v3668 = vadd.f32 %v1358, %v3667
  %v3669 = vpop.f32.mrb[0].mxu0
  %v3670 = vpop.f32.mrb[0].mxu0
  %v3671 = vadd.f32 %v1359, %v3670
  %v3672 = vpop.f32.mrb[0].mxu0
  %3673 = vdwg.mxu0
  %v3674 = vsel %vm1737, %v3311, -inf
  %3675 = vmax.xlane.f32.xlu0 %v3674
  %v3676 = vpop.xlane.xlu0 %3675
  %v3677 = vsel %vm1737, %v3314, -inf
  %3678 = vmax.xlane.f32.xlu0 %v3677
  %v3679 = vpop.xlane.xlu0 %3678
  %v3680 = vsel %vm1737, %v3362, -inf
  %3681 = vmax.xlane.f32.xlu0 %v3680
  %v3682 = vpop.xlane.xlu0 %3681
  %v3683 = vsel %vm1737, %v3365, -inf
  %3684 = vmax.xlane.f32.xlu0 %v3683
  %v3685 = vpop.xlane.xlu0 %3684
  %v3686 = vsel %vm1737, %v3413, -inf
  %3687 = vmax.xlane.f32.xlu0 %v3686
  %v3688 = vpop.xlane.xlu0 %3687
  %v3689 = vsel %vm1737, %v3416, -inf
  %3690 = vmax.xlane.f32.xlu0 %v3689
  %v3691 = vpop.xlane.xlu0 %3690
  %v3692 = vsel %vm1737, %v3464, -inf
  %3693 = vmax.xlane.f32.xlu0 %v3692
  %v3694 = vpop.xlane.xlu0 %3693
  %v3695 = vsel %vm1737, %v3467, -inf
  %3696 = vmax.xlane.f32.xlu0 %v3695
  %v3697 = vpop.xlane.xlu0 %3696
  %v3698 = vsel %vm1737, %v3515, -inf
  %3699 = vmax.xlane.f32.xlu0 %v3698
  %v3700 = vpop.xlane.xlu0 %3699
  %v3701 = vsel %vm1737, %v3518, -inf
  %3702 = vmax.xlane.f32.xlu0 %v3701
  %v3703 = vpop.xlane.xlu0 %3702
  %v3704 = vsel %vm1737, %v3566, -inf
  %3705 = vmax.xlane.f32.xlu0 %v3704
  %v3706 = vpop.xlane.xlu0 %3705
  %v3707 = vsel %vm1737, %v3569, -inf
  %3708 = vmax.xlane.f32.xlu0 %v3707
  %v3709 = vpop.xlane.xlu0 %3708
  %v3710 = vsel %vm1737, %v3617, -inf
  %3711 = vmax.xlane.f32.xlu0 %v3710
  %v3712 = vpop.xlane.xlu0 %3711
  %v3713 = vsel %vm1737, %v3620, -inf
  %3714 = vmax.xlane.f32.xlu0 %v3713
  %v3715 = vpop.xlane.xlu0 %3714
  %v3716 = vsel %vm1737, %v3668, -inf
  %3717 = vmax.xlane.f32.xlu0 %v3716
  %v3718 = vpop.xlane.xlu0 %3717
  %v3719 = vsel %vm1737, %v3671, -inf
  %3720 = vmax.xlane.f32.xlu0 %v3719
  %v3721 = vpop.xlane.xlu0 %3720
  %v3722 = vsub.f32 %v3311, %v3676
  %v3723 = vsub.f32 %v3314, %v3679
  %v3724 = vsub.f32 %v3362, %v3682
  %v3725 = vsub.f32 %v3365, %v3685
  %v3726 = vsub.f32 %v3413, %v3688
  %v3727 = vsub.f32 %v3416, %v3691
  %v3728 = vsub.f32 %v3464, %v3694
  %v3729 = vsub.f32 %v3467, %v3697
  %v3730 = vsub.f32 %v3515, %v3700
  %v3731 = vsub.f32 %v3518, %v3703
  %v3732 = vsub.f32 %v3566, %v3706
  %v3733 = vsub.f32 %v3569, %v3709
  %v3734 = vsub.f32 %v3617, %v3712
  %v3735 = vsub.f32 %v3620, %v3715
  %v3736 = vsub.f32 %v3668, %v3718
  %v3737 = vsub.f32 %v3671, %v3721
  %v3738 = vmul.f32 %v3722, 1.442695
  %v3739 = vpow.pop %v3738
  %v3740 = vmul.f32 %v3723, 1.442695
  %v3741 = vpow.pop %v3740
  %v3742 = vmul.f32 %v3724, 1.442695
  %v3743 = vpow.pop %v3742
  %v3744 = vmul.f32 %v3725, 1.442695
  %v3745 = vpow.pop %v3744
  %v3746 = vmul.f32 %v3726, 1.442695
  %v3747 = vpow.pop %v3746
  %v3748 = vmul.f32 %v3727, 1.442695
  %v3749 = vpow.pop %v3748
  %v3750 = vmul.f32 %v3728, 1.442695
  %v3751 = vpow.pop %v3750
  %v3752 = vmul.f32 %v3729, 1.442695
  %v3753 = vpow.pop %v3752
  %v3754 = vmul.f32 %v3730, 1.442695
  %v3755 = vpow.pop %v3754
  %v3756 = vmul.f32 %v3731, 1.442695
  %v3757 = vpow.pop %v3756
  %v3758 = vmul.f32 %v3732, 1.442695
  %v3759 = vpow.pop %v3758
  %v3760 = vmul.f32 %v3733, 1.442695
  %v3761 = vpow.pop %v3760
  %v3762 = vmul.f32 %v3734, 1.442695
  %v3763 = vpow.pop %v3762
  %v3764 = vmul.f32 %v3735, 1.442695
  %v3765 = vpow.pop %v3764
  %v3766 = vmul.f32 %v3736, 1.442695
  %v3767 = vpow.pop %v3766
  %v3768 = vmul.f32 %v3737, 1.442695
  %v3769 = vpow.pop %v3768
  %v3770 = vsel %vm1737, %v3739, 0.0
  %3771 = vadd.xlane.f32.xlu0 %v3770
  %v3772 = vpop.xlane.xlu0 %3771
  %v3773 = vsel %vm1737, %v3741, 0.0
  %3774 = vadd.xlane.f32.xlu0 %v3773
  %v3775 = vpop.xlane.xlu0 %3774
  %v3776 = vsel %vm1737, %v3743, 0.0
  %3777 = vadd.xlane.f32.xlu0 %v3776
  %v3778 = vpop.xlane.xlu0 %3777
  %v3779 = vsel %vm1737, %v3745, 0.0
  %3780 = vadd.xlane.f32.xlu0 %v3779
  %v3781 = vpop.xlane.xlu0 %3780
  %v3782 = vsel %vm1737, %v3747, 0.0
  %3783 = vadd.xlane.f32.xlu0 %v3782
  %v3784 = vpop.xlane.xlu0 %3783
  %v3785 = vsel %vm1737, %v3749, 0.0
  %3786 = vadd.xlane.f32.xlu0 %v3785
  %v3787 = vpop.xlane.xlu0 %3786
  %v3788 = vsel %vm1737, %v3751, 0.0
  %3789 = vadd.xlane.f32.xlu0 %v3788
  %v3790 = vpop.xlane.xlu0 %3789
  %v3791 = vsel %vm1737, %v3753, 0.0
  %3792 = vadd.xlane.f32.xlu0 %v3791
  %v3793 = vpop.xlane.xlu0 %3792
  %v3794 = vsel %vm1737, %v3755, 0.0
  %3795 = vadd.xlane.f32.xlu0 %v3794
  %v3796 = vpop.xlane.xlu0 %3795
  %v3797 = vsel %vm1737, %v3757, 0.0
  %3798 = vadd.xlane.f32.xlu0 %v3797
  %v3799 = vpop.xlane.xlu0 %3798
  %v3800 = vsel %vm1737, %v3759, 0.0
  %3801 = vadd.xlane.f32.xlu0 %v3800
  %v3802 = vpop.xlane.xlu0 %3801
  %v3803 = vsel %vm1737, %v3761, 0.0
  %3804 = vadd.xlane.f32.xlu0 %v3803
  %v3805 = vpop.xlane.xlu0 %3804
  %v3806 = vsel %vm1737, %v3763, 0.0
  %3807 = vadd.xlane.f32.xlu0 %v3806
  %v3808 = vpop.xlane.xlu0 %3807
  %v3809 = vsel %vm1737, %v3765, 0.0
  %3810 = vadd.xlane.f32.xlu0 %v3809
  %v3811 = vpop.xlane.xlu0 %3810
  %v3812 = vsel %vm1737, %v3767, 0.0
  %3813 = vadd.xlane.f32.xlu0 %v3812
  %v3814 = vpop.xlane.xlu0 %3813
  %v3815 = vsel %vm1737, %v3769, 0.0
  %3816 = vadd.xlane.f32.xlu0 %v3815
  %v3817 = vpop.xlane.xlu0 %3816
  %v3818 = vrcp.pop %v3772
  %v3819 = vrcp.pop %v3775
  %v3820 = vrcp.pop %v3778
  %v3821 = vrcp.pop %v3781
  %v3822 = vrcp.pop %v3784
  %v3823 = vrcp.pop %v3787
  %v3824 = vrcp.pop %v3790
  %v3825 = vrcp.pop %v3793
  %v3826 = vrcp.pop %v3796
  %v3827 = vrcp.pop %v3799
  %v3828 = vrcp.pop %v3802
  %v3829 = vrcp.pop %v3805
  %v3830 = vrcp.pop %v3808
  %v3831 = vrcp.pop %v3811
  %v3832 = vrcp.pop %v3814
  %v3833 = vrcp.pop %v3817
  %v3834 = vmul.f32 %v3739, %v3818
  %v3835 = vmul.f32 %v3741, %v3819
  %v3836 = vmul.f32 %v3743, %v3820
  %v3837 = vmul.f32 %v3745, %v3821
  %v3838 = vmul.f32 %v3747, %v3822
  %v3839 = vmul.f32 %v3749, %v3823
  %v3840 = vmul.f32 %v3751, %v3824
  %v3841 = vmul.f32 %v3753, %v3825
  %v3842 = vmul.f32 %v3755, %v3826
  %v3843 = vmul.f32 %v3757, %v3827
  %v3844 = vmul.f32 %v3759, %v3828
  %v3845 = vmul.f32 %v3761, %v3829
  %v3846 = vmul.f32 %v3763, %v3830
  %v3847 = vmul.f32 %v3765, %v3831
  %v3848 = vmul.f32 %v3767, %v3832
  %v3849 = vmul.f32 %v3769, %v3833
  %v3850 = vpack.c.bf16 %v3835, %v3834
  %v3851 = vpack.c.bf16 %v3837, %v3836
  %v3852 = vpack.c.bf16 %v3839, %v3838
  %v3853 = vpack.c.bf16 %v3841, %v3840
  %v3854 = vpack.c.bf16 %v3843, %v3842
  %v3855 = vpack.c.bf16 %v3845, %v3844
  %v3856 = vpack.c.bf16 %v3847, %v3846
  %v3857 = vpack.c.bf16 %v3849, %v3848
  %3858 = vrot.lane.b32.xlu0 %v1336, 112
  %v3859 = vpop.permute.xlu0 %3858
  %v3862 = vsel %vm1737, %v3850, 0
  %3864 = vmatprep.subr.bf16.mxu0 0
  %3865 = vmatpush1.bf16.msra.mxu0 %v3859
  %3866 = vmatprep.subr.bf16.mxu0 0
  %3867 = vmatpush1.bf16.msra.mxu0 0
  %3868 = vmatprep.subr.bf16.mxu0 0
  %3869 = vmatpush1.bf16.msra.mxu0 0
  %3870 = vmatprep.subr.bf16.mxu0 0
  %3871 = vmatpush1.bf16.msra.mxu0 0
  %3872 = vmatprep.subr.bf16.mxu0 0
  %3873 = vmatpush1.bf16.msra.mxu0 0
  %3874 = vmatprep.subr.bf16.mxu0 0
  %3875 = vmatpush1.bf16.msra.mxu0 0
  %3876 = vmatprep.subr.bf16.mxu0 0
  %3877 = vmatpush1.bf16.msra.mxu0 0
  %3878 = vmatprep.subr.bf16.mxu0 0
  %3879 = vmatpush1.bf16.msra.mxu0 0
  %3880 = vmatprep.subr.bf16.mxu0 0
  %3881 = vmatpush1.bf16.msra.mxu0 0
  %3882 = vmatprep.subr.bf16.mxu0 0
  %3883 = vmatpush1.bf16.msra.mxu0 0
  %3884 = vmatprep.subr.bf16.mxu0 0
  %3885 = vmatpush1.bf16.msra.mxu0 0
  %3886 = vmatprep.subr.bf16.mxu0 0
  %3887 = vmatpush1.bf16.msra.mxu0 0
  %3888 = vmatprep.subr.bf16.mxu0 0
  %3889 = vmatpush1.bf16.msra.mxu0 0
  %3890 = vmatprep.subr.bf16.mxu0 0
  %3891 = vmatpush1.bf16.msra.mxu0 0
  %3892 = vmatprep.subr.bf16.mxu0 0
  %3893 = vmatpush1.bf16.msra.mxu0 0
  %3894 = vmatprep.subr.bf16.mxu0 0
  %3895 = vmatpush1.bf16.msra.mxu0 0
  %3896 = vmatprep.mubr.bf16.mxu0 0
  %3897 = vmatmul.mubr.bf16.gmra.mrb[0].mxu0 %v3862
  %v3898 = vpop.f32.mrb[0].mxu0
  %v3899 = vadd.f32 0.0, %v3898
  %v3900 = vpop.f32.mrb[0].mxu0
  %v3901 = vpop.f32.mrb[0].mxu0
  %v3902 = vadd.f32 0.0, %v3901
  %v3903 = vpop.f32.mrb[0].mxu0
  %3904 = vdwg.mxu0
  %3905 = vrot.lane.b32.xlu0 %v1337, 112
  %v3906 = vpop.permute.xlu0 %3905
  %v3909 = vsel %vm1737, %v3851, 0
  %3911 = vmatprep.subr.bf16.mxu0 0
  %3912 = vmatpush1.bf16.msra.mxu0 %v3906
  %3913 = vmatprep.subr.bf16.mxu0 0
  %3914 = vmatpush1.bf16.msra.mxu0 0
  %3915 = vmatprep.subr.bf16.mxu0 0
  %3916 = vmatpush1.bf16.msra.mxu0 0
  %3917 = vmatprep.subr.bf16.mxu0 0
  %3918 = vmatpush1.bf16.msra.mxu0 0
  %3919 = vmatprep.subr.bf16.mxu0 0
  %3920 = vmatpush1.bf16.msra.mxu0 0
  %3921 = vmatprep.subr.bf16.mxu0 0
  %3922 = vmatpush1.bf16.msra.mxu0 0
  %3923 = vmatprep.subr.bf16.mxu0 0
  %3924 = vmatpush1.bf16.msra.mxu0 0
  %3925 = vmatprep.subr.bf16.mxu0 0
  %3926 = vmatpush1.bf16.msra.mxu0 0
  %3927 = vmatprep.subr.bf16.mxu0 0
  %3928 = vmatpush1.bf16.msra.mxu0 0
  %3929 = vmatprep.subr.bf16.mxu0 0
  %3930 = vmatpush1.bf16.msra.mxu0 0
  %3931 = vmatprep.subr.bf16.mxu0 0
  %3932 = vmatpush1.bf16.msra.mxu0 0
  %3933 = vmatprep.subr.bf16.mxu0 0
  %3934 = vmatpush1.bf16.msra.mxu0 0
  %3935 = vmatprep.subr.bf16.mxu0 0
  %3936 = vmatpush1.bf16.msra.mxu0 0
  %3937 = vmatprep.subr.bf16.mxu0 0
  %3938 = vmatpush1.bf16.msra.mxu0 0
  %3939 = vmatprep.subr.bf16.mxu0 0
  %3940 = vmatpush1.bf16.msra.mxu0 0
  %3941 = vmatprep.subr.bf16.mxu0 0
  %3942 = vmatpush1.bf16.msra.mxu0 0
  %3943 = vmatprep.mubr.bf16.mxu0 0
  %3944 = vmatmul.mubr.bf16.gmra.mrb[0].mxu0 %v3909
  %v3945 = vpop.f32.mrb[0].mxu0
  %v3946 = vadd.f32 0.0, %v3945
  %v3947 = vpop.f32.mrb[0].mxu0
  %v3948 = vpop.f32.mrb[0].mxu0
  %v3949 = vadd.f32 0.0, %v3948
  %v3950 = vpop.f32.mrb[0].mxu0
  %3951 = vdwg.mxu0
  %3952 = vrot.lane.b32.xlu0 %v1338, 112
  %v3953 = vpop.permute.xlu0 %3952
  %v3956 = vsel %vm1737, %v3852, 0
  %3958 = vmatprep.subr.bf16.mxu0 0
  %3959 = vmatpush1.bf16.msra.mxu0 %v3953
  %3960 = vmatprep.subr.bf16.mxu0 0
  %3961 = vmatpush1.bf16.msra.mxu0 0
  %3962 = vmatprep.subr.bf16.mxu0 0
  %3963 = vmatpush1.bf16.msra.mxu0 0
  %3964 = vmatprep.subr.bf16.mxu0 0
  %3965 = vmatpush1.bf16.msra.mxu0 0
  %3966 = vmatprep.subr.bf16.mxu0 0
  %3967 = vmatpush1.bf16.msra.mxu0 0
  %3968 = vmatprep.subr.bf16.mxu0 0
  %3969 = vmatpush1.bf16.msra.mxu0 0
  %3970 = vmatprep.subr.bf16.mxu0 0
  %3971 = vmatpush1.bf16.msra.mxu0 0
  %3972 = vmatprep.subr.bf16.mxu0 0
  %3973 = vmatpush1.bf16.msra.mxu0 0
  %3974 = vmatprep.subr.bf16.mxu0 0
  %3975 = vmatpush1.bf16.msra.mxu0 0
  %3976 = vmatprep.subr.bf16.mxu0 0
  %3977 = vmatpush1.bf16.msra.mxu0 0
  %3978 = vmatprep.subr.bf16.mxu0 0
  %3979 = vmatpush1.bf16.msra.mxu0 0
  %3980 = vmatprep.subr.bf16.mxu0 0
  %3981 = vmatpush1.bf16.msra.mxu0 0
  %3982 = vmatprep.subr.bf16.mxu0 0
  %3983 = vmatpush1.bf16.msra.mxu0 0
  %3984 = vmatprep.subr.bf16.mxu0 0
  %3985 = vmatpush1.bf16.msra.mxu0 0
  %3986 = vmatprep.subr.bf16.mxu0 0
  %3987 = vmatpush1.bf16.msra.mxu0 0
  %3988 = vmatprep.subr.bf16.mxu0 0
  %3989 = vmatpush1.bf16.msra.mxu0 0
  %3990 = vmatprep.mubr.bf16.mxu0 0
  %3991 = vmatmul.mubr.bf16.gmra.mrb[0].mxu0 %v3956
  %v3992 = vpop.f32.mrb[0].mxu0
  %v3993 = vadd.f32 0.0, %v3992
  %v3994 = vpop.f32.mrb[0].mxu0
  %v3995 = vpop.f32.mrb[0].mxu0
  %v3996 = vadd.f32 0.0, %v3995
  %v3997 = vpop.f32.mrb[0].mxu0
  %3998 = vdwg.mxu0
  %3999 = vrot.lane.b32.xlu0 %v1339, 112
  %v4000 = vpop.permute.xlu0 %3999
  %v4003 = vsel %vm1737, %v3853, 0
  %4005 = vmatprep.subr.bf16.mxu0 0
  %4006 = vmatpush1.bf16.msra.mxu0 %v4000
  %4007 = vmatprep.subr.bf16.mxu0 0
  %4008 = vmatpush1.bf16.msra.mxu0 0
  %4009 = vmatprep.subr.bf16.mxu0 0
  %4010 = vmatpush1.bf16.msra.mxu0 0
  %4011 = vmatprep.subr.bf16.mxu0 0
  %4012 = vmatpush1.bf16.msra.mxu0 0
  %4013 = vmatprep.subr.bf16.mxu0 0
  %4014 = vmatpush1.bf16.msra.mxu0 0
  %4015 = vmatprep.subr.bf16.mxu0 0
  %4016 = vmatpush1.bf16.msra.mxu0 0
  %4017 = vmatprep.subr.bf16.mxu0 0
  %4018 = vmatpush1.bf16.msra.mxu0 0
  %4019 = vmatprep.subr.bf16.mxu0 0
  %4020 = vmatpush1.bf16.msra.mxu0 0
  %4021 = vmatprep.subr.bf16.mxu0 0
  %4022 = vmatpush1.bf16.msra.mxu0 0
  %4023 = vmatprep.subr.bf16.mxu0 0
  %4024 = vmatpush1.bf16.msra.mxu0 0
  %4025 = vmatprep.subr.bf16.mxu0 0
  %4026 = vmatpush1.bf16.msra.mxu0 0
  %4027 = vmatprep.subr.bf16.mxu0 0
  %4028 = vmatpush1.bf16.msra.mxu0 0
  %4029 = vmatprep.subr.bf16.mxu0 0
  %4030 = vmatpush1.bf16.msra.mxu0 0
  %4031 = vmatprep.subr.bf16.mxu0 0
  %4032 = vmatpush1.bf16.msra.mxu0 0
  %4033 = vmatprep.subr.bf16.mxu0 0
  %4034 = vmatpush1.bf16.msra.mxu0 0
  %4035 = vmatprep.subr.bf16.mxu0 0
  %4036 = vmatpush1.bf16.msra.mxu0 0
  %4037 = vmatprep.mubr.bf16.mxu0 0
  %4038 = vmatmul.mubr.bf16.gmra.mrb[0].mxu0 %v4003
  %v4039 = vpop.f32.mrb[0].mxu0
  %v4040 = vadd.f32 0.0, %v4039
  %v4041 = vpop.f32.mrb[0].mxu0
  %v4042 = vpop.f32.mrb[0].mxu0
  %v4043 = vadd.f32 0.0, %v4042
  %v4044 = vpop.f32.mrb[0].mxu0
  %4045 = vdwg.mxu0
  %4046 = vrot.lane.b32.xlu0 %v1340, 112
  %v4047 = vpop.permute.xlu0 %4046
  %v4050 = vsel %vm1737, %v3854, 0
  %4052 = vmatprep.subr.bf16.mxu0 0
  %4053 = vmatpush1.bf16.msra.mxu0 %v4047
  %4054 = vmatprep.subr.bf16.mxu0 0
  %4055 = vmatpush1.bf16.msra.mxu0 0
  %4056 = vmatprep.subr.bf16.mxu0 0
  %4057 = vmatpush1.bf16.msra.mxu0 0
  %4058 = vmatprep.subr.bf16.mxu0 0
  %4059 = vmatpush1.bf16.msra.mxu0 0
  %4060 = vmatprep.subr.bf16.mxu0 0
  %4061 = vmatpush1.bf16.msra.mxu0 0
  %4062 = vmatprep.subr.bf16.mxu0 0
  %4063 = vmatpush1.bf16.msra.mxu0 0
  %4064 = vmatprep.subr.bf16.mxu0 0
  %4065 = vmatpush1.bf16.msra.mxu0 0
  %4066 = vmatprep.subr.bf16.mxu0 0
  %4067 = vmatpush1.bf16.msra.mxu0 0
  %4068 = vmatprep.subr.bf16.mxu0 0
  %4069 = vmatpush1.bf16.msra.mxu0 0
  %4070 = vmatprep.subr.bf16.mxu0 0
  %4071 = vmatpush1.bf16.msra.mxu0 0
  %4072 = vmatprep.subr.bf16.mxu0 0
  %4073 = vmatpush1.bf16.msra.mxu0 0
  %4074 = vmatprep.subr.bf16.mxu0 0
  %4075 = vmatpush1.bf16.msra.mxu0 0
  %4076 = vmatprep.subr.bf16.mxu0 0
  %4077 = vmatpush1.bf16.msra.mxu0 0
  %4078 = vmatprep.subr.bf16.mxu0 0
  %4079 = vmatpush1.bf16.msra.mxu0 0
  %4080 = vmatprep.subr.bf16.mxu0 0
  %4081 = vmatpush1.bf16.msra.mxu0 0
  %4082 = vmatprep.subr.bf16.mxu0 0
  %4083 = vmatpush1.bf16.msra.mxu0 0
  %4084 = vmatprep.mubr.bf16.mxu0 0
  %4085 = vmatmul.mubr.bf16.gmra.mrb[0].mxu0 %v4050
  %v4086 = vpop.f32.mrb[0].mxu0
  %v4087 = vadd.f32 0.0, %v4086
  %v4088 = vpop.f32.mrb[0].mxu0
  %v4089 = vpop.f32.mrb[0].mxu0
  %v4090 = vadd.f32 0.0, %v4089
  %v4091 = vpop.f32.mrb[0].mxu0
  %4092 = vdwg.mxu0
  %4093 = vrot.lane.b32.xlu0 %v1341, 112
  %v4094 = vpop.permute.xlu0 %4093
  %v4097 = vsel %vm1737, %v3855, 0
  %4099 = vmatprep.subr.bf16.mxu0 0
  %4100 = vmatpush1.bf16.msra.mxu0 %v4094
  %4101 = vmatprep.subr.bf16.mxu0 0
  %4102 = vmatpush1.bf16.msra.mxu0 0
  %4103 = vmatprep.subr.bf16.mxu0 0
  %4104 = vmatpush1.bf16.msra.mxu0 0
  %4105 = vmatprep.subr.bf16.mxu0 0
  %4106 = vmatpush1.bf16.msra.mxu0 0
  %4107 = vmatprep.subr.bf16.mxu0 0
  %4108 = vmatpush1.bf16.msra.mxu0 0
  %4109 = vmatprep.subr.bf16.mxu0 0
  %4110 = vmatpush1.bf16.msra.mxu0 0
  %4111 = vmatprep.subr.bf16.mxu0 0
  %4112 = vmatpush1.bf16.msra.mxu0 0
  %4113 = vmatprep.subr.bf16.mxu0 0
  %4114 = vmatpush1.bf16.msra.mxu0 0
  %4115 = vmatprep.subr.bf16.mxu0 0
  %4116 = vmatpush1.bf16.msra.mxu0 0
  %4117 = vmatprep.subr.bf16.mxu0 0
  %4118 = vmatpush1.bf16.msra.mxu0 0
  %4119 = vmatprep.subr.bf16.mxu0 0
  %4120 = vmatpush1.bf16.msra.mxu0 0
  %4121 = vmatprep.subr.bf16.mxu0 0
  %4122 = vmatpush1.bf16.msra.mxu0 0
  %4123 = vmatprep.subr.bf16.mxu0 0
  %4124 = vmatpush1.bf16.msra.mxu0 0
  %4125 = vmatprep.subr.bf16.mxu0 0
  %4126 = vmatpush1.bf16.msra.mxu0 0
  %4127 = vmatprep.subr.bf16.mxu0 0
  %4128 = vmatpush1.bf16.msra.mxu0 0
  %4129 = vmatprep.subr.bf16.mxu0 0
  %4130 = vmatpush1.bf16.msra.mxu0 0
  %4131 = vmatprep.mubr.bf16.mxu0 0
  %4132 = vmatmul.mubr.bf16.gmra.mrb[0].mxu0 %v4097
  %v4133 = vpop.f32.mrb[0].mxu0
  %v4134 = vadd.f32 0.0, %v4133
  %v4135 = vpop.f32.mrb[0].mxu0
  %v4136 = vpop.f32.mrb[0].mxu0
  %v4137 = vadd.f32 0.0, %v4136
  %v4138 = vpop.f32.mrb[0].mxu0
  %4139 = vdwg.mxu0
  %4140 = vrot.lane.b32.xlu0 %v1342, 112
  %v4141 = vpop.permute.xlu0 %4140
  %v4144 = vsel %vm1737, %v3856, 0
  %4146 = vmatprep.subr.bf16.mxu0 0
  %4147 = vmatpush1.bf16.msra.mxu0 %v4141
  %4148 = vmatprep.subr.bf16.mxu0 0
  %4149 = vmatpush1.bf16.msra.mxu0 0
  %4150 = vmatprep.subr.bf16.mxu0 0
  %4151 = vmatpush1.bf16.msra.mxu0 0
  %4152 = vmatprep.subr.bf16.mxu0 0
  %4153 = vmatpush1.bf16.msra.mxu0 0
  %4154 = vmatprep.subr.bf16.mxu0 0
  %4155 = vmatpush1.bf16.msra.mxu0 0
  %4156 = vmatprep.subr.bf16.mxu0 0
  %4157 = vmatpush1.bf16.msra.mxu0 0
  %4158 = vmatprep.subr.bf16.mxu0 0
  %4159 = vmatpush1.bf16.msra.mxu0 0
  %4160 = vmatprep.subr.bf16.mxu0 0
  %4161 = vmatpush1.bf16.msra.mxu0 0
  %4162 = vmatprep.subr.bf16.mxu0 0
  %4163 = vmatpush1.bf16.msra.mxu0 0
  %4164 = vmatprep.subr.bf16.mxu0 0
  %4165 = vmatpush1.bf16.msra.mxu0 0
  %4166 = vmatprep.subr.bf16.mxu0 0
  %4167 = vmatpush1.bf16.msra.mxu0 0
  %4168 = vmatprep.subr.bf16.mxu0 0
  %4169 = vmatpush1.bf16.msra.mxu0 0
  %4170 = vmatprep.subr.bf16.mxu0 0
  %4171 = vmatpush1.bf16.msra.mxu0 0
  %4172 = vmatprep.subr.bf16.mxu0 0
  %4173 = vmatpush1.bf16.msra.mxu0 0
  %4174 = vmatprep.subr.bf16.mxu0 0
  %4175 = vmatpush1.bf16.msra.mxu0 0
  %4176 = vmatprep.subr.bf16.mxu0 0
  %4177 = vmatpush1.bf16.msra.mxu0 0
  %4178 = vmatprep.mubr.bf16.mxu0 0
  %4179 = vmatmul.mubr.bf16.gmra.mrb[0].mxu0 %v4144
  %v4180 = vpop.f32.mrb[0].mxu0
  %v4181 = vadd.f32 0.0, %v4180
  %v4182 = vpop.f32.mrb[0].mxu0
  %v4183 = vpop.f32.mrb[0].mxu0
  %v4184 = vadd.f32 0.0, %v4183
  %v4185 = vpop.f32.mrb[0].mxu0
  %4186 = vdwg.mxu0
  %4187 = vrot.lane.b32.xlu0 %v1343, 112
  %v4188 = vpop.permute.xlu0 %4187
  %v4191 = vsel %vm1737, %v3857, 0
  %4193 = vmatprep.subr.bf16.mxu0 0
  %4194 = vmatpush1.bf16.msra.mxu0 %v4188
  %4195 = vmatprep.subr.bf16.mxu0 0
  %4196 = vmatpush1.bf16.msra.mxu0 0
  %4197 = vmatprep.subr.bf16.mxu0 0
  %4198 = vmatpush1.bf16.msra.mxu0 0
  %4199 = vmatprep.subr.bf16.mxu0 0
  %4200 = vmatpush1.bf16.msra.mxu0 0
  %4201 = vmatprep.subr.bf16.mxu0 0
  %4202 = vmatpush1.bf16.msra.mxu0 0
  %4203 = vmatprep.subr.bf16.mxu0 0
  %4204 = vmatpush1.bf16.msra.mxu0 0
  %4205 = vmatprep.subr.bf16.mxu0 0
  %4206 = vmatpush1.bf16.msra.mxu0 0
  %4207 = vmatprep.subr.bf16.mxu0 0
  %4208 = vmatpush1.bf16.msra.mxu0 0
  %4209 = vmatprep.subr.bf16.mxu0 0
  %4210 = vmatpush1.bf16.msra.mxu0 0
  %4211 = vmatprep.subr.bf16.mxu0 0
  %4212 = vmatpush1.bf16.msra.mxu0 0
  %4213 = vmatprep.subr.bf16.mxu0 0
  %4214 = vmatpush1.bf16.msra.mxu0 0
  %4215 = vmatprep.subr.bf16.mxu0 0
  %4216 = vmatpush1.bf16.msra.mxu0 0
  %4217 = vmatprep.subr.bf16.mxu0 0
  %4218 = vmatpush1.bf16.msra.mxu0 0
  %4219 = vmatprep.subr.bf16.mxu0 0
  %4220 = vmatpush1.bf16.msra.mxu0 0
  %4221 = vmatprep.subr.bf16.mxu0 0
  %4222 = vmatpush1.bf16.msra.mxu0 0
  %4223 = vmatprep.subr.bf16.mxu0 0
  %4224 = vmatpush1.bf16.msra.mxu0 0
  %4225 = vmatprep.mubr.bf16.mxu0 0
  %4226 = vmatmul.mubr.bf16.gmra.mrb[0].mxu0 %v4191
  %v4227 = vpop.f32.mrb[0].mxu0
  %v4228 = vadd.f32 0.0, %v4227
  %v4229 = vpop.f32.mrb[0].mxu0
  %v4230 = vpop.f32.mrb[0].mxu0
  %v4231 = vadd.f32 0.0, %v4230
  %v4232 = vpop.f32.mrb[0].mxu0
  %4233 = vdwg.mxu0
  %4234 = vrot.lane.b32.xlu0 %v1272, 104
  %v4235 = vpop.permute.xlu0 %4234
  %4236 = vrot.lane.b32.xlu0 %v1304, 104
  %v4237 = vpop.permute.xlu0 %4236
  %v4239 = vsel %vm1360, %v4235, 0
  %v4242 = vsel %vm1360, %v4237, 0
  %4244 = vmatprep.subr.bf16.mxu0 0
  %4245 = vmatpush1.bf16.xpose.msra.mxu0 %v4242
  %4246 = vmatprep.subr.bf16.mxu0 0
  %4247 = vmatpush1.bf16.xpose.msra.mxu0 0
  %4248 = vmatprep.subr.bf16.mxu0 0
  %4249 = vmatpush1.bf16.xpose.msra.mxu0 0
  %4250 = vmatprep.subr.bf16.mxu0 0
  %4251 = vmatpush1.bf16.xpose.msra.mxu0 0
  %4252 = vmatprep.subr.bf16.mxu0 0
  %4253 = vmatpush1.bf16.xpose.msra.mxu0 0
  %4254 = vmatprep.subr.bf16.mxu0 0
  %4255 = vmatpush1.bf16.xpose.msra.mxu0 0
  %4256 = vmatprep.subr.bf16.mxu0 0
  %4257 = vmatpush1.bf16.xpose.msra.mxu0 0
  %4258 = vmatprep.subr.bf16.mxu0 0
  %4259 = vmatpush1.bf16.xpose.msra.mxu0 0
  %4260 = vmatprep.subr.bf16.mxu0 0
  %4261 = vmatpush1.bf16.xpose.msra.mxu0 0
  %4262 = vmatprep.subr.bf16.mxu0 0
  %4263 = vmatpush1.bf16.xpose.msra.mxu0 0
  %4264 = vmatprep.subr.bf16.mxu0 0
  %4265 = vmatpush1.bf16.xpose.msra.mxu0 0
  %4266 = vmatprep.subr.bf16.mxu0 0
  %4267 = vmatpush1.bf16.xpose.msra.mxu0 0
  %4268 = vmatprep.subr.bf16.mxu0 0
  %4269 = vmatpush1.bf16.xpose.msra.mxu0 0
  %4270 = vmatprep.subr.bf16.mxu0 0
  %4271 = vmatpush1.bf16.xpose.msra.mxu0 0
  %4272 = vmatprep.subr.bf16.mxu0 0
  %4273 = vmatpush1.bf16.xpose.msra.mxu0 0
  %4274 = vmatprep.subr.bf16.mxu0 0
  %4275 = vmatpush1.bf16.xpose.msra.mxu0 0
  %4276 = vmatprep.mubr.bf16.mxu0 0
  %4277 = vmatmul.mubr.bf16.gmra.mrb[0].mxu0 %v4239
  %v4278 = vpop.f32.mrb[0].mxu0
  %v4279 = vadd.f32 %v1344, %v4278
  %v4280 = vpop.f32.mrb[0].mxu0
  %v4281 = vpop.f32.mrb[0].mxu0
  %v4282 = vadd.f32 %v1345, %v4281
  %v4283 = vpop.f32.mrb[0].mxu0
  %4284 = vdwg.mxu0
  %4285 = vrot.lane.b32.xlu0 %v1273, 104
  %v4286 = vpop.permute.xlu0 %4285
  %4287 = vrot.lane.b32.xlu0 %v1305, 104
  %v4288 = vpop.permute.xlu0 %4287
  %v4290 = vsel %vm1360, %v4286, 0
  %v4293 = vsel %vm1360, %v4288, 0
  %4295 = vmatprep.subr.bf16.mxu0 0
  %4296 = vmatpush1.bf16.xpose.msra.mxu0 %v4293
  %4297 = vmatprep.subr.bf16.mxu0 0
  %4298 = vmatpush1.bf16.xpose.msra.mxu0 0
  %4299 = vmatprep.subr.bf16.mxu0 0
  %4300 = vmatpush1.bf16.xpose.msra.mxu0 0
  %4301 = vmatprep.subr.bf16.mxu0 0
  %4302 = vmatpush1.bf16.xpose.msra.mxu0 0
  %4303 = vmatprep.subr.bf16.mxu0 0
  %4304 = vmatpush1.bf16.xpose.msra.mxu0 0
  %4305 = vmatprep.subr.bf16.mxu0 0
  %4306 = vmatpush1.bf16.xpose.msra.mxu0 0
  %4307 = vmatprep.subr.bf16.mxu0 0
  %4308 = vmatpush1.bf16.xpose.msra.mxu0 0
  %4309 = vmatprep.subr.bf16.mxu0 0
  %4310 = vmatpush1.bf16.xpose.msra.mxu0 0
  %4311 = vmatprep.subr.bf16.mxu0 0
  %4312 = vmatpush1.bf16.xpose.msra.mxu0 0
  %4313 = vmatprep.subr.bf16.mxu0 0
  %4314 = vmatpush1.bf16.xpose.msra.mxu0 0
  %4315 = vmatprep.subr.bf16.mxu0 0
  %4316 = vmatpush1.bf16.xpose.msra.mxu0 0
  %4317 = vmatprep.subr.bf16.mxu0 0
  %4318 = vmatpush1.bf16.xpose.msra.mxu0 0
  %4319 = vmatprep.subr.bf16.mxu0 0
  %4320 = vmatpush1.bf16.xpose.msra.mxu0 0
  %4321 = vmatprep.subr.bf16.mxu0 0
  %4322 = vmatpush1.bf16.xpose.msra.mxu0 0
  %4323 = vmatprep.subr.bf16.mxu0 0
  %4324 = vmatpush1.bf16.xpose.msra.mxu0 0
  %4325 = vmatprep.subr.bf16.mxu0 0
  %4326 = vmatpush1.bf16.xpose.msra.mxu0 0
  %4327 = vmatprep.mubr.bf16.mxu0 0
  %4328 = vmatmul.mubr.bf16.gmra.mrb[0].mxu0 %v4290
  %v4329 = vpop.f32.mrb[0].mxu0
  %v4330 = vadd.f32 %v1346, %v4329
  %v4331 = vpop.f32.mrb[0].mxu0
  %v4332 = vpop.f32.mrb[0].mxu0
  %v4333 = vadd.f32 %v1347, %v4332
  %v4334 = vpop.f32.mrb[0].mxu0
  %4335 = vdwg.mxu0
  %4336 = vrot.lane.b32.xlu0 %v1274, 104
  %v4337 = vpop.permute.xlu0 %4336
  %4338 = vrot.lane.b32.xlu0 %v1306, 104
  %v4339 = vpop.permute.xlu0 %4338
  %v4341 = vsel %vm1360, %v4337, 0
  %v4344 = vsel %vm1360, %v4339, 0
  %4346 = vmatprep.subr.bf16.mxu0 0
  %4347 = vmatpush1.bf16.xpose.msra.mxu0 %v4344
  %4348 = vmatprep.subr.bf16.mxu0 0
  %4349 = vmatpush1.bf16.xpose.msra.mxu0 0
  %4350 = vmatprep.subr.bf16.mxu0 0
  %4351 = vmatpush1.bf16.xpose.msra.mxu0 0
  %4352 = vmatprep.subr.bf16.mxu0 0
  %4353 = vmatpush1.bf16.xpose.msra.mxu0 0
  %4354 = vmatprep.subr.bf16.mxu0 0
  %4355 = vmatpush1.bf16.xpose.msra.mxu0 0
  %4356 = vmatprep.subr.bf16.mxu0 0
  %4357 = vmatpush1.bf16.xpose.msra.mxu0 0
  %4358 = vmatprep.subr.bf16.mxu0 0
  %4359 = vmatpush1.bf16.xpose.msra.mxu0 0
  %4360 = vmatprep.subr.bf16.mxu0 0
  %4361 = vmatpush1.bf16.xpose.msra.mxu0 0
  %4362 = vmatprep.subr.bf16.mxu0 0
  %4363 = vmatpush1.bf16.xpose.msra.mxu0 0
  %4364 = vmatprep.subr.bf16.mxu0 0
  %4365 = vmatpush1.bf16.xpose.msra.mxu0 0
  %4366 = vmatprep.subr.bf16.mxu0 0
  %4367 = vmatpush1.bf16.xpose.msra.mxu0 0
  %4368 = vmatprep.subr.bf16.mxu0 0
  %4369 = vmatpush1.bf16.xpose.msra.mxu0 0
  %4370 = vmatprep.subr.bf16.mxu0 0
  %4371 = vmatpush1.bf16.xpose.msra.mxu0 0
  %4372 = vmatprep.subr.bf16.mxu0 0
  %4373 = vmatpush1.bf16.xpose.msra.mxu0 0
  %4374 = vmatprep.subr.bf16.mxu0 0
  %4375 = vmatpush1.bf16.xpose.msra.mxu0 0
  %4376 = vmatprep.subr.bf16.mxu0 0
  %4377 = vmatpush1.bf16.xpose.msra.mxu0 0
  %4378 = vmatprep.mubr.bf16.mxu0 0
  %4379 = vmatmul.mubr.bf16.gmra.mrb[0].mxu0 %v4341
  %v4380 = vpop.f32.mrb[0].mxu0
  %v4381 = vadd.f32 %v1348, %v4380
  %v4382 = vpop.f32.mrb[0].mxu0
  %v4383 = vpop.f32.mrb[0].mxu0
  %v4384 = vadd.f32 %v1349, %v4383
  %v4385 = vpop.f32.mrb[0].mxu0
  %4386 = vdwg.mxu0
  %4387 = vrot.lane.b32.xlu0 %v1275, 104
  %v4388 = vpop.permute.xlu0 %4387
  %4389 = vrot.lane.b32.xlu0 %v1307, 104
  %v4390 = vpop.permute.xlu0 %4389
  %v4392 = vsel %vm1360, %v4388, 0
  %v4395 = vsel %vm1360, %v4390, 0
  %4397 = vmatprep.subr.bf16.mxu0 0
  %4398 = vmatpush1.bf16.xpose.msra.mxu0 %v4395
  %4399 = vmatprep.subr.bf16.mxu0 0
  %4400 = vmatpush1.bf16.xpose.msra.mxu0 0
  %4401 = vmatprep.subr.bf16.mxu0 0
  %4402 = vmatpush1.bf16.xpose.msra.mxu0 0
  %4403 = vmatprep.subr.bf16.mxu0 0
  %4404 = vmatpush1.bf16.xpose.msra.mxu0 0
  %4405 = vmatprep.subr.bf16.mxu0 0
  %4406 = vmatpush1.bf16.xpose.msra.mxu0 0
  %4407 = vmatprep.subr.bf16.mxu0 0
  %4408 = vmatpush1.bf16.xpose.msra.mxu0 0
  %4409 = vmatprep.subr.bf16.mxu0 0
  %4410 = vmatpush1.bf16.xpose.msra.mxu0 0
  %4411 = vmatprep.subr.bf16.mxu0 0
  %4412 = vmatpush1.bf16.xpose.msra.mxu0 0
  %4413 = vmatprep.subr.bf16.mxu0 0
  %4414 = vmatpush1.bf16.xpose.msra.mxu0 0
  %4415 = vmatprep.subr.bf16.mxu0 0
  %4416 = vmatpush1.bf16.xpose.msra.mxu0 0
  %4417 = vmatprep.subr.bf16.mxu0 0
  %4418 = vmatpush1.bf16.xpose.msra.mxu0 0
  %4419 = vmatprep.subr.bf16.mxu0 0
  %4420 = vmatpush1.bf16.xpose.msra.mxu0 0
  %4421 = vmatprep.subr.bf16.mxu0 0
  %4422 = vmatpush1.bf16.xpose.msra.mxu0 0
  %4423 = vmatprep.subr.bf16.mxu0 0
  %4424 = vmatpush1.bf16.xpose.msra.mxu0 0
  %4425 = vmatprep.subr.bf16.mxu0 0
  %4426 = vmatpush1.bf16.xpose.msra.mxu0 0
  %4427 = vmatprep.subr.bf16.mxu0 0
  %4428 = vmatpush1.bf16.xpose.msra.mxu0 0
  %4429 = vmatprep.mubr.bf16.mxu0 0
  %4430 = vmatmul.mubr.bf16.gmra.mrb[0].mxu0 %v4392
  %v4431 = vpop.f32.mrb[0].mxu0
  %v4432 = vadd.f32 %v1350, %v4431
  %v4433 = vpop.f32.mrb[0].mxu0
  %v4434 = vpop.f32.mrb[0].mxu0
  %v4435 = vadd.f32 %v1351, %v4434
  %v4436 = vpop.f32.mrb[0].mxu0
  %4437 = vdwg.mxu0
  %4438 = vrot.lane.b32.xlu0 %v1276, 104
  %v4439 = vpop.permute.xlu0 %4438
  %4440 = vrot.lane.b32.xlu0 %v1308, 104
  %v4441 = vpop.permute.xlu0 %4440
  %v4443 = vsel %vm1360, %v4439, 0
  %v4446 = vsel %vm1360, %v4441, 0
  %4448 = vmatprep.subr.bf16.mxu0 0
  %4449 = vmatpush1.bf16.xpose.msra.mxu0 %v4446
  %4450 = vmatprep.subr.bf16.mxu0 0
  %4451 = vmatpush1.bf16.xpose.msra.mxu0 0
  %4452 = vmatprep.subr.bf16.mxu0 0
  %4453 = vmatpush1.bf16.xpose.msra.mxu0 0
  %4454 = vmatprep.subr.bf16.mxu0 0
  %4455 = vmatpush1.bf16.xpose.msra.mxu0 0
  %4456 = vmatprep.subr.bf16.mxu0 0
  %4457 = vmatpush1.bf16.xpose.msra.mxu0 0
  %4458 = vmatprep.subr.bf16.mxu0 0
  %4459 = vmatpush1.bf16.xpose.msra.mxu0 0
  %4460 = vmatprep.subr.bf16.mxu0 0
  %4461 = vmatpush1.bf16.xpose.msra.mxu0 0
  %4462 = vmatprep.subr.bf16.mxu0 0
  %4463 = vmatpush1.bf16.xpose.msra.mxu0 0
  %4464 = vmatprep.subr.bf16.mxu0 0
  %4465 = vmatpush1.bf16.xpose.msra.mxu0 0
  %4466 = vmatprep.subr.bf16.mxu0 0
  %4467 = vmatpush1.bf16.xpose.msra.mxu0 0
  %4468 = vmatprep.subr.bf16.mxu0 0
  %4469 = vmatpush1.bf16.xpose.msra.mxu0 0
  %4470 = vmatprep.subr.bf16.mxu0 0
  %4471 = vmatpush1.bf16.xpose.msra.mxu0 0
  %4472 = vmatprep.subr.bf16.mxu0 0
  %4473 = vmatpush1.bf16.xpose.msra.mxu0 0
  %4474 = vmatprep.subr.bf16.mxu0 0
  %4475 = vmatpush1.bf16.xpose.msra.mxu0 0
  %4476 = vmatprep.subr.bf16.mxu0 0
  %4477 = vmatpush1.bf16.xpose.msra.mxu0 0
  %4478 = vmatprep.subr.bf16.mxu0 0
  %4479 = vmatpush1.bf16.xpose.msra.mxu0 0
  %4480 = vmatprep.mubr.bf16.mxu0 0
  %4481 = vmatmul.mubr.bf16.gmra.mrb[0].mxu0 %v4443
  %v4482 = vpop.f32.mrb[0].mxu0
  %v4483 = vadd.f32 %v1352, %v4482
  %v4484 = vpop.f32.mrb[0].mxu0
  %v4485 = vpop.f32.mrb[0].mxu0
  %v4486 = vadd.f32 %v1353, %v4485
  %v4487 = vpop.f32.mrb[0].mxu0
  %4488 = vdwg.mxu0
  %4489 = vrot.lane.b32.xlu0 %v1277, 104
  %v4490 = vpop.permute.xlu0 %4489
  %4491 = vrot.lane.b32.xlu0 %v1309, 104
  %v4492 = vpop.permute.xlu0 %4491
  %v4494 = vsel %vm1360, %v4490, 0
  %v4497 = vsel %vm1360, %v4492, 0
  %4499 = vmatprep.subr.bf16.mxu0 0
  %4500 = vmatpush1.bf16.xpose.msra.mxu0 %v4497
  %4501 = vmatprep.subr.bf16.mxu0 0
  %4502 = vmatpush1.bf16.xpose.msra.mxu0 0
  %4503 = vmatprep.subr.bf16.mxu0 0
  %4504 = vmatpush1.bf16.xpose.msra.mxu0 0
  %4505 = vmatprep.subr.bf16.mxu0 0
  %4506 = vmatpush1.bf16.xpose.msra.mxu0 0
  %4507 = vmatprep.subr.bf16.mxu0 0
  %4508 = vmatpush1.bf16.xpose.msra.mxu0 0
  %4509 = vmatprep.subr.bf16.mxu0 0
  %4510 = vmatpush1.bf16.xpose.msra.mxu0 0
  %4511 = vmatprep.subr.bf16.mxu0 0
  %4512 = vmatpush1.bf16.xpose.msra.mxu0 0
  %4513 = vmatprep.subr.bf16.mxu0 0
  %4514 = vmatpush1.bf16.xpose.msra.mxu0 0
  %4515 = vmatprep.subr.bf16.mxu0 0
  %4516 = vmatpush1.bf16.xpose.msra.mxu0 0
  %4517 = vmatprep.subr.bf16.mxu0 0
  %4518 = vmatpush1.bf16.xpose.msra.mxu0 0
  %4519 = vmatprep.subr.bf16.mxu0 0
  %4520 = vmatpush1.bf16.xpose.msra.mxu0 0
  %4521 = vmatprep.subr.bf16.mxu0 0
  %4522 = vmatpush1.bf16.xpose.msra.mxu0 0
  %4523 = vmatprep.subr.bf16.mxu0 0
  %4524 = vmatpush1.bf16.xpose.msra.mxu0 0
  %4525 = vmatprep.subr.bf16.mxu0 0
  %4526 = vmatpush1.bf16.xpose.msra.mxu0 0
  %4527 = vmatprep.subr.bf16.mxu0 0
  %4528 = vmatpush1.bf16.xpose.msra.mxu0 0
  %4529 = vmatprep.subr.bf16.mxu0 0
  %4530 = vmatpush1.bf16.xpose.msra.mxu0 0
  %4531 = vmatprep.mubr.bf16.mxu0 0
  %4532 = vmatmul.mubr.bf16.gmra.mrb[0].mxu0 %v4494
  %v4533 = vpop.f32.mrb[0].mxu0
  %v4534 = vadd.f32 %v1354, %v4533
  %v4535 = vpop.f32.mrb[0].mxu0
  %v4536 = vpop.f32.mrb[0].mxu0
  %v4537 = vadd.f32 %v1355, %v4536
  %v4538 = vpop.f32.mrb[0].mxu0
  %4539 = vdwg.mxu0
  %4540 = vrot.lane.b32.xlu0 %v1278, 104
  %v4541 = vpop.permute.xlu0 %4540
  %4542 = vrot.lane.b32.xlu0 %v1310, 104
  %v4543 = vpop.permute.xlu0 %4542
  %v4545 = vsel %vm1360, %v4541, 0
  %v4548 = vsel %vm1360, %v4543, 0
  %4550 = vmatprep.subr.bf16.mxu0 0
  %4551 = vmatpush1.bf16.xpose.msra.mxu0 %v4548
  %4552 = vmatprep.subr.bf16.mxu0 0
  %4553 = vmatpush1.bf16.xpose.msra.mxu0 0
  %4554 = vmatprep.subr.bf16.mxu0 0
  %4555 = vmatpush1.bf16.xpose.msra.mxu0 0
  %4556 = vmatprep.subr.bf16.mxu0 0
  %4557 = vmatpush1.bf16.xpose.msra.mxu0 0
  %4558 = vmatprep.subr.bf16.mxu0 0
  %4559 = vmatpush1.bf16.xpose.msra.mxu0 0
  %4560 = vmatprep.subr.bf16.mxu0 0
  %4561 = vmatpush1.bf16.xpose.msra.mxu0 0
  %4562 = vmatprep.subr.bf16.mxu0 0
  %4563 = vmatpush1.bf16.xpose.msra.mxu0 0
  %4564 = vmatprep.subr.bf16.mxu0 0
  %4565 = vmatpush1.bf16.xpose.msra.mxu0 0
  %4566 = vmatprep.subr.bf16.mxu0 0
  %4567 = vmatpush1.bf16.xpose.msra.mxu0 0
  %4568 = vmatprep.subr.bf16.mxu0 0
  %4569 = vmatpush1.bf16.xpose.msra.mxu0 0
  %4570 = vmatprep.subr.bf16.mxu0 0
  %4571 = vmatpush1.bf16.xpose.msra.mxu0 0
  %4572 = vmatprep.subr.bf16.mxu0 0
  %4573 = vmatpush1.bf16.xpose.msra.mxu0 0
  %4574 = vmatprep.subr.bf16.mxu0 0
  %4575 = vmatpush1.bf16.xpose.msra.mxu0 0
  %4576 = vmatprep.subr.bf16.mxu0 0
  %4577 = vmatpush1.bf16.xpose.msra.mxu0 0
  %4578 = vmatprep.subr.bf16.mxu0 0
  %4579 = vmatpush1.bf16.xpose.msra.mxu0 0
  %4580 = vmatprep.subr.bf16.mxu0 0
  %4581 = vmatpush1.bf16.xpose.msra.mxu0 0
  %4582 = vmatprep.mubr.bf16.mxu0 0
  %4583 = vmatmul.mubr.bf16.gmra.mrb[0].mxu0 %v4545
  %v4584 = vpop.f32.mrb[0].mxu0
  %v4585 = vadd.f32 %v1356, %v4584
  %v4586 = vpop.f32.mrb[0].mxu0
  %v4587 = vpop.f32.mrb[0].mxu0
  %v4588 = vadd.f32 %v1357, %v4587
  %v4589 = vpop.f32.mrb[0].mxu0
  %4590 = vdwg.mxu0
  %4591 = vrot.lane.b32.xlu0 %v1279, 104
  %v4592 = vpop.permute.xlu0 %4591
  %4593 = vrot.lane.b32.xlu0 %v1311, 104
  %v4594 = vpop.permute.xlu0 %4593
  %v4596 = vsel %vm1360, %v4592, 0
  %v4599 = vsel %vm1360, %v4594, 0
  %4601 = vmatprep.subr.bf16.mxu0 0
  %4602 = vmatpush1.bf16.xpose.msra.mxu0 %v4599
  %4603 = vmatprep.subr.bf16.mxu0 0
  %4604 = vmatpush1.bf16.xpose.msra.mxu0 0
  %4605 = vmatprep.subr.bf16.mxu0 0
  %4606 = vmatpush1.bf16.xpose.msra.mxu0 0
  %4607 = vmatprep.subr.bf16.mxu0 0
  %4608 = vmatpush1.bf16.xpose.msra.mxu0 0
  %4609 = vmatprep.subr.bf16.mxu0 0
  %4610 = vmatpush1.bf16.xpose.msra.mxu0 0
  %4611 = vmatprep.subr.bf16.mxu0 0
  %4612 = vmatpush1.bf16.xpose.msra.mxu0 0
  %4613 = vmatprep.subr.bf16.mxu0 0
  %4614 = vmatpush1.bf16.xpose.msra.mxu0 0
  %4615 = vmatprep.subr.bf16.mxu0 0
  %4616 = vmatpush1.bf16.xpose.msra.mxu0 0
  %4617 = vmatprep.subr.bf16.mxu0 0
  %4618 = vmatpush1.bf16.xpose.msra.mxu0 0
  %4619 = vmatprep.subr.bf16.mxu0 0
  %4620 = vmatpush1.bf16.xpose.msra.mxu0 0
  %4621 = vmatprep.subr.bf16.mxu0 0
  %4622 = vmatpush1.bf16.xpose.msra.mxu0 0
  %4623 = vmatprep.subr.bf16.mxu0 0
  %4624 = vmatpush1.bf16.xpose.msra.mxu0 0
  %4625 = vmatprep.subr.bf16.mxu0 0
  %4626 = vmatpush1.bf16.xpose.msra.mxu0 0
  %4627 = vmatprep.subr.bf16.mxu0 0
  %4628 = vmatpush1.bf16.xpose.msra.mxu0 0
  %4629 = vmatprep.subr.bf16.mxu0 0
  %4630 = vmatpush1.bf16.xpose.msra.mxu0 0
  %4631 = vmatprep.subr.bf16.mxu0 0
  %4632 = vmatpush1.bf16.xpose.msra.mxu0 0
  %4633 = vmatprep.mubr.bf16.mxu0 0
  %4634 = vmatmul.mubr.bf16.gmra.mrb[0].mxu0 %v4596
  %v4635 = vpop.f32.mrb[0].mxu0
  %v4636 = vadd.f32 %v1358, %v4635
  %v4637 = vpop.f32.mrb[0].mxu0
  %v4638 = vpop.f32.mrb[0].mxu0
  %v4639 = vadd.f32 %v1359, %v4638
  %v4640 = vpop.f32.mrb[0].mxu0
  %4641 = vdwg.mxu0
  %v4642 = vsel %vm1737, %v4279, -inf
  %4643 = vmax.xlane.f32.xlu0 %v4642
  %v4644 = vpop.xlane.xlu0 %4643
  %v4645 = vsel %vm1737, %v4282, -inf
  %4646 = vmax.xlane.f32.xlu0 %v4645
  %v4647 = vpop.xlane.xlu0 %4646
  %v4648 = vsel %vm1737, %v4330, -inf
  %4649 = vmax.xlane.f32.xlu0 %v4648
  %v4650 = vpop.xlane.xlu0 %4649
  %v4651 = vsel %vm1737, %v4333, -inf
  %4652 = vmax.xlane.f32.xlu0 %v4651
  %v4653 = vpop.xlane.xlu0 %4652
  %v4654 = vsel %vm1737, %v4381, -inf
  %4655 = vmax.xlane.f32.xlu0 %v4654
  %v4656 = vpop.xlane.xlu0 %4655
  %v4657 = vsel %vm1737, %v4384, -inf
  %4658 = vmax.xlane.f32.xlu0 %v4657
  %v4659 = vpop.xlane.xlu0 %4658
  %v4660 = vsel %vm1737, %v4432, -inf
  %4661 = vmax.xlane.f32.xlu0 %v4660
  %v4662 = vpop.xlane.xlu0 %4661
  %v4663 = vsel %vm1737, %v4435, -inf
  %4664 = vmax.xlane.f32.xlu0 %v4663
  %v4665 = vpop.xlane.xlu0 %4664
  %v4666 = vsel %vm1737, %v4483, -inf
  %4667 = vmax.xlane.f32.xlu0 %v4666
  %v4668 = vpop.xlane.xlu0 %4667
  %v4669 = vsel %vm1737, %v4486, -inf
  %4670 = vmax.xlane.f32.xlu0 %v4669
  %v4671 = vpop.xlane.xlu0 %4670
  %v4672 = vsel %vm1737, %v4534, -inf
  %4673 = vmax.xlane.f32.xlu0 %v4672
  %v4674 = vpop.xlane.xlu0 %4673
  %v4675 = vsel %vm1737, %v4537, -inf
  %4676 = vmax.xlane.f32.xlu0 %v4675
  %v4677 = vpop.xlane.xlu0 %4676
  %v4678 = vsel %vm1737, %v4585, -inf
  %4679 = vmax.xlane.f32.xlu0 %v4678
  %v4680 = vpop.xlane.xlu0 %4679
  %v4681 = vsel %vm1737, %v4588, -inf
  %4682 = vmax.xlane.f32.xlu0 %v4681
  %v4683 = vpop.xlane.xlu0 %4682
  %v4684 = vsel %vm1737, %v4636, -inf
  %4685 = vmax.xlane.f32.xlu0 %v4684
  %v4686 = vpop.xlane.xlu0 %4685
  %v4687 = vsel %vm1737, %v4639, -inf
  %4688 = vmax.xlane.f32.xlu0 %v4687
  %v4689 = vpop.xlane.xlu0 %4688
  %v4690 = vsub.f32 %v4279, %v4644
  %v4691 = vsub.f32 %v4282, %v4647
  %v4692 = vsub.f32 %v4330, %v4650
  %v4693 = vsub.f32 %v4333, %v4653
  %v4694 = vsub.f32 %v4381, %v4656
  %v4695 = vsub.f32 %v4384, %v4659
  %v4696 = vsub.f32 %v4432, %v4662
  %v4697 = vsub.f32 %v4435, %v4665
  %v4698 = vsub.f32 %v4483, %v4668
  %v4699 = vsub.f32 %v4486, %v4671
  %v4700 = vsub.f32 %v4534, %v4674
  %v4701 = vsub.f32 %v4537, %v4677
  %v4702 = vsub.f32 %v4585, %v4680
  %v4703 = vsub.f32 %v4588, %v4683
  %v4704 = vsub.f32 %v4636, %v4686
  %v4705 = vsub.f32 %v4639, %v4689
  %v4706 = vmul.f32 %v4690, 1.442695
  %v4707 = vpow.pop %v4706
  %v4708 = vmul.f32 %v4691, 1.442695
  %v4709 = vpow.pop %v4708
  %v4710 = vmul.f32 %v4692, 1.442695
  %v4711 = vpow.pop %v4710
  %v4712 = vmul.f32 %v4693, 1.442695
  %v4713 = vpow.pop %v4712
  %v4714 = vmul.f32 %v4694, 1.442695
  %v4715 = vpow.pop %v4714
  %v4716 = vmul.f32 %v4695, 1.442695
  %v4717 = vpow.pop %v4716
  %v4718 = vmul.f32 %v4696, 1.442695
  %v4719 = vpow.pop %v4718
  %v4720 = vmul.f32 %v4697, 1.442695
  %v4721 = vpow.pop %v4720
  %v4722 = vmul.f32 %v4698, 1.442695
  %v4723 = vpow.pop %v4722
  %v4724 = vmul.f32 %v4699, 1.442695
  %v4725 = vpow.pop %v4724
  %v4726 = vmul.f32 %v4700, 1.442695
  %v4727 = vpow.pop %v4726
  %v4728 = vmul.f32 %v4701, 1.442695
  %v4729 = vpow.pop %v4728
  %v4730 = vmul.f32 %v4702, 1.442695
  %v4731 = vpow.pop %v4730
  %v4732 = vmul.f32 %v4703, 1.442695
  %v4733 = vpow.pop %v4732
  %v4734 = vmul.f32 %v4704, 1.442695
  %v4735 = vpow.pop %v4734
  %v4736 = vmul.f32 %v4705, 1.442695
  %v4737 = vpow.pop %v4736
  %v4738 = vsel %vm1737, %v4707, 0.0
  %4739 = vadd.xlane.f32.xlu0 %v4738
  %v4740 = vpop.xlane.xlu0 %4739
  %v4741 = vsel %vm1737, %v4709, 0.0
  %4742 = vadd.xlane.f32.xlu0 %v4741
  %v4743 = vpop.xlane.xlu0 %4742
  %v4744 = vsel %vm1737, %v4711, 0.0
  %4745 = vadd.xlane.f32.xlu0 %v4744
  %v4746 = vpop.xlane.xlu0 %4745
  %v4747 = vsel %vm1737, %v4713, 0.0
  %4748 = vadd.xlane.f32.xlu0 %v4747
  %v4749 = vpop.xlane.xlu0 %4748
  %v4750 = vsel %vm1737, %v4715, 0.0
  %4751 = vadd.xlane.f32.xlu0 %v4750
  %v4752 = vpop.xlane.xlu0 %4751
  %v4753 = vsel %vm1737, %v4717, 0.0
  %4754 = vadd.xlane.f32.xlu0 %v4753
  %v4755 = vpop.xlane.xlu0 %4754
  %v4756 = vsel %vm1737, %v4719, 0.0
  %4757 = vadd.xlane.f32.xlu0 %v4756
  %v4758 = vpop.xlane.xlu0 %4757
  %v4759 = vsel %vm1737, %v4721, 0.0
  %4760 = vadd.xlane.f32.xlu0 %v4759
  %v4761 = vpop.xlane.xlu0 %4760
  %v4762 = vsel %vm1737, %v4723, 0.0
  %4763 = vadd.xlane.f32.xlu0 %v4762
  %v4764 = vpop.xlane.xlu0 %4763
  %v4765 = vsel %vm1737, %v4725, 0.0
  %4766 = vadd.xlane.f32.xlu0 %v4765
  %v4767 = vpop.xlane.xlu0 %4766
  %v4768 = vsel %vm1737, %v4727, 0.0
  %4769 = vadd.xlane.f32.xlu0 %v4768
  %v4770 = vpop.xlane.xlu0 %4769
  %v4771 = vsel %vm1737, %v4729, 0.0
  %4772 = vadd.xlane.f32.xlu0 %v4771
  %v4773 = vpop.xlane.xlu0 %4772
  %v4774 = vsel %vm1737, %v4731, 0.0
  %4775 = vadd.xlane.f32.xlu0 %v4774
  %v4776 = vpop.xlane.xlu0 %4775
  %v4777 = vsel %vm1737, %v4733, 0.0
  %4778 = vadd.xlane.f32.xlu0 %v4777
  %v4779 = vpop.xlane.xlu0 %4778
  %v4780 = vsel %vm1737, %v4735, 0.0
  %4781 = vadd.xlane.f32.xlu0 %v4780
  %v4782 = vpop.xlane.xlu0 %4781
  %v4783 = vsel %vm1737, %v4737, 0.0
  %4784 = vadd.xlane.f32.xlu0 %v4783
  %v4785 = vpop.xlane.xlu0 %4784
  %v4786 = vrcp.pop %v4740
  %v4787 = vrcp.pop %v4743
  %v4788 = vrcp.pop %v4746
  %v4789 = vrcp.pop %v4749
  %v4790 = vrcp.pop %v4752
  %v4791 = vrcp.pop %v4755
  %v4792 = vrcp.pop %v4758
  %v4793 = vrcp.pop %v4761
  %v4794 = vrcp.pop %v4764
  %v4795 = vrcp.pop %v4767
  %v4796 = vrcp.pop %v4770
  %v4797 = vrcp.pop %v4773
  %v4798 = vrcp.pop %v4776
  %v4799 = vrcp.pop %v4779
  %v4800 = vrcp.pop %v4782
  %v4801 = vrcp.pop %v4785
  %v4802 = vmul.f32 %v4707, %v4786
  %v4803 = vmul.f32 %v4709, %v4787
  %v4804 = vmul.f32 %v4711, %v4788
  %v4805 = vmul.f32 %v4713, %v4789
  %v4806 = vmul.f32 %v4715, %v4790
  %v4807 = vmul.f32 %v4717, %v4791
  %v4808 = vmul.f32 %v4719, %v4792
  %v4809 = vmul.f32 %v4721, %v4793
  %v4810 = vmul.f32 %v4723, %v4794
  %v4811 = vmul.f32 %v4725, %v4795
  %v4812 = vmul.f32 %v4727, %v4796
  %v4813 = vmul.f32 %v4729, %v4797
  %v4814 = vmul.f32 %v4731, %v4798
  %v4815 = vmul.f32 %v4733, %v4799
  %v4816 = vmul.f32 %v4735, %v4800
  %v4817 = vmul.f32 %v4737, %v4801
  %v4818 = vpack.c.bf16 %v4803, %v4802
  %v4819 = vpack.c.bf16 %v4805, %v4804
  %v4820 = vpack.c.bf16 %v4807, %v4806
  %v4821 = vpack.c.bf16 %v4809, %v4808
  %v4822 = vpack.c.bf16 %v4811, %v4810
  %v4823 = vpack.c.bf16 %v4813, %v4812
  %v4824 = vpack.c.bf16 %v4815, %v4814
  %v4825 = vpack.c.bf16 %v4817, %v4816
  %4826 = vrot.lane.b32.xlu0 %v1336, 104
  %v4827 = vpop.permute.xlu0 %4826
  %v4830 = vsel %vm1737, %v4818, 0
  %4832 = vmatprep.subr.bf16.mxu0 0
  %4833 = vmatpush1.bf16.msra.mxu0 %v4827
  %4834 = vmatprep.subr.bf16.mxu0 0
  %4835 = vmatpush1.bf16.msra.mxu0 0
  %4836 = vmatprep.subr.bf16.mxu0 0
  %4837 = vmatpush1.bf16.msra.mxu0 0
  %4838 = vmatprep.subr.bf16.mxu0 0
  %4839 = vmatpush1.bf16.msra.mxu0 0
  %4840 = vmatprep.subr.bf16.mxu0 0
  %4841 = vmatpush1.bf16.msra.mxu0 0
  %4842 = vmatprep.subr.bf16.mxu0 0
  %4843 = vmatpush1.bf16.msra.mxu0 0
  %4844 = vmatprep.subr.bf16.mxu0 0
  %4845 = vmatpush1.bf16.msra.mxu0 0
  %4846 = vmatprep.subr.bf16.mxu0 0
  %4847 = vmatpush1.bf16.msra.mxu0 0
  %4848 = vmatprep.subr.bf16.mxu0 0
  %4849 = vmatpush1.bf16.msra.mxu0 0
  %4850 = vmatprep.subr.bf16.mxu0 0
  %4851 = vmatpush1.bf16.msra.mxu0 0
  %4852 = vmatprep.subr.bf16.mxu0 0
  %4853 = vmatpush1.bf16.msra.mxu0 0
  %4854 = vmatprep.subr.bf16.mxu0 0
  %4855 = vmatpush1.bf16.msra.mxu0 0
  %4856 = vmatprep.subr.bf16.mxu0 0
  %4857 = vmatpush1.bf16.msra.mxu0 0
  %4858 = vmatprep.subr.bf16.mxu0 0
  %4859 = vmatpush1.bf16.msra.mxu0 0
  %4860 = vmatprep.subr.bf16.mxu0 0
  %4861 = vmatpush1.bf16.msra.mxu0 0
  %4862 = vmatprep.subr.bf16.mxu0 0
  %4863 = vmatpush1.bf16.msra.mxu0 0
  %4864 = vmatprep.mubr.bf16.mxu0 0
  %4865 = vmatmul.mubr.bf16.gmra.mrb[0].mxu0 %v4830
  %v4866 = vpop.f32.mrb[0].mxu0
  %v4867 = vadd.f32 0.0, %v4866
  %v4868 = vpop.f32.mrb[0].mxu0
  %v4869 = vpop.f32.mrb[0].mxu0
  %v4870 = vadd.f32 0.0, %v4869
  %v4871 = vpop.f32.mrb[0].mxu0
  %4872 = vdwg.mxu0
  %4873 = vrot.lane.b32.xlu0 %v1337, 104
  %v4874 = vpop.permute.xlu0 %4873
  %v4877 = vsel %vm1737, %v4819, 0
  %4879 = vmatprep.subr.bf16.mxu0 0
  %4880 = vmatpush1.bf16.msra.mxu0 %v4874
  %4881 = vmatprep.subr.bf16.mxu0 0
  %4882 = vmatpush1.bf16.msra.mxu0 0
  %4883 = vmatprep.subr.bf16.mxu0 0
  %4884 = vmatpush1.bf16.msra.mxu0 0
  %4885 = vmatprep.subr.bf16.mxu0 0
  %4886 = vmatpush1.bf16.msra.mxu0 0
  %4887 = vmatprep.subr.bf16.mxu0 0
  %4888 = vmatpush1.bf16.msra.mxu0 0
  %4889 = vmatprep.subr.bf16.mxu0 0
  %4890 = vmatpush1.bf16.msra.mxu0 0
  %4891 = vmatprep.subr.bf16.mxu0 0
  %4892 = vmatpush1.bf16.msra.mxu0 0
  %4893 = vmatprep.subr.bf16.mxu0 0
  %4894 = vmatpush1.bf16.msra.mxu0 0
  %4895 = vmatprep.subr.bf16.mxu0 0
  %4896 = vmatpush1.bf16.msra.mxu0 0
  %4897 = vmatprep.subr.bf16.mxu0 0
  %4898 = vmatpush1.bf16.msra.mxu0 0
  %4899 = vmatprep.subr.bf16.mxu0 0
  %4900 = vmatpush1.bf16.msra.mxu0 0
  %4901 = vmatprep.subr.bf16.mxu0 0
  %4902 = vmatpush1.bf16.msra.mxu0 0
  %4903 = vmatprep.subr.bf16.mxu0 0
  %4904 = vmatpush1.bf16.msra.mxu0 0
  %4905 = vmatprep.subr.bf16.mxu0 0
  %4906 = vmatpush1.bf16.msra.mxu0 0
  %4907 = vmatprep.subr.bf16.mxu0 0
  %4908 = vmatpush1.bf16.msra.mxu0 0
  %4909 = vmatprep.subr.bf16.mxu0 0
  %4910 = vmatpush1.bf16.msra.mxu0 0
  %4911 = vmatprep.mubr.bf16.mxu0 0
  %4912 = vmatmul.mubr.bf16.gmra.mrb[0].mxu0 %v4877
  %v4913 = vpop.f32.mrb[0].mxu0
  %v4914 = vadd.f32 0.0, %v4913
  %v4915 = vpop.f32.mrb[0].mxu0
  %v4916 = vpop.f32.mrb[0].mxu0
  %v4917 = vadd.f32 0.0, %v4916
  %v4918 = vpop.f32.mrb[0].mxu0
  %4919 = vdwg.mxu0
  %4920 = vrot.lane.b32.xlu0 %v1338, 104
  %v4921 = vpop.permute.xlu0 %4920
  %v4924 = vsel %vm1737, %v4820, 0
  %4926 = vmatprep.subr.bf16.mxu0 0
  %4927 = vmatpush1.bf16.msra.mxu0 %v4921
  %4928 = vmatprep.subr.bf16.mxu0 0
  %4929 = vmatpush1.bf16.msra.mxu0 0
  %4930 = vmatprep.subr.bf16.mxu0 0
  %4931 = vmatpush1.bf16.msra.mxu0 0
  %4932 = vmatprep.subr.bf16.mxu0 0
  %4933 = vmatpush1.bf16.msra.mxu0 0
  %4934 = vmatprep.subr.bf16.mxu0 0
  %4935 = vmatpush1.bf16.msra.mxu0 0
  %4936 = vmatprep.subr.bf16.mxu0 0
  %4937 = vmatpush1.bf16.msra.mxu0 0
  %4938 = vmatprep.subr.bf16.mxu0 0
  %4939 = vmatpush1.bf16.msra.mxu0 0
  %4940 = vmatprep.subr.bf16.mxu0 0
  %4941 = vmatpush1.bf16.msra.mxu0 0
  %4942 = vmatprep.subr.bf16.mxu0 0
  %4943 = vmatpush1.bf16.msra.mxu0 0
  %4944 = vmatprep.subr.bf16.mxu0 0
  %4945 = vmatpush1.bf16.msra.mxu0 0
  %4946 = vmatprep.subr.bf16.mxu0 0
  %4947 = vmatpush1.bf16.msra.mxu0 0
  %4948 = vmatprep.subr.bf16.mxu0 0
  %4949 = vmatpush1.bf16.msra.mxu0 0
  %4950 = vmatprep.subr.bf16.mxu0 0
  %4951 = vmatpush1.bf16.msra.mxu0 0
  %4952 = vmatprep.subr.bf16.mxu0 0
  %4953 = vmatpush1.bf16.msra.mxu0 0
  %4954 = vmatprep.subr.bf16.mxu0 0
  %4955 = vmatpush1.bf16.msra.mxu0 0
  %4956 = vmatprep.subr.bf16.mxu0 0
  %4957 = vmatpush1.bf16.msra.mxu0 0
  %4958 = vmatprep.mubr.bf16.mxu0 0
  %4959 = vmatmul.mubr.bf16.gmra.mrb[0].mxu0 %v4924
  %v4960 = vpop.f32.mrb[0].mxu0
  %v4961 = vadd.f32 0.0, %v4960
  %v4962 = vpop.f32.mrb[0].mxu0
  %v4963 = vpop.f32.mrb[0].mxu0
  %v4964 = vadd.f32 0.0, %v4963
  %v4965 = vpop.f32.mrb[0].mxu0
  %4966 = vdwg.mxu0
  %4967 = vrot.lane.b32.xlu0 %v1339, 104
  %v4968 = vpop.permute.xlu0 %4967
  %v4971 = vsel %vm1737, %v4821, 0
  %4973 = vmatprep.subr.bf16.mxu0 0
  %4974 = vmatpush1.bf16.msra.mxu0 %v4968
  %4975 = vmatprep.subr.bf16.mxu0 0
  %4976 = vmatpush1.bf16.msra.mxu0 0
  %4977 = vmatprep.subr.bf16.mxu0 0
  %4978 = vmatpush1.bf16.msra.mxu0 0
  %4979 = vmatprep.subr.bf16.mxu0 0
  %4980 = vmatpush1.bf16.msra.mxu0 0
  %4981 = vmatprep.subr.bf16.mxu0 0
  %4982 = vmatpush1.bf16.msra.mxu0 0
  %4983 = vmatprep.subr.bf16.mxu0 0
  %4984 = vmatpush1.bf16.msra.mxu0 0
  %4985 = vmatprep.subr.bf16.mxu0 0
  %4986 = vmatpush1.bf16.msra.mxu0 0
  %4987 = vmatprep.subr.bf16.mxu0 0
  %4988 = vmatpush1.bf16.msra.mxu0 0
  %4989 = vmatprep.subr.bf16.mxu0 0
  %4990 = vmatpush1.bf16.msra.mxu0 0
  %4991 = vmatprep.subr.bf16.mxu0 0
  %4992 = vmatpush1.bf16.msra.mxu0 0
  %4993 = vmatprep.subr.bf16.mxu0 0
  %4994 = vmatpush1.bf16.msra.mxu0 0
  %4995 = vmatprep.subr.bf16.mxu0 0
  %4996 = vmatpush1.bf16.msra.mxu0 0
  %4997 = vmatprep.subr.bf16.mxu0 0
  %4998 = vmatpush1.bf16.msra.mxu0 0
  %4999 = vmatprep.subr.bf16.mxu0 0
  %5000 = vmatpush1.bf16.msra.mxu0 0
  %5001 = vmatprep.subr.bf16.mxu0 0
  %5002 = vmatpush1.bf16.msra.mxu0 0
  %5003 = vmatprep.subr.bf16.mxu0 0
  %5004 = vmatpush1.bf16.msra.mxu0 0
  %5005 = vmatprep.mubr.bf16.mxu0 0
  %5006 = vmatmul.mubr.bf16.gmra.mrb[0].mxu0 %v4971
  %v5007 = vpop.f32.mrb[0].mxu0
  %v5008 = vadd.f32 0.0, %v5007
  %v5009 = vpop.f32.mrb[0].mxu0
  %v5010 = vpop.f32.mrb[0].mxu0
  %v5011 = vadd.f32 0.0, %v5010
  %v5012 = vpop.f32.mrb[0].mxu0
  %5013 = vdwg.mxu0
  %5014 = vrot.lane.b32.xlu0 %v1340, 104
  %v5015 = vpop.permute.xlu0 %5014
  %v5018 = vsel %vm1737, %v4822, 0
  %5020 = vmatprep.subr.bf16.mxu0 0
  %5021 = vmatpush1.bf16.msra.mxu0 %v5015
  %5022 = vmatprep.subr.bf16.mxu0 0
  %5023 = vmatpush1.bf16.msra.mxu0 0
  %5024 = vmatprep.subr.bf16.mxu0 0
  %5025 = vmatpush1.bf16.msra.mxu0 0
  %5026 = vmatprep.subr.bf16.mxu0 0
  %5027 = vmatpush1.bf16.msra.mxu0 0
  %5028 = vmatprep.subr.bf16.mxu0 0
  %5029 = vmatpush1.bf16.msra.mxu0 0
  %5030 = vmatprep.subr.bf16.mxu0 0
  %5031 = vmatpush1.bf16.msra.mxu0 0
  %5032 = vmatprep.subr.bf16.mxu0 0
  %5033 = vmatpush1.bf16.msra.mxu0 0
  %5034 = vmatprep.subr.bf16.mxu0 0
  %5035 = vmatpush1.bf16.msra.mxu0 0
  %5036 = vmatprep.subr.bf16.mxu0 0
  %5037 = vmatpush1.bf16.msra.mxu0 0
  %5038 = vmatprep.subr.bf16.mxu0 0
  %5039 = vmatpush1.bf16.msra.mxu0 0
  %5040 = vmatprep.subr.bf16.mxu0 0
  %5041 = vmatpush1.bf16.msra.mxu0 0
  %5042 = vmatprep.subr.bf16.mxu0 0
  %5043 = vmatpush1.bf16.msra.mxu0 0
  %5044 = vmatprep.subr.bf16.mxu0 0
  %5045 = vmatpush1.bf16.msra.mxu0 0
  %5046 = vmatprep.subr.bf16.mxu0 0
  %5047 = vmatpush1.bf16.msra.mxu0 0
  %5048 = vmatprep.subr.bf16.mxu0 0
  %5049 = vmatpush1.bf16.msra.mxu0 0
  %5050 = vmatprep.subr.bf16.mxu0 0
  %5051 = vmatpush1.bf16.msra.mxu0 0
  %5052 = vmatprep.mubr.bf16.mxu0 0
  %5053 = vmatmul.mubr.bf16.gmra.mrb[0].mxu0 %v5018
  %v5054 = vpop.f32.mrb[0].mxu0
  %v5055 = vadd.f32 0.0, %v5054
  %v5056 = vpop.f32.mrb[0].mxu0
  %v5057 = vpop.f32.mrb[0].mxu0
  %v5058 = vadd.f32 0.0, %v5057
  %v5059 = vpop.f32.mrb[0].mxu0
  %5060 = vdwg.mxu0
  %5061 = vrot.lane.b32.xlu0 %v1341, 104
  %v5062 = vpop.permute.xlu0 %5061
  %v5065 = vsel %vm1737, %v4823, 0
  %5067 = vmatprep.subr.bf16.mxu0 0
  %5068 = vmatpush1.bf16.msra.mxu0 %v5062
  %5069 = vmatprep.subr.bf16.mxu0 0
  %5070 = vmatpush1.bf16.msra.mxu0 0
  %5071 = vmatprep.subr.bf16.mxu0 0
  %5072 = vmatpush1.bf16.msra.mxu0 0
  %5073 = vmatprep.subr.bf16.mxu0 0
  %5074 = vmatpush1.bf16.msra.mxu0 0
  %5075 = vmatprep.subr.bf16.mxu0 0
  %5076 = vmatpush1.bf16.msra.mxu0 0
  %5077 = vmatprep.subr.bf16.mxu0 0
  %5078 = vmatpush1.bf16.msra.mxu0 0
  %5079 = vmatprep.subr.bf16.mxu0 0
  %5080 = vmatpush1.bf16.msra.mxu0 0
  %5081 = vmatprep.subr.bf16.mxu0 0
  %5082 = vmatpush1.bf16.msra.mxu0 0
  %5083 = vmatprep.subr.bf16.mxu0 0
  %5084 = vmatpush1.bf16.msra.mxu0 0
  %5085 = vmatprep.subr.bf16.mxu0 0
  %5086 = vmatpush1.bf16.msra.mxu0 0
  %5087 = vmatprep.subr.bf16.mxu0 0
  %5088 = vmatpush1.bf16.msra.mxu0 0
  %5089 = vmatprep.subr.bf16.mxu0 0
  %5090 = vmatpush1.bf16.msra.mxu0 0
  %5091 = vmatprep.subr.bf16.mxu0 0
  %5092 = vmatpush1.bf16.msra.mxu0 0
  %5093 = vmatprep.subr.bf16.mxu0 0
  %5094 = vmatpush1.bf16.msra.mxu0 0
  %5095 = vmatprep.subr.bf16.mxu0 0
  %5096 = vmatpush1.bf16.msra.mxu0 0
  %5097 = vmatprep.subr.bf16.mxu0 0
  %5098 = vmatpush1.bf16.msra.mxu0 0
  %5099 = vmatprep.mubr.bf16.mxu0 0
  %5100 = vmatmul.mubr.bf16.gmra.mrb[0].mxu0 %v5065
  %v5101 = vpop.f32.mrb[0].mxu0
  %v5102 = vadd.f32 0.0, %v5101
  %v5103 = vpop.f32.mrb[0].mxu0
  %v5104 = vpop.f32.mrb[0].mxu0
  %v5105 = vadd.f32 0.0, %v5104
  %v5106 = vpop.f32.mrb[0].mxu0
  %5107 = vdwg.mxu0
  %5108 = vrot.lane.b32.xlu0 %v1342, 104
  %v5109 = vpop.permute.xlu0 %5108
  %v5112 = vsel %vm1737, %v4824, 0
  %5114 = vmatprep.subr.bf16.mxu0 0
  %5115 = vmatpush1.bf16.msra.mxu0 %v5109
  %5116 = vmatprep.subr.bf16.mxu0 0
  %5117 = vmatpush1.bf16.msra.mxu0 0
  %5118 = vmatprep.subr.bf16.mxu0 0
  %5119 = vmatpush1.bf16.msra.mxu0 0
  %5120 = vmatprep.subr.bf16.mxu0 0
  %5121 = vmatpush1.bf16.msra.mxu0 0
  %5122 = vmatprep.subr.bf16.mxu0 0
  %5123 = vmatpush1.bf16.msra.mxu0 0
  %5124 = vmatprep.subr.bf16.mxu0 0
  %5125 = vmatpush1.bf16.msra.mxu0 0
  %5126 = vmatprep.subr.bf16.mxu0 0
  %5127 = vmatpush1.bf16.msra.mxu0 0
  %5128 = vmatprep.subr.bf16.mxu0 0
  %5129 = vmatpush1.bf16.msra.mxu0 0
  %5130 = vmatprep.subr.bf16.mxu0 0
  %5131 = vmatpush1.bf16.msra.mxu0 0
  %5132 = vmatprep.subr.bf16.mxu0 0
  %5133 = vmatpush1.bf16.msra.mxu0 0
  %5134 = vmatprep.subr.bf16.mxu0 0
  %5135 = vmatpush1.bf16.msra.mxu0 0
  %5136 = vmatprep.subr.bf16.mxu0 0
  %5137 = vmatpush1.bf16.msra.mxu0 0
  %5138 = vmatprep.subr.bf16.mxu0 0
  %5139 = vmatpush1.bf16.msra.mxu0 0
  %5140 = vmatprep.subr.bf16.mxu0 0
  %5141 = vmatpush1.bf16.msra.mxu0 0
  %5142 = vmatprep.subr.bf16.mxu0 0
  %5143 = vmatpush1.bf16.msra.mxu0 0
  %5144 = vmatprep.subr.bf16.mxu0 0
  %5145 = vmatpush1.bf16.msra.mxu0 0
  %5146 = vmatprep.mubr.bf16.mxu0 0
  %5147 = vmatmul.mubr.bf16.gmra.mrb[0].mxu0 %v5112
  %v5148 = vpop.f32.mrb[0].mxu0
  %v5149 = vadd.f32 0.0, %v5148
  %v5150 = vpop.f32.mrb[0].mxu0
  %v5151 = vpop.f32.mrb[0].mxu0
  %v5152 = vadd.f32 0.0, %v5151
  %v5153 = vpop.f32.mrb[0].mxu0
  %5154 = vdwg.mxu0
  %5155 = vrot.lane.b32.xlu0 %v1343, 104
  %v5156 = vpop.permute.xlu0 %5155
  %v5159 = vsel %vm1737, %v4825, 0
  %5161 = vmatprep.subr.bf16.mxu0 0
  %5162 = vmatpush1.bf16.msra.mxu0 %v5156
  %5163 = vmatprep.subr.bf16.mxu0 0
  %5164 = vmatpush1.bf16.msra.mxu0 0
  %5165 = vmatprep.subr.bf16.mxu0 0
  %5166 = vmatpush1.bf16.msra.mxu0 0
  %5167 = vmatprep.subr.bf16.mxu0 0
  %5168 = vmatpush1.bf16.msra.mxu0 0
  %5169 = vmatprep.subr.bf16.mxu0 0
  %5170 = vmatpush1.bf16.msra.mxu0 0
  %5171 = vmatprep.subr.bf16.mxu0 0
  %5172 = vmatpush1.bf16.msra.mxu0 0
  %5173 = vmatprep.subr.bf16.mxu0 0
  %5174 = vmatpush1.bf16.msra.mxu0 0
  %5175 = vmatprep.subr.bf16.mxu0 0
  %5176 = vmatpush1.bf16.msra.mxu0 0
  %5177 = vmatprep.subr.bf16.mxu0 0
  %5178 = vmatpush1.bf16.msra.mxu0 0
  %5179 = vmatprep.subr.bf16.mxu0 0
  %5180 = vmatpush1.bf16.msra.mxu0 0
  %5181 = vmatprep.subr.bf16.mxu0 0
  %5182 = vmatpush1.bf16.msra.mxu0 0
  %5183 = vmatprep.subr.bf16.mxu0 0
  %5184 = vmatpush1.bf16.msra.mxu0 0
  %5185 = vmatprep.subr.bf16.mxu0 0
  %5186 = vmatpush1.bf16.msra.mxu0 0
  %5187 = vmatprep.subr.bf16.mxu0 0
  %5188 = vmatpush1.bf16.msra.mxu0 0
  %5189 = vmatprep.subr.bf16.mxu0 0
  %5190 = vmatpush1.bf16.msra.mxu0 0
  %5191 = vmatprep.subr.bf16.mxu0 0
  %5192 = vmatpush1.bf16.msra.mxu0 0
  %5193 = vmatprep.mubr.bf16.mxu0 0
  %5194 = vmatmul.mubr.bf16.gmra.mrb[0].mxu0 %v5159
  %v5195 = vpop.f32.mrb[0].mxu0
  %v5196 = vadd.f32 0.0, %v5195
  %v5197 = vpop.f32.mrb[0].mxu0
  %v5198 = vpop.f32.mrb[0].mxu0
  %v5199 = vadd.f32 0.0, %v5198
  %v5200 = vpop.f32.mrb[0].mxu0
  %5201 = vdwg.mxu0
  %5218 = vrot.lane.b32.xlu0 %v2924, 8
  %v5219 = vpop.permute.xlu0 %5218
  %5220 = vrot.lane.b32.xlu0 %v2927, 8
  %v5221 = vpop.permute.xlu0 %5220
  %5222 = vrot.lane.b32.xlu0 %v2972, 8
  %v5223 = vpop.permute.xlu0 %5222
  %5224 = vrot.lane.b32.xlu0 %v2975, 8
  %v5225 = vpop.permute.xlu0 %5224
  %5226 = vrot.lane.b32.xlu0 %v3020, 8
  %v5227 = vpop.permute.xlu0 %5226
  %5228 = vrot.lane.b32.xlu0 %v3023, 8
  %v5229 = vpop.permute.xlu0 %5228
  %5230 = vrot.lane.b32.xlu0 %v3068, 8
  %v5231 = vpop.permute.xlu0 %5230
  %5232 = vrot.lane.b32.xlu0 %v3071, 8
  %v5233 = vpop.permute.xlu0 %5232
  %5234 = vrot.lane.b32.xlu0 %v3116, 8
  %v5235 = vpop.permute.xlu0 %5234
  %5236 = vrot.lane.b32.xlu0 %v3119, 8
  %v5237 = vpop.permute.xlu0 %5236
  %5238 = vrot.lane.b32.xlu0 %v3164, 8
  %v5239 = vpop.permute.xlu0 %5238
  %5240 = vrot.lane.b32.xlu0 %v3167, 8
  %v5241 = vpop.permute.xlu0 %5240
  %5242 = vrot.lane.b32.xlu0 %v3212, 8
  %v5243 = vpop.permute.xlu0 %5242
  %5244 = vrot.lane.b32.xlu0 %v3215, 8
  %v5245 = vpop.permute.xlu0 %5244
  %5246 = vrot.lane.b32.xlu0 %v3260, 8
  %v5247 = vpop.permute.xlu0 %5246
  %5248 = vrot.lane.b32.xlu0 %v3263, 8
  %v5249 = vpop.permute.xlu0 %5248
  %5282 = vrot.lane.b32.xlu0 %v3899, 16
  %v5283 = vpop.permute.xlu0 %5282
  %5284 = vrot.lane.b32.xlu0 %v3902, 16
  %v5285 = vpop.permute.xlu0 %5284
  %5286 = vrot.lane.b32.xlu0 %v3946, 16
  %v5287 = vpop.permute.xlu0 %5286
  %5288 = vrot.lane.b32.xlu0 %v3949, 16
  %v5289 = vpop.permute.xlu0 %5288
  %5290 = vrot.lane.b32.xlu0 %v3993, 16
  %v5291 = vpop.permute.xlu0 %5290
  %5292 = vrot.lane.b32.xlu0 %v3996, 16
  %v5293 = vpop.permute.xlu0 %5292
  %5294 = vrot.lane.b32.xlu0 %v4040, 16
  %v5295 = vpop.permute.xlu0 %5294
  %5296 = vrot.lane.b32.xlu0 %v4043, 16
  %v5297 = vpop.permute.xlu0 %5296
  %5298 = vrot.lane.b32.xlu0 %v4087, 16
  %v5299 = vpop.permute.xlu0 %5298
  %5300 = vrot.lane.b32.xlu0 %v4090, 16
  %v5301 = vpop.permute.xlu0 %5300
  %5302 = vrot.lane.b32.xlu0 %v4134, 16
  %v5303 = vpop.permute.xlu0 %5302
  %5304 = vrot.lane.b32.xlu0 %v4137, 16
  %v5305 = vpop.permute.xlu0 %5304
  %5306 = vrot.lane.b32.xlu0 %v4181, 16
  %v5307 = vpop.permute.xlu0 %5306
  %5308 = vrot.lane.b32.xlu0 %v4184, 16
  %v5309 = vpop.permute.xlu0 %5308
  %5310 = vrot.lane.b32.xlu0 %v4228, 16
  %v5311 = vpop.permute.xlu0 %5310
  %5312 = vrot.lane.b32.xlu0 %v4231, 16
  %v5313 = vpop.permute.xlu0 %5312
  %5346 = vrot.lane.b32.xlu0 %v4867, 24
  %v5347 = vpop.permute.xlu0 %5346
  %5348 = vrot.lane.b32.xlu0 %v4870, 24
  %v5349 = vpop.permute.xlu0 %5348
  %5350 = vrot.lane.b32.xlu0 %v4914, 24
  %v5351 = vpop.permute.xlu0 %5350
  %5352 = vrot.lane.b32.xlu0 %v4917, 24
  %v5353 = vpop.permute.xlu0 %5352
  %5354 = vrot.lane.b32.xlu0 %v4961, 24
  %v5355 = vpop.permute.xlu0 %5354
  %5356 = vrot.lane.b32.xlu0 %v4964, 24
  %v5357 = vpop.permute.xlu0 %5356
  %5358 = vrot.lane.b32.xlu0 %v5008, 24
  %v5359 = vpop.permute.xlu0 %5358
  %5360 = vrot.lane.b32.xlu0 %v5011, 24
  %v5361 = vpop.permute.xlu0 %5360
  %5362 = vrot.lane.b32.xlu0 %v5055, 24
  %v5363 = vpop.permute.xlu0 %5362
  %5364 = vrot.lane.b32.xlu0 %v5058, 24
  %v5365 = vpop.permute.xlu0 %5364
  %5366 = vrot.lane.b32.xlu0 %v5102, 24
  %v5367 = vpop.permute.xlu0 %5366
  %5368 = vrot.lane.b32.xlu0 %v5105, 24
  %v5369 = vpop.permute.xlu0 %5368
  %5370 = vrot.lane.b32.xlu0 %v5149, 24
  %v5371 = vpop.permute.xlu0 %5370
  %5372 = vrot.lane.b32.xlu0 %v5152, 24
  %v5373 = vpop.permute.xlu0 %5372
  %5374 = vrot.lane.b32.xlu0 %v5196, 24
  %v5375 = vpop.permute.xlu0 %5374
  %5376 = vrot.lane.b32.xlu0 %v5199, 24
  %v5377 = vpop.permute.xlu0 %5376
  %v5394 = vsel %vm1360, %v1960, %v5219
  %v5395 = vsel %vm1360, %v1963, %v5221
  %v5396 = vsel %vm1360, %v2004, %v5223
  %v5397 = vsel %vm1360, %v2007, %v5225
  %v5398 = vsel %vm1360, %v2048, %v5227
  %v5399 = vsel %vm1360, %v2051, %v5229
  %v5400 = vsel %vm1360, %v2092, %v5231
  %v5401 = vsel %vm1360, %v2095, %v5233
  %v5402 = vsel %vm1360, %v2136, %v5235
  %v5403 = vsel %vm1360, %v2139, %v5237
  %v5404 = vsel %vm1360, %v2180, %v5239
  %v5405 = vsel %vm1360, %v2183, %v5241
  %v5406 = vsel %vm1360, %v2224, %v5243
  %v5407 = vsel %vm1360, %v2227, %v5245
  %v5408 = vsel %vm1360, %v2268, %v5247
  %v5409 = vsel %vm1360, %v2271, %v5249
  %v5410 = vsel %vm1737, %v5394, %v5283
  %v5411 = vsel %vm1737, %v5395, %v5285
  %v5412 = vsel %vm1737, %v5396, %v5287
  %v5413 = vsel %vm1737, %v5397, %v5289
  %v5414 = vsel %vm1737, %v5398, %v5291
  %v5415 = vsel %vm1737, %v5399, %v5293
  %v5416 = vsel %vm1737, %v5400, %v5295
  %v5417 = vsel %vm1737, %v5401, %v5297
  %v5418 = vsel %vm1737, %v5402, %v5299
  %v5419 = vsel %vm1737, %v5403, %v5301
  %v5420 = vsel %vm1737, %v5404, %v5303
  %v5421 = vsel %vm1737, %v5405, %v5305
  %v5422 = vsel %vm1737, %v5406, %v5307
  %v5423 = vsel %vm1737, %v5407, %v5309
  %v5424 = vsel %vm1737, %v5408, %v5311
  %v5425 = vsel %vm1737, %v5409, %v5313
  %vm5426 = vcmask 195584
  %v5427 = vsel %vm5426, %v5410, %v5347
  %v5428 = vsel %vm5426, %v5411, %v5349
  %v5429 = vsel %vm5426, %v5412, %v5351
  %v5430 = vsel %vm5426, %v5413, %v5353
  %v5431 = vsel %vm5426, %v5414, %v5355
  %v5432 = vsel %vm5426, %v5415, %v5357
  %v5433 = vsel %vm5426, %v5416, %v5359
  %v5434 = vsel %vm5426, %v5417, %v5361
  %v5435 = vsel %vm5426, %v5418, %v5363
  %v5436 = vsel %vm5426, %v5419, %v5365
  %v5437 = vsel %vm5426, %v5420, %v5367
  %v5438 = vsel %vm5426, %v5421, %v5369
  %v5439 = vsel %vm5426, %v5422, %v5371
  %v5440 = vsel %vm5426, %v5423, %v5373
  %v5441 = vsel %vm5426, %v5424, %v5375
  %v5442 = vsel %vm5426, %v5425, %v5377
  %v5443 = vpack.c.bf16 %v5428, %v5427
  %v5444 = vpack.c.bf16 %v5430, %v5429
  %v5445 = vpack.c.bf16 %v5432, %v5431
  %v5446 = vpack.c.bf16 %v5434, %v5433
  %v5447 = vpack.c.bf16 %v5436, %v5435
  %v5448 = vpack.c.bf16 %v5438, %v5437
  %v5449 = vpack.c.bf16 %v5440, %v5439
  %v5450 = vpack.c.bf16 %v5442, %v5441
  %v5451 = vld [vmem:[%s6] sm:$0xf]
  %v5452 = vld [vmem:[%s6 + $0x4] sm:$0xf]
  %v5453 = vld [vmem:[%s6 + $0x8] sm:$0xf]
  %v5454 = vld [vmem:[%s6 + $0xc] sm:$0xf]
  %v5455 = vld [vmem:[%s7] sm:$0x1]
  %v5457 = vlaneseq
  %v5458 = vshrl.u32 %v5457, 7
  %v5459 = vsub.s32 0, %v5458
  %v5460 = vrot.slane %v5455, %v5459
  %v5466 = vunpack.c.l.b16 %v5451
  %v5467 = vunpack.c.l.b16 %v5452
  %v5468 = vunpack.c.l.b16 %v5453
  %v5469 = vunpack.c.l.b16 %v5454
  %v5470 = vpack.c.b16 %v5467, %v5466
  %v5471 = vpack.c.b16 %v5469, %v5468
  %v5475 = vsel %vm80, %v5443, 0
  %v5478 = vsel %vm80, %v5444, 0
  %v5481 = vsel %vm80, %v5445, 0
  %v5484 = vsel %vm80, %v5446, 0
  %v5487 = vsel %vm80, %v5447, 0
  %v5490 = vsel %vm80, %v5448, 0
  %v5493 = vsel %vm80, %v5449, 0
  %v5496 = vsel %vm80, %v5450, 0
  %5498 = vmatprep.subr.bf16.mxu0 0
  %5499 = vmatpush1.bf16.msra.mxu0 %v5470
  %5500 = vmatprep.subr.bf16.mxu0 0
  %5501 = vmatpush1.bf16.msra.mxu0 %v5471
  %5502 = vmatprep.subr.bf16.mxu0 0
  %5503 = vmatpush1.bf16.msra.mxu0 0
  %5504 = vmatprep.subr.bf16.mxu0 0
  %5505 = vmatpush1.bf16.msra.mxu0 0
  %5506 = vmatprep.subr.bf16.mxu0 0
  %5507 = vmatpush1.bf16.msra.mxu0 0
  %5508 = vmatprep.subr.bf16.mxu0 0
  %5509 = vmatpush1.bf16.msra.mxu0 0
  %5510 = vmatprep.subr.bf16.mxu0 0
  %5511 = vmatpush1.bf16.msra.mxu0 0
  %5512 = vmatprep.subr.bf16.mxu0 0
  %5513 = vmatpush1.bf16.msra.mxu0 0
  %5514 = vmatprep.subr.bf16.mxu0 0
  %5515 = vmatpush1.bf16.msra.mxu0 0
  %5516 = vmatprep.subr.bf16.mxu0 0
  %5517 = vmatpush1.bf16.msra.mxu0 0
  %5518 = vmatprep.subr.bf16.mxu0 0
  %5519 = vmatpush1.bf16.msra.mxu0 0
  %5520 = vmatprep.subr.bf16.mxu0 0
  %5521 = vmatpush1.bf16.msra.mxu0 0
  %5522 = vmatprep.subr.bf16.mxu0 0
  %5523 = vmatpush1.bf16.msra.mxu0 0
  %5524 = vmatprep.subr.bf16.mxu0 0
  %5525 = vmatpush1.bf16.msra.mxu0 0
  %5526 = vmatprep.subr.bf16.mxu0 0
  %5527 = vmatpush1.bf16.msra.mxu0 0
  %5528 = vmatprep.subr.bf16.mxu0 0
  %5529 = vmatpush1.bf16.msra.mxu0 0
  %5530 = vmatprep.mubr.bf16.mxu0 0
  %5531 = vmatmul.mubr.bf16.gmra.mrb[0].mxu0 %v5475
  %v5532 = vpop.f32.mrb[0].mxu0
  %v5533 = vadd.f32 %v5460, %v5532
  %v5534 = vpop.f32.mrb[0].mxu0
  %v5535 = vpop.f32.mrb[0].mxu0
  %v5536 = vadd.f32 %v5460, %v5535
  %v5537 = vpop.f32.mrb[0].mxu0
  %5538 = vmatprep.mubr.bf16.mxu0 0
  %5539 = vmatmul.mubr.bf16.gmra.mrb[0].mxu0 %v5478
  %v5540 = vpop.f32.mrb[0].mxu0
  %v5541 = vadd.f32 %v5460, %v5540
  %v5542 = vpop.f32.mrb[0].mxu0
  %v5543 = vpop.f32.mrb[0].mxu0
  %v5544 = vadd.f32 %v5460, %v5543
  %v5545 = vpop.f32.mrb[0].mxu0
  %5546 = vmatprep.mubr.bf16.mxu0 0
  %5547 = vmatmul.mubr.bf16.gmra.mrb[0].mxu0 %v5481
  %v5548 = vpop.f32.mrb[0].mxu0
  %v5549 = vadd.f32 %v5460, %v5548
  %v5550 = vpop.f32.mrb[0].mxu0
  %v5551 = vpop.f32.mrb[0].mxu0
  %v5552 = vadd.f32 %v5460, %v5551
  %v5553 = vpop.f32.mrb[0].mxu0
  %5554 = vmatprep.mubr.bf16.mxu0 0
  %5555 = vmatmul.mubr.bf16.gmra.mrb[0].mxu0 %v5484
  %v5556 = vpop.f32.mrb[0].mxu0
  %v5557 = vadd.f32 %v5460, %v5556
  %v5558 = vpop.f32.mrb[0].mxu0
  %v5559 = vpop.f32.mrb[0].mxu0
  %v5560 = vadd.f32 %v5460, %v5559
  %v5561 = vpop.f32.mrb[0].mxu0
  %5562 = vmatprep.mubr.bf16.mxu0 0
  %5563 = vmatmul.mubr.bf16.gmra.mrb[0].mxu0 %v5487
  %v5564 = vpop.f32.mrb[0].mxu0
  %v5565 = vadd.f32 %v5460, %v5564
  %v5566 = vpop.f32.mrb[0].mxu0
  %v5567 = vpop.f32.mrb[0].mxu0
  %v5568 = vadd.f32 %v5460, %v5567
  %v5569 = vpop.f32.mrb[0].mxu0
  %5570 = vmatprep.mubr.bf16.mxu0 0
  %5571 = vmatmul.mubr.bf16.gmra.mrb[0].mxu0 %v5490
  %v5572 = vpop.f32.mrb[0].mxu0
  %v5573 = vadd.f32 %v5460, %v5572
  %v5574 = vpop.f32.mrb[0].mxu0
  %v5575 = vpop.f32.mrb[0].mxu0
  %v5576 = vadd.f32 %v5460, %v5575
  %v5577 = vpop.f32.mrb[0].mxu0
  %5578 = vmatprep.mubr.bf16.mxu0 0
  %5579 = vmatmul.mubr.bf16.gmra.mrb[0].mxu0 %v5493
  %v5580 = vpop.f32.mrb[0].mxu0
  %v5581 = vadd.f32 %v5460, %v5580
  %v5582 = vpop.f32.mrb[0].mxu0
  %v5583 = vpop.f32.mrb[0].mxu0
  %v5584 = vadd.f32 %v5460, %v5583
  %v5585 = vpop.f32.mrb[0].mxu0
  %5586 = vmatprep.mubr.bf16.mxu0 0
  %5587 = vmatmul.mubr.bf16.gmra.mrb[0].mxu0 %v5496
  %v5588 = vpop.f32.mrb[0].mxu0
  %v5589 = vadd.f32 %v5460, %v5588
  %v5590 = vpop.f32.mrb[0].mxu0
  %v5591 = vpop.f32.mrb[0].mxu0
  %v5592 = vadd.f32 %v5460, %v5591
  %v5593 = vpop.f32.mrb[0].mxu0
  %5594 = vdwg.mxu0
  %v5595 = vadd.f32 %v30, %v5533
  %v5596 = vadd.f32 %v31, %v5536
  %v5597 = vadd.f32 %v32, %v5541
  %v5598 = vadd.f32 %v33, %v5544
  %v5599 = vadd.f32 %v34, %v5549
  %v5600 = vadd.f32 %v35, %v5552
  %v5601 = vadd.f32 %v36, %v5557
  %v5602 = vadd.f32 %v37, %v5560
  %v5603 = vadd.f32 %v38, %v5565
  %v5604 = vadd.f32 %v39, %v5568
  %v5605 = vadd.f32 %v40, %v5573
  %v5606 = vadd.f32 %v41, %v5576
  %v5607 = vadd.f32 %v42, %v5581
  %v5608 = vadd.f32 %v43, %v5584
  %v5609 = vadd.f32 %v44, %v5589
  %v5610 = vadd.f32 %v45, %v5592
  %5611 = vst.msk [vmem:[%s8] sm:$0xff] %vm80, %v5595
  %5612 = vst.msk [vmem:[%s8 + $0x8] sm:$0xff] %vm80, %v5596
  %5613 = vst.msk [vmem:[%s8 + $0x10] sm:$0xff] %vm80, %v5597
  %5614 = vst.msk [vmem:[%s8 + $0x18] sm:$0xff] %vm80, %v5598
  %5615 = vst.msk [vmem:[%s8 + $0x20] sm:$0xff] %vm80, %v5599
  %5616 = vst.msk [vmem:[%s8 + $0x28] sm:$0xff] %vm80, %v5600
  %5617 = vst.msk [vmem:[%s8 + $0x30] sm:$0xff] %vm80, %v5601
  %5618 = vst.msk [vmem:[%s8 + $0x38] sm:$0xff] %vm80, %v5602
  %5619 = vst.msk [vmem:[%s8 + $0x40] sm:$0xff] %vm80, %v5603
  %5620 = vst.msk [vmem:[%s8 + $0x48] sm:$0xff] %vm80, %v5604
  %5621 = vst.msk [vmem:[%s8 + $0x50] sm:$0xff] %vm80, %v5605
  %5622 = vst.msk [vmem:[%s8 + $0x58] sm:$0xff] %vm80, %v5606
  %5623 = vst.msk [vmem:[%s8 + $0x60] sm:$0xff] %vm80, %v5607
  %5624 = vst.msk [vmem:[%s8 + $0x68] sm:$0xff] %vm80, %v5608
  %5625 = vst.msk [vmem:[%s8 + $0x70] sm:$0xff] %vm80, %v5609
  %5626 = vst.msk [vmem:[%s8 + $0x78] sm:$0xff] %vm80, %v5610
  // Predicated region
  $region34: #{multihead_forward.1} parent=0 // pred_check
    _
  $region35: #{multihead_forward.1} parent=0 // pred_check_branch
    %5628 = sbr.rel (0) target = $region37
  $region36: #{multihead_forward.1} parent=0 // pred_region
    _
  $region37: #{multihead_forward.1} parent=0 // pred_fallthru
    _
  // Predicated region
  $region38: #{multihead_forward.1} parent=0 // pred_check
    _
  $region39: #{multihead_forward.1} parent=0 // pred_check_branch
    %5630 = sbr.rel (0) target = $region41
  $region40: #{multihead_forward.1} parent=0 // pred_region
    _
  $region41: #{multihead_forward.1} parent=0 // pred_fallthru
    _

</llo_original>
